<compile_context>
chip_gen: v7x
topology: tpu7x:2x2x1
jax: 0.10.0
libtpu: 0.0.40
codegen_flags: <defaults>
</compile_context>

<pallas_src>
import functools

import jax
import jax.numpy as jnp
from jax.experimental import pallas as pl
from jax.experimental.pallas import tpu as pltpu

_ALPHA = 0.2        # LeakyReLU negative slope
_OUT_PAD = 128      # final 128->1 weight padded to 128 MXU columns (lane-dense matmul)


def _cdiv(a, b):
    return -(-a // b)


def _round_up(x, m):
    return _cdiv(x, m) * m


def _critic_fused_kernel(x_ref, *refs, n_layers, alpha, compute_dtype):
    """All 7 Linear(+LeakyReLU) layers fused; weights resident in VMEM."""
    o_ref = refs[-1]
    wb_refs = refs[:-1]                 # (w0, b0, w1, b1, ..., w6, b6)

    h = x_ref[...]                      # already in compute dtype (cast in wrapper)
    y = None
    for i in range(n_layers):
        w_ref = wb_refs[2 * i]
        b_ref = wb_refs[2 * i + 1]
        # MXU matmul: compute-dtype operands, f32 accumulation.
        y = jnp.dot(h, w_ref[...], preferred_element_type=jnp.float32)
        y = y + b_ref[...]              # f32 bias add, (1, Dout) broadcasts over batch
        if i < n_layers - 1:
            y = jnp.maximum(y, alpha * y)        # LeakyReLU(0.2): mul + max (2 VALU ops)
            h = y.astype(compute_dtype)          # keep inter-layer activation in bf16
    # Last layer result is (bt, 128) f32 (zero-padded columns 1..127); store the
    # real column only -> (bt, 1) output block, 128x less HBM writeback.
    o_ref[...] = y[:, :1].astype(o_ref.dtype)


def _choose_batch_tile(B, batch_tile):
    """Tile size: multiple of 8, >= 2 grid steps when possible, minimal padding."""
    if B <= 8:
        return 8
    max_bt = min(batch_tile, _round_up(B, 8))
    target_tiles = max(2, _cdiv(B, max_bt))        # >=2 so both v7x TCs get work
    return max(8, _round_up(_cdiv(B, target_tiles), 8))


def _estimate_vmem_limit(flat_wb, bt, din):
    """Right-size the scoped-VMEM request from the actual footprint."""
    wb_bytes = sum(int(a.size) * a.dtype.itemsize for a in flat_wb)
    io_bytes = bt * din * 4 * 2 + bt * 4 * 2            # double-buffered in/out tiles
    dout_sum = sum(int(a.shape[1]) for a in flat_wb[0::2])
    inter_bytes = bt * dout_sum * 6                      # generous: f32 + bf16 copies live
    limit = 2 * wb_bytes + io_bytes + inter_bytes + (16 << 20)
    return int(min(limit, 64 << 20))                     # never over-ask v7x's 64 MiB


def critic_forward(x, params, *, compute_dtype=jnp.bfloat16, batch_tile=512):
    """Fused Critic forward: one pallas_call.

    x: [B, input_dim] f32; params: list of (w [Din, Dout] f32, b [1, Dout] f32).
    Returns [B, 1] f32.
    """
    B, Din = x.shape
    n_layers = len(params)

    # Pad the final (128 -> 1) layer to 128 output columns (zeros in cols 1..127)
    # so the last matmul is lane-dense on the MXU; only column 0 is stored.
    flat_wb = []
    for i, (w, b) in enumerate(params):
        if i == n_layers - 1:
            w = jnp.pad(w, ((0, 0), (0, _OUT_PAD - w.shape[1])))
            b = jnp.pad(b, ((0, 0), (0, _OUT_PAD - b.shape[1])))
        flat_wb.append(w.astype(compute_dtype))   # bf16 weights: half HBM/VMEM, 2x+ MXU
        flat_wb.append(b.astype(jnp.float32))     # biases stay f32 (tiny, f32 epilogue)

    # Batch tiling: weights have constant index_maps (resident in VMEM across grid
    # steps); only activation tiles stream along the "parallel" batch axis.
    bt = _choose_batch_tile(B, batch_tile)
    num_tiles = pl.cdiv(B, bt)
    Bp = num_tiles * bt
    x_c = x.astype(compute_dtype)                  # single cast, done once in HBM
    x_p = x_c if Bp == B else jnp.pad(x_c, ((0, Bp - B), (0, 0)))

    in_specs = [pl.BlockSpec((bt, Din), lambda i: (i, 0))]
    for arr in flat_wb:
        in_specs.append(pl.BlockSpec(arr.shape, lambda i: (0, 0)))

    kernel = functools.partial(_critic_fused_kernel, n_layers=n_layers,
                               alpha=_ALPHA, compute_dtype=compute_dtype)
    out_p = pl.pallas_call(
        kernel,
        out_shape=jax.ShapeDtypeStruct((Bp, 1), jnp.float32),
        grid=(num_tiles,),
        in_specs=in_specs,
        out_specs=pl.BlockSpec((bt, 1), lambda i: (i, 0)),
        compiler_params=pltpu.CompilerParams(
            # Batch tiles are independent -> shard across v7x's 2 TensorCores.
            dimension_semantics=("parallel",),
            vmem_limit_bytes=_estimate_vmem_limit(flat_wb, bt, Din),
        ),
    )(x_p, *flat_wb)
    return out_p[:B]


# ---------------------------------------------------------------------------
# Parameter construction (deterministic, PyTorch-style uniform(-1/sqrt(fan_in)))
# ---------------------------------------------------------------------------
def init_critic_params(key, input_dim):
    dims = [input_dim, 256, 512, 1024, 512, 256, 128, 1]
    params = []
    for i in range(len(dims) - 1):
        fan_in, fan_out = dims[i], dims[i + 1]
        key, kw, kb = jax.random.split(key, 3)
        bound = 1.0 / jnp.sqrt(jnp.float32(fan_in))
        w = jax.random.uniform(kw, (fan_in, fan_out), jnp.float32, -bound, bound)
        b = jax.random.uniform(kb, (1, fan_out), jnp.float32, -bound, bound)
        params.append((w, b))
    return params


# ---------------------------------------------------------------------------
# Pure-JAX reference (mirrors the kernel's casting pipeline) for correctness.
# ---------------------------------------------------------------------------
def critic_forward_ref(x, params, compute_dtype=jnp.float32):
    h = x.astype(compute_dtype)
    n = len(params)
    y = None
    for i, (w, b) in enumerate(params):
        y = jnp.dot(h, w.astype(compute_dtype), preferred_element_type=jnp.float32)
        y = y + b
        if i < n - 1:
            y = jnp.maximum(y, 0.2 * y)
            h = y.astype(compute_dtype)
    return y


if __name__ == "__main__":
    key = jax.random.PRNGKey(0)
    batch, input_dim = 2, 32  # small synthetic shapes consistent with an MLP critic

    key, kx = jax.random.split(key)
    x = jax.random.normal(kx, (batch, input_dim), jnp.float32)
    params = init_critic_params(key, input_dim)

    # f32 kernel path (strict check against f32 reference).
    fwd_f32 = jax.jit(functools.partial(critic_forward, compute_dtype=jnp.float32))
    out = jax.block_until_ready(fwd_f32(x, params))
    ref = critic_forward_ref(x, params, jnp.float32)
    assert out.shape == (batch, 1), f"bad output shape {out.shape}"
    assert jnp.allclose(out, ref, atol=1e-4, rtol=1e-4), "f32 mismatch vs reference"

    # Default bf16 path (bf16 operands, f32 accumulation) vs matching bf16 reference.
    # TODO(synk): quantify bf16-vs-f32 output/gradient gap before using bf16 for
    # gradient-penalty-sensitive WGAN critic training.
    fwd_bf16 = jax.jit(critic_forward)
    out_bf16 = jax.block_until_ready(fwd_bf16(x, params))
    ref_bf16 = critic_forward_ref(x, params, jnp.bfloat16)
    assert out_bf16.shape == (batch, 1), f"bad output shape {out_bf16.shape}"
    assert jnp.allclose(out_bf16, ref_bf16, atol=2e-2, rtol=2e-2), "bf16 mismatch"

    # Ragged batch exercises the multi-tile grid path (>=2 tiles, minimal padding).
    key, kx2 = jax.random.split(key)
    x_big = jax.random.normal(kx2, (300, input_dim), jnp.float32)
    fwd_tiled = jax.jit(functools.partial(critic_forward,
                                          compute_dtype=jnp.float32, batch_tile=128))
    out_big = jax.block_until_ready(fwd_tiled(x_big, params))
    ref_big = critic_forward_ref(x_big, params, jnp.float32)
    assert out_big.shape == (300, 1), f"bad output shape {out_big.shape}"
    assert jnp.allclose(out_big, ref_big, atol=1e-3, rtol=1e-3), "tiled mismatch"

    print("KERNEL_OK")
</pallas_src>

<mosaic_0001>
module attributes {stable_mosaic.version = 11 : i64} {
  func.func @_critic_fused_kernel(%arg0: i32, %arg1: memref<8x32xf32, #tpu.memory_space<vmem>>, %arg2: memref<32x256xf32, #tpu.memory_space<vmem>>, %arg3: memref<1x256xf32, #tpu.memory_space<vmem>>, %arg4: memref<256x512xf32, #tpu.memory_space<vmem>>, %arg5: memref<1x512xf32, #tpu.memory_space<vmem>>, %arg6: memref<512x1024xf32, #tpu.memory_space<vmem>>, %arg7: memref<1x1024xf32, #tpu.memory_space<vmem>>, %arg8: memref<1024x512xf32, #tpu.memory_space<vmem>>, %arg9: memref<1x512xf32, #tpu.memory_space<vmem>>, %arg10: memref<512x256xf32, #tpu.memory_space<vmem>>, %arg11: memref<1x256xf32, #tpu.memory_space<vmem>>, %arg12: memref<256x128xf32, #tpu.memory_space<vmem>>, %arg13: memref<1x128xf32, #tpu.memory_space<vmem>>, %arg14: memref<128x128xf32, #tpu.memory_space<vmem>>, %arg15: memref<1x128xf32, #tpu.memory_space<vmem>>, %arg16: memref<8x1xf32, #tpu.memory_space<vmem>>) attributes {dimension_semantics = [#tpu.dimension_semantics<parallel>], iteration_bounds = array<i64: 1>, scalar_prefetch = 0 : i64, scratch_operands = 0 : i64, tpu.core_type = #tpu.core_type<tc>, window_params = [{transform_indices = @transform_0, window_bounds = array<i64: 8, 32>}, {pipeline_mode = #tpu.pipeline_mode<synchronous>, transform_indices = @transform_1, window_bounds = array<i64: 32, 256>}, {pipeline_mode = #tpu.pipeline_mode<synchronous>, transform_indices = @transform_2, window_bounds = array<i64: 1, 256>}, {pipeline_mode = #tpu.pipeline_mode<synchronous>, transform_indices = @transform_3, window_bounds = array<i64: 256, 512>}, {pipeline_mode = #tpu.pipeline_mode<synchronous>, transform_indices = @transform_4, window_bounds = array<i64: 1, 512>}, {pipeline_mode = #tpu.pipeline_mode<synchronous>, transform_indices = @transform_5, window_bounds = array<i64: 512, 1024>}, {pipeline_mode = #tpu.pipeline_mode<synchronous>, transform_indices = @transform_6, window_bounds = array<i64: 1, 1024>}, {pipeline_mode = #tpu.pipeline_mode<synchronous>, transform_indices = @transform_7, window_bounds = array<i64: 1024, 512>}, {pipeline_mode = #tpu.pipeline_mode<synchronous>, transform_indices = @transform_8, window_bounds = array<i64: 1, 512>}, {pipeline_mode = #tpu.pipeline_mode<synchronous>, transform_indices = @transform_9, window_bounds = array<i64: 512, 256>}, {pipeline_mode = #tpu.pipeline_mode<synchronous>, transform_indices = @transform_10, window_bounds = array<i64: 1, 256>}, {pipeline_mode = #tpu.pipeline_mode<synchronous>, transform_indices = @transform_11, window_bounds = array<i64: 256, 128>}, {pipeline_mode = #tpu.pipeline_mode<synchronous>, transform_indices = @transform_12, window_bounds = array<i64: 1, 128>}, {pipeline_mode = #tpu.pipeline_mode<synchronous>, transform_indices = @transform_13, window_bounds = array<i64: 128, 128>}, {pipeline_mode = #tpu.pipeline_mode<synchronous>, transform_indices = @transform_14, window_bounds = array<i64: 1, 128>}, {transform_indices = @transform_15, window_bounds = array<i64: 8, 1>}]} {
    %c0 = arith.constant 0 : index
    %c0_0 = arith.constant 0 : index
    %0 = vector.load %arg1[%c0, %c0_0] : memref<8x32xf32, #tpu.memory_space<vmem>>, vector<8x32xf32>
    %c0_1 = arith.constant 0 : index
    %c0_2 = arith.constant 0 : index
    %1 = vector.load %arg2[%c0_1, %c0_2] : memref<32x256xf32, #tpu.memory_space<vmem>>, vector<32x256xf32>
    %cst = arith.constant dense<0.000000e+00> : vector<8x256xf32>
    %2 = tpu.matmul %0, %1, %cst {dimension_numbers = #tpu.dot_dimension_numbers<[1], [0], [0], [1], [0, 0, 1, 1], [], []>} : vector<8x32xf32>, vector<32x256xf32>, vector<8x256xf32> -> vector<8x256xf32>
    %c0_3 = arith.constant 0 : index
    %c0_4 = arith.constant 0 : index
    %3 = vector.load %arg3[%c0_3, %c0_4] : memref<1x256xf32, #tpu.memory_space<vmem>>, vector<1x256xf32>
    %4 = vector.broadcast %3 : vector<1x256xf32> to vector<8x256xf32>
    %5 = arith.addf %2, %4 : vector<8x256xf32>
    %cst_5 = arith.constant 2.000000e-01 : f32
    %6 = vector.broadcast %cst_5 : f32 to vector<8x256xf32>
    %7 = arith.mulf %6, %5 : vector<8x256xf32>
    %8 = arith.maximumf %5, %7 : vector<8x256xf32>
    %c0_6 = arith.constant 0 : index
    %c0_7 = arith.constant 0 : index
    %9 = vector.load %arg4[%c0_6, %c0_7] : memref<256x512xf32, #tpu.memory_space<vmem>>, vector<256x512xf32>
    %cst_8 = arith.constant dense<0.000000e+00> : vector<8x512xf32>
    %10 = tpu.matmul %8, %9, %cst_8 {dimension_numbers = #tpu.dot_dimension_numbers<[1], [0], [0], [1], [0, 0, 1, 1], [], []>} : vector<8x256xf32>, vector<256x512xf32>, vector<8x512xf32> -> vector<8x512xf32>
    %c0_9 = arith.constant 0 : index
    %c0_10 = arith.constant 0 : index
    %11 = vector.load %arg5[%c0_9, %c0_10] : memref<1x512xf32, #tpu.memory_space<vmem>>, vector<1x512xf32>
    %12 = vector.broadcast %11 : vector<1x512xf32> to vector<8x512xf32>
    %13 = arith.addf %10, %12 : vector<8x512xf32>
    %cst_11 = arith.constant 2.000000e-01 : f32
    %14 = vector.broadcast %cst_11 : f32 to vector<8x512xf32>
    %15 = arith.mulf %14, %13 : vector<8x512xf32>
    %16 = arith.maximumf %13, %15 : vector<8x512xf32>
    %c0_12 = arith.constant 0 : index
    %c0_13 = arith.constant 0 : index
    %17 = vector.load %arg6[%c0_12, %c0_13] : memref<512x1024xf32, #tpu.memory_space<vmem>>, vector<512x1024xf32>
    %cst_14 = arith.constant dense<0.000000e+00> : vector<8x1024xf32>
    %18 = tpu.matmul %16, %17, %cst_14 {dimension_numbers = #tpu.dot_dimension_numbers<[1], [0], [0], [1], [0, 0, 1, 1], [], []>} : vector<8x512xf32>, vector<512x1024xf32>, vector<8x1024xf32> -> vector<8x1024xf32>
    %c0_15 = arith.constant 0 : index
    %c0_16 = arith.constant 0 : index
    %19 = vector.load %arg7[%c0_15, %c0_16] : memref<1x1024xf32, #tpu.memory_space<vmem>>, vector<1x1024xf32>
    %20 = vector.broadcast %19 : vector<1x1024xf32> to vector<8x1024xf32>
    %21 = arith.addf %18, %20 : vector<8x1024xf32>
    %cst_17 = arith.constant 2.000000e-01 : f32
    %22 = vector.broadcast %cst_17 : f32 to vector<8x1024xf32>
    %23 = arith.mulf %22, %21 : vector<8x1024xf32>
    %24 = arith.maximumf %21, %23 : vector<8x1024xf32>
    %c0_18 = arith.constant 0 : index
    %c0_19 = arith.constant 0 : index
    %25 = vector.load %arg8[%c0_18, %c0_19] : memref<1024x512xf32, #tpu.memory_space<vmem>>, vector<1024x512xf32>
    %cst_20 = arith.constant dense<0.000000e+00> : vector<8x512xf32>
    %26 = tpu.matmul %24, %25, %cst_20 {dimension_numbers = #tpu.dot_dimension_numbers<[1], [0], [0], [1], [0, 0, 1, 1], [], []>} : vector<8x1024xf32>, vector<1024x512xf32>, vector<8x512xf32> -> vector<8x512xf32>
    %c0_21 = arith.constant 0 : index
    %c0_22 = arith.constant 0 : index
    %27 = vector.load %arg9[%c0_21, %c0_22] : memref<1x512xf32, #tpu.memory_space<vmem>>, vector<1x512xf32>
    %28 = vector.broadcast %27 : vector<1x512xf32> to vector<8x512xf32>
    %29 = arith.addf %26, %28 : vector<8x512xf32>
    %cst_23 = arith.constant 2.000000e-01 : f32
    %30 = vector.broadcast %cst_23 : f32 to vector<8x512xf32>
    %31 = arith.mulf %30, %29 : vector<8x512xf32>
    %32 = arith.maximumf %29, %31 : vector<8x512xf32>
    %c0_24 = arith.constant 0 : index
    %c0_25 = arith.constant 0 : index
    %33 = vector.load %arg10[%c0_24, %c0_25] : memref<512x256xf32, #tpu.memory_space<vmem>>, vector<512x256xf32>
    %cst_26 = arith.constant dense<0.000000e+00> : vector<8x256xf32>
    %34 = tpu.matmul %32, %33, %cst_26 {dimension_numbers = #tpu.dot_dimension_numbers<[1], [0], [0], [1], [0, 0, 1, 1], [], []>} : vector<8x512xf32>, vector<512x256xf32>, vector<8x256xf32> -> vector<8x256xf32>
    %c0_27 = arith.constant 0 : index
    %c0_28 = arith.constant 0 : index
    %35 = vector.load %arg11[%c0_27, %c0_28] : memref<1x256xf32, #tpu.memory_space<vmem>>, vector<1x256xf32>
    %36 = vector.broadcast %35 : vector<1x256xf32> to vector<8x256xf32>
    %37 = arith.addf %34, %36 : vector<8x256xf32>
    %cst_29 = arith.constant 2.000000e-01 : f32
    %38 = vector.broadcast %cst_29 : f32 to vector<8x256xf32>
    %39 = arith.mulf %38, %37 : vector<8x256xf32>
    %40 = arith.maximumf %37, %39 : vector<8x256xf32>
    %c0_30 = arith.constant 0 : index
    %c0_31 = arith.constant 0 : index
    %41 = vector.load %arg12[%c0_30, %c0_31] : memref<256x128xf32, #tpu.memory_space<vmem>>, vector<256x128xf32>
    %cst_32 = arith.constant dense<0.000000e+00> : vector<8x128xf32>
    %42 = tpu.matmul %40, %41, %cst_32 {dimension_numbers = #tpu.dot_dimension_numbers<[1], [0], [0], [1], [0, 0, 1, 1], [], []>} : vector<8x256xf32>, vector<256x128xf32>, vector<8x128xf32> -> vector<8x128xf32>
    %c0_33 = arith.constant 0 : index
    %c0_34 = arith.constant 0 : index
    %43 = vector.load %arg13[%c0_33, %c0_34] : memref<1x128xf32, #tpu.memory_space<vmem>>, vector<1x128xf32>
    %44 = vector.broadcast %43 : vector<1x128xf32> to vector<8x128xf32>
    %45 = arith.addf %42, %44 : vector<8x128xf32>
    %cst_35 = arith.constant 2.000000e-01 : f32
    %46 = vector.broadcast %cst_35 : f32 to vector<8x128xf32>
    %47 = arith.mulf %46, %45 : vector<8x128xf32>
    %48 = arith.maximumf %45, %47 : vector<8x128xf32>
    %c0_36 = arith.constant 0 : index
    %c0_37 = arith.constant 0 : index
    %49 = vector.load %arg14[%c0_36, %c0_37] : memref<128x128xf32, #tpu.memory_space<vmem>>, vector<128x128xf32>
    %cst_38 = arith.constant dense<0.000000e+00> : vector<8x128xf32>
    %50 = tpu.matmul %48, %49, %cst_38 {dimension_numbers = #tpu.dot_dimension_numbers<[1], [0], [0], [1], [0, 0, 1, 1], [], []>} : vector<8x128xf32>, vector<128x128xf32>, vector<8x128xf32> -> vector<8x128xf32>
    %c0_39 = arith.constant 0 : index
    %c0_40 = arith.constant 0 : index
    %51 = vector.load %arg15[%c0_39, %c0_40] : memref<1x128xf32, #tpu.memory_space<vmem>>, vector<1x128xf32>
    %52 = vector.broadcast %51 : vector<1x128xf32> to vector<8x128xf32>
    %53 = arith.addf %50, %52 : vector<8x128xf32>
    %54 = vector.extract_strided_slice %53 {offsets = [0, 0], sizes = [8, 1], strides = [1, 1]} : vector<8x128xf32> to vector<8x1xf32>
    %c0_41 = arith.constant 0 : index
    %c0_42 = arith.constant 0 : index
    %55 = vector.load %arg16[%c0_41, %c0_42] : memref<8x1xf32, #tpu.memory_space<vmem>>, vector<8x1xf32>
    tpu.vector_store %arg16[%c0_41, %c0_42], %54 {strides = array<i32>} : memref<8x1xf32, #tpu.memory_space<vmem>>, vector<8x1xf32>,
    return
  }
  func.func @transform_0(%arg0: i32) -> (i32, i32) {
    %c0_i32 = arith.constant 0 : i32
    %c0_i32_0 = arith.constant 0 : i32
    return %arg0, %c0_i32 : i32, i32
  }
  func.func @transform_1(%arg0: i32) -> (i32, i32) {
    %c0_i32 = arith.constant 0 : i32
    %c0_i32_0 = arith.constant 0 : i32
    %c0_i32_1 = arith.constant 0 : i32
    return %c0_i32, %c0_i32_0 : i32, i32
  }
  func.func @transform_2(%arg0: i32) -> (i32, i32) {
    %c0_i32 = arith.constant 0 : i32
    %c0_i32_0 = arith.constant 0 : i32
    %c0_i32_1 = arith.constant 0 : i32
    return %c0_i32, %c0_i32_0 : i32, i32
  }
  func.func @transform_3(%arg0: i32) -> (i32, i32) {
    %c0_i32 = arith.constant 0 : i32
    %c0_i32_0 = arith.constant 0 : i32
    %c0_i32_1 = arith.constant 0 : i32
    return %c0_i32, %c0_i32_0 : i32, i32
  }
  func.func @transform_4(%arg0: i32) -> (i32, i32) {
    %c0_i32 = arith.constant 0 : i32
    %c0_i32_0 = arith.constant 0 : i32
    %c0_i32_1 = arith.constant 0 : i32
    return %c0_i32, %c0_i32_0 : i32, i32
  }
  func.func @transform_5(%arg0: i32) -> (i32, i32) {
    %c0_i32 = arith.constant 0 : i32
    %c0_i32_0 = arith.constant 0 : i32
    %c0_i32_1 = arith.constant 0 : i32
    return %c0_i32, %c0_i32_0 : i32, i32
  }
  func.func @transform_6(%arg0: i32) -> (i32, i32) {
    %c0_i32 = arith.constant 0 : i32
    %c0_i32_0 = arith.constant 0 : i32
    %c0_i32_1 = arith.constant 0 : i32
    return %c0_i32, %c0_i32_0 : i32, i32
  }
  func.func @transform_7(%arg0: i32) -> (i32, i32) {
    %c0_i32 = arith.constant 0 : i32
    %c0_i32_0 = arith.constant 0 : i32
    %c0_i32_1 = arith.constant 0 : i32
    return %c0_i32, %c0_i32_0 : i32, i32
  }
  func.func @transform_8(%arg0: i32) -> (i32, i32) {
    %c0_i32 = arith.constant 0 : i32
    %c0_i32_0 = arith.constant 0 : i32
    %c0_i32_1 = arith.constant 0 : i32
    return %c0_i32, %c0_i32_0 : i32, i32
  }
  func.func @transform_9(%arg0: i32) -> (i32, i32) {
    %c0_i32 = arith.constant 0 : i32
    %c0_i32_0 = arith.constant 0 : i32
    %c0_i32_1 = arith.constant 0 : i32
    return %c0_i32, %c0_i32_0 : i32, i32
  }
  func.func @transform_10(%arg0: i32) -> (i32, i32) {
    %c0_i32 = arith.constant 0 : i32
    %c0_i32_0 = arith.constant 0 : i32
    %c0_i32_1 = arith.constant 0 : i32
    return %c0_i32, %c0_i32_0 : i32, i32
  }
  func.func @transform_11(%arg0: i32) -> (i32, i32) {
    %c0_i32 = arith.constant 0 : i32
    %c0_i32_0 = arith.constant 0 : i32
    %c0_i32_1 = arith.constant 0 : i32
    return %c0_i32, %c0_i32_0 : i32, i32
  }
  func.func @transform_12(%arg0: i32) -> (i32, i32) {
    %c0_i32 = arith.constant 0 : i32
    %c0_i32_0 = arith.constant 0 : i32
    %c0_i32_1 = arith.constant 0 : i32
    return %c0_i32, %c0_i32_0 : i32, i32
  }
  func.func @transform_13(%arg0: i32) -> (i32, i32) {
    %c0_i32 = arith.constant 0 : i32
    %c0_i32_0 = arith.constant 0 : i32
    %c0_i32_1 = arith.constant 0 : i32
    return %c0_i32, %c0_i32_0 : i32, i32
  }
  func.func @transform_14(%arg0: i32) -> (i32, i32) {
    %c0_i32 = arith.constant 0 : i32
    %c0_i32_0 = arith.constant 0 : i32
    %c0_i32_1 = arith.constant 0 : i32
    return %c0_i32, %c0_i32_0 : i32, i32
  }
  func.func @transform_15(%arg0: i32) -> (i32, i32) {
    %c0_i32 = arith.constant 0 : i32
    %c0_i32_0 = arith.constant 0 : i32
    return %arg0, %c0_i32 : i32, i32
  }
}

</mosaic_0001>

<llo_original>
// kernel: critic_forward.1
$region0: #{critic_forward.1}
  #allocation0 [shape = 'u32[]', space=smem, size = 0x4, offset = 0x4, fixed_abs, tag = 'smem constant byte address 0x4 - core index']
  #allocation1 [shape = 'u32[144,128]{1,0:T(1,128)}', space=vmem, size = 0x12000, scoped, tag = 'internal scratch']
  %s0 = inlined_call_operand.vmem [shape: f32[8,32], index: 0, kind: input, shape index: {}]
  %s1 = inlined_call_operand.hbm [shape: f32[32,256], index: 1, kind: input, shape index: {}]
  %s2 = inlined_call_operand.hbm [shape: f32[1,256], index: 2, kind: input, shape index: {}]
  %s3 = inlined_call_operand.hbm [shape: f32[256,512], index: 3, kind: input, shape index: {}]
  %s4 = inlined_call_operand.hbm [shape: f32[1,512], index: 4, kind: input, shape index: {}]
  %s5 = inlined_call_operand.hbm [shape: f32[512,1024], index: 5, kind: input, shape index: {}]
  %s6 = inlined_call_operand.hbm [shape: f32[1,1024], index: 6, kind: input, shape index: {}]
  %s7 = inlined_call_operand.hbm [shape: f32[1024,512], index: 7, kind: input, shape index: {}]
  %s8 = inlined_call_operand.hbm [shape: f32[1,512], index: 8, kind: input, shape index: {}]
  %s9 = inlined_call_operand.hbm [shape: f32[512,256], index: 9, kind: input, shape index: {}]
  %s10 = inlined_call_operand.hbm [shape: f32[1,256], index: 10, kind: input, shape index: {}]
  %s11 = inlined_call_operand.hbm [shape: f32[256,128], index: 11, kind: input, shape index: {}]
  %s12 = inlined_call_operand.hbm [shape: f32[1,128], index: 12, kind: input, shape index: {}]
  %s13 = inlined_call_operand.vmem [shape: f32[128,128], index: 13, kind: input, shape index: {}]
  %s14 = inlined_call_operand.vmem [shape: f32[1,128], index: 14, kind: input, shape index: {}]
  %s15 = inlined_call_operand.vmem [shape: f32[8,1], index: 15, kind: output, shape index: {}]
  %s16 = sld [smem:[#allocation0]]
  $region118: #{critic_forward.1} parent=0
    _
  %s18 = ssub.s32 1, %s16
  %s19 = scalar_select 0, %s18, %s16
  $region1: #{critic_forward.1} parent=0
    #allocation2 [shape = 'u8[32768]{0}', space=vmem, size = 0x8000, scoped, tag = 'input window, operand 1, single buffered']
    #allocation3 [shape = 's32[1]{0}', space=sflag, size = 0x4, scoped, tag = 'scoped memory for critic_forward.1']
    #allocation4 [shape = 'u8[1024]{0}', space=vmem, size = 0x400, scoped, tag = 'input window, operand 2, single buffered']
    #allocation5 [shape = 's32[1]{0}', space=sflag, size = 0x4, scoped, tag = 'scoped memory for critic_forward.1']
    #allocation6 [shape = 'u8[524288]{0}', space=vmem, size = 0x80000, scoped, tag = 'input window, operand 3, single buffered']
    #allocation7 [shape = 'u8[2048]{0}', space=vmem, size = 0x800, scoped, tag = 'input window, operand 4, single buffered']
    #allocation8 [shape = 's32[1]{0}', space=sflag, size = 0x4, scoped, tag = 'scoped memory for critic_forward.1']
    #allocation9 [shape = 'u8[2097152]{0}', space=vmem, size = 0x200000, scoped, tag = 'input window, operand 5, single buffered']
    #allocation10 [shape = 'u8[4096]{0}', space=vmem, size = 0x1000, scoped, tag = 'input window, operand 6, single buffered']
    #allocation11 [shape = 's32[1]{0}', space=sflag, size = 0x4, scoped, tag = 'scoped memory for critic_forward.1']
    #allocation12 [shape = 'u8[2097152]{0}', space=vmem, size = 0x200000, scoped, tag = 'input window, operand 7, single buffered']
    #allocation13 [shape = 'u8[2048]{0}', space=vmem, size = 0x800, scoped, tag = 'input window, operand 8, single buffered']
    #allocation14 [shape = 's32[1]{0}', space=sflag, size = 0x4, scoped, tag = 'scoped memory for critic_forward.1']
    #allocation15 [shape = 'u8[524288]{0}', space=vmem, size = 0x80000, scoped, tag = 'input window, operand 9, single buffered']
    #allocation16 [shape = 'u8[1024]{0}', space=vmem, size = 0x400, scoped, tag = 'input window, operand 10, single buffered']
    #allocation17 [shape = 's32[1]{0}', space=sflag, size = 0x4, scoped, tag = 'scoped memory for critic_forward.1']
    #allocation18 [shape = 'u8[131072]{0}', space=vmem, size = 0x20000, scoped, tag = 'input window, operand 11, single buffered']
    #allocation19 [shape = 'u8[512]{0}', space=vmem, size = 0x400, scoped, tag = 'input window, operand 12, single buffered']
    #allocation20 [shape = 's32[1]{0}', space=sflag, size = 0x4, scoped, tag = 'scoped memory for critic_forward.1']
    %20 = vsyncpa [#allocation3], 0
    %21 = vsyncpa [#allocation5], 0
    %22 = vsyncpa [#allocation8], 0
    %23 = vsyncpa [#allocation11], 0
    %24 = vsyncpa [#allocation14], 0
    %25 = vsyncpa [#allocation17], 0
    %26 = vsyncpa [#allocation20], 0
    // Predicated region
    $region2: #{critic_forward.1} parent=1 // pred_check
      _
    $region3: #{critic_forward.1} parent=1 // pred_check_branch
      %28 = sbr.rel (0) target = $region5
    $region4: #{critic_forward.1} parent=1 // pred_region
      _
    $region5: #{critic_forward.1} parent=1 // pred_fallthru
      _
    // Predicated region
    $region6: #{critic_forward.1} parent=1 // pred_check
      _
    $region7: #{critic_forward.1} parent=1 // pred_check_branch
      %30 = sbr.rel (0) target = $region9
    $region8: #{critic_forward.1} parent=1 // pred_region
      %s32 = ssub.s32 1024, 1024
      %33 = vsyncadd [#allocation3], %s32
      %s34 = sshll.u32 [#allocation2], 4
      %s35 = int_to_ptr.vmem [resolvable:$true] %s34
      %40 = dma.hbm_to_vmem [thread:$0]  %s1, 1024, %s35, [#allocation3], 256, 256, 16
    $region9: #{critic_forward.1} parent=1 // pred_fallthru
      _
    // Predicated region
    $region10: #{critic_forward.1} parent=1 // pred_check
      _
    $region11: #{critic_forward.1} parent=1 // pred_check_branch
      %42 = sbr.rel (0) target = $region13
    $region12: #{critic_forward.1} parent=1 // pred_region
      %s44 = ssub.s32 32, 32
      %45 = vsyncadd [#allocation5], %s44
      %s47 = sshll.u32 [#allocation4], 4
      %s48 = int_to_ptr.vmem [resolvable:$true] %s47
      %50 = dma.hbm_to_vmem [thread:$0]  %s2, 32, %s48, [#allocation5]
    $region13: #{critic_forward.1} parent=1 // pred_fallthru
      _
    // Predicated region
    $region14: #{critic_forward.1} parent=1 // pred_check
      _
    $region15: #{critic_forward.1} parent=1 // pred_check_branch
      %52 = sbr.rel (0) target = $region17
    $region16: #{critic_forward.1} parent=1 // pred_region
      %s54 = ssub.s32 16384, 16384
      %55 = vsyncadd [#allocation5], %s54
      %s56 = sshll.u32 [#allocation6], 4
      %s57 = int_to_ptr.vmem [resolvable:$true] %s56
      %62 = dma.hbm_to_vmem [thread:$0]  %s3, 16384, %s57, [#allocation5], 512, 512, 32
    $region17: #{critic_forward.1} parent=1 // pred_fallthru
      _
    // Predicated region
    $region18: #{critic_forward.1} parent=1 // pred_check
      _
    $region19: #{critic_forward.1} parent=1 // pred_check_branch
      %64 = sbr.rel (0) target = $region21
    $region20: #{critic_forward.1} parent=1 // pred_region
      %s66 = ssub.s32 64, 64
      %67 = vsyncadd [#allocation8], %s66
      %s69 = sshll.u32 [#allocation7], 4
      %s70 = int_to_ptr.vmem [resolvable:$true] %s69
      %72 = dma.hbm_to_vmem [thread:$0]  %s4, 64, %s70, [#allocation8]
    $region21: #{critic_forward.1} parent=1 // pred_fallthru
      _
    // Predicated region
    $region22: #{critic_forward.1} parent=1 // pred_check
      _
    $region23: #{critic_forward.1} parent=1 // pred_check_branch
      %74 = sbr.rel (0) target = $region25
    $region24: #{critic_forward.1} parent=1 // pred_region
      %s76 = ssub.s32 65536, 65536
      %77 = vsyncadd [#allocation8], %s76
      %s78 = sshll.u32 [#allocation9], 4
      %s79 = int_to_ptr.vmem [resolvable:$true] %s78
      %84 = dma.hbm_to_vmem [thread:$0]  %s5, 65536, %s79, [#allocation8], 1024, 1024, 64
    $region25: #{critic_forward.1} parent=1 // pred_fallthru
      _
    // Predicated region
    $region26: #{critic_forward.1} parent=1 // pred_check
      _
    $region27: #{critic_forward.1} parent=1 // pred_check_branch
      %86 = sbr.rel (0) target = $region29
    $region28: #{critic_forward.1} parent=1 // pred_region
      %s88 = ssub.s32 128, 128
      %89 = vsyncadd [#allocation11], %s88
      %s91 = sshll.u32 [#allocation10], 4
      %s92 = int_to_ptr.vmem [resolvable:$true] %s91
      %94 = dma.hbm_to_vmem [thread:$0]  %s6, 128, %s92, [#allocation11]
    $region29: #{critic_forward.1} parent=1 // pred_fallthru
      _
    // Predicated region
    $region30: #{critic_forward.1} parent=1 // pred_check
      _
    $region31: #{critic_forward.1} parent=1 // pred_check_branch
      %96 = sbr.rel (0) target = $region33
    $region32: #{critic_forward.1} parent=1 // pred_region
      %s98 = ssub.s32 65536, 65536
      %99 = vsyncadd [#allocation11], %s98
      %s100 = sshll.u32 [#allocation12], 4
      %s101 = int_to_ptr.vmem [resolvable:$true] %s100
      %106 = dma.hbm_to_vmem [thread:$0]  %s7, 65536, %s101, [#allocation11], 512, 512, 32
    $region33: #{critic_forward.1} parent=1 // pred_fallthru
      _
    // Predicated region
    $region34: #{critic_forward.1} parent=1 // pred_check
      _
    $region35: #{critic_forward.1} parent=1 // pred_check_branch
      %108 = sbr.rel (0) target = $region37
    $region36: #{critic_forward.1} parent=1 // pred_region
      %s110 = ssub.s32 64, 64
      %111 = vsyncadd [#allocation14], %s110
      %s113 = sshll.u32 [#allocation13], 4
      %s114 = int_to_ptr.vmem [resolvable:$true] %s113
      %116 = dma.hbm_to_vmem [thread:$0]  %s8, 64, %s114, [#allocation14]
    $region37: #{critic_forward.1} parent=1 // pred_fallthru
      _
    // Predicated region
    $region38: #{critic_forward.1} parent=1 // pred_check
      _
    $region39: #{critic_forward.1} parent=1 // pred_check_branch
      %118 = sbr.rel (0) target = $region41
    $region40: #{critic_forward.1} parent=1 // pred_region
      %s120 = ssub.s32 16384, 16384
      %121 = vsyncadd [#allocation14], %s120
      %s122 = sshll.u32 [#allocation15], 4
      %s123 = int_to_ptr.vmem [resolvable:$true] %s122
      %128 = dma.hbm_to_vmem [thread:$0]  %s9, 16384, %s123, [#allocation14], 256, 256, 16
    $region41: #{critic_forward.1} parent=1 // pred_fallthru
      _
    // Predicated region
    $region42: #{critic_forward.1} parent=1 // pred_check
      _
    $region43: #{critic_forward.1} parent=1 // pred_check_branch
      %130 = sbr.rel (0) target = $region45
    $region44: #{critic_forward.1} parent=1 // pred_region
      %s132 = ssub.s32 32, 32
      %133 = vsyncadd [#allocation17], %s132
      %s135 = sshll.u32 [#allocation16], 4
      %s136 = int_to_ptr.vmem [resolvable:$true] %s135
      %138 = dma.hbm_to_vmem [thread:$0]  %s10, 32, %s136, [#allocation17]
    $region45: #{critic_forward.1} parent=1 // pred_fallthru
      _
    // Predicated region
    $region46: #{critic_forward.1} parent=1 // pred_check
      _
    $region47: #{critic_forward.1} parent=1 // pred_check_branch
      %140 = sbr.rel (0) target = $region49
    $region48: #{critic_forward.1} parent=1 // pred_region
      %s142 = ssub.s32 4096, 4096
      %143 = vsyncadd [#allocation17], %s142
      %s144 = sshll.u32 [#allocation18], 4
      %s145 = int_to_ptr.vmem [resolvable:$true] %s144
      %150 = dma.hbm_to_vmem [thread:$0]  %s11, 4096, %s145, [#allocation17], 128, 128, 8
    $region49: #{critic_forward.1} parent=1 // pred_fallthru
      _
    // Predicated region
    $region50: #{critic_forward.1} parent=1 // pred_check
      _
    $region51: #{critic_forward.1} parent=1 // pred_check_branch
      %152 = sbr.rel (0) target = $region53
    $region52: #{critic_forward.1} parent=1 // pred_region
      %s154 = ssub.s32 16, 16
      %155 = vsyncadd [#allocation20], %s154
      %s157 = sshll.u32 [#allocation19], 4
      %s158 = int_to_ptr.vmem [resolvable:$true] %s157
      %160 = dma.hbm_to_vmem [thread:$0]  %s12, 16, %s158, [#allocation20]
    $region53: #{critic_forward.1} parent=1 // pred_fallthru
      _
    // Predicated region
    $region54: #{critic_forward.1} parent=1 // pred_check
      _
    $region55: #{critic_forward.1} parent=1 // pred_check_branch
      %162 = sbr.rel (0) target = $region57
    $region56: #{critic_forward.1} parent=1 // pred_region
      _
    $region57: #{critic_forward.1} parent=1 // pred_fallthru
      _
    // Predicated region
    $region58: #{critic_forward.1} parent=1 // pred_check
      _
    $region59: #{critic_forward.1} parent=1 // pred_check_branch
      %164 = sbr.rel (0) target = $region61
    $region60: #{critic_forward.1} parent=1 // pred_region
      _
    $region61: #{critic_forward.1} parent=1 // pred_fallthru
      _
    // Predicated region
    $region62: #{critic_forward.1} parent=1 // pred_check
      _
    $region63: #{critic_forward.1} parent=1 // pred_check_branch
      %166 = sbr.rel (0) target = $region65
    $region64: #{critic_forward.1} parent=1 // pred_region
      %167 = dma.done [#allocation3], 1024
    $region65: #{critic_forward.1} parent=1 // pred_fallthru
      _
    // Predicated region
    $region66: #{critic_forward.1} parent=1 // pred_check
      _
    $region67: #{critic_forward.1} parent=1 // pred_check_branch
      %169 = sbr.rel (0) target = $region69
    $region68: #{critic_forward.1} parent=1 // pred_region
      %170 = dma.done [#allocation5], 32
    $region69: #{critic_forward.1} parent=1 // pred_fallthru
      _
    // Predicated region
    $region70: #{critic_forward.1} parent=1 // pred_check
      _
    $region71: #{critic_forward.1} parent=1 // pred_check_branch
      %172 = sbr.rel (0) target = $region73
    $region72: #{critic_forward.1} parent=1 // pred_region
      %173 = dma.done [#allocation5], 16384
    $region73: #{critic_forward.1} parent=1 // pred_fallthru
      _
    // Predicated region
    $region74: #{critic_forward.1} parent=1 // pred_check
      _
    $region75: #{critic_forward.1} parent=1 // pred_check_branch
      %175 = sbr.rel (0) target = $region77
    $region76: #{critic_forward.1} parent=1 // pred_region
      %176 = dma.done [#allocation8], 64
    $region77: #{critic_forward.1} parent=1 // pred_fallthru
      _
    // Predicated region
    $region78: #{critic_forward.1} parent=1 // pred_check
      _
    $region79: #{critic_forward.1} parent=1 // pred_check_branch
      %178 = sbr.rel (0) target = $region81
    $region80: #{critic_forward.1} parent=1 // pred_region
      %179 = dma.done [#allocation8], 65536
    $region81: #{critic_forward.1} parent=1 // pred_fallthru
      _
    // Predicated region
    $region82: #{critic_forward.1} parent=1 // pred_check
      _
    $region83: #{critic_forward.1} parent=1 // pred_check_branch
      %181 = sbr.rel (0) target = $region85
    $region84: #{critic_forward.1} parent=1 // pred_region
      %182 = dma.done [#allocation11], 128
    $region85: #{critic_forward.1} parent=1 // pred_fallthru
      _
    // Predicated region
    $region86: #{critic_forward.1} parent=1 // pred_check
      _
    $region87: #{critic_forward.1} parent=1 // pred_check_branch
      %184 = sbr.rel (0) target = $region89
    $region88: #{critic_forward.1} parent=1 // pred_region
      %185 = dma.done [#allocation11], 65536
    $region89: #{critic_forward.1} parent=1 // pred_fallthru
      _
    // Predicated region
    $region90: #{critic_forward.1} parent=1 // pred_check
      _
    $region91: #{critic_forward.1} parent=1 // pred_check_branch
      %187 = sbr.rel (0) target = $region93
    $region92: #{critic_forward.1} parent=1 // pred_region
      %188 = dma.done [#allocation14], 64
    $region93: #{critic_forward.1} parent=1 // pred_fallthru
      _
    // Predicated region
    $region94: #{critic_forward.1} parent=1 // pred_check
      _
    $region95: #{critic_forward.1} parent=1 // pred_check_branch
      %190 = sbr.rel (0) target = $region97
    $region96: #{critic_forward.1} parent=1 // pred_region
      %191 = dma.done [#allocation14], 16384
    $region97: #{critic_forward.1} parent=1 // pred_fallthru
      _
    // Predicated region
    $region98: #{critic_forward.1} parent=1 // pred_check
      _
    $region99: #{critic_forward.1} parent=1 // pred_check_branch
      %193 = sbr.rel (0) target = $region101
    $region100: #{critic_forward.1} parent=1 // pred_region
      %194 = dma.done [#allocation17], 32
    $region101: #{critic_forward.1} parent=1 // pred_fallthru
      _
    // Predicated region
    $region102: #{critic_forward.1} parent=1 // pred_check
      _
    $region103: #{critic_forward.1} parent=1 // pred_check_branch
      %196 = sbr.rel (0) target = $region105
    $region104: #{critic_forward.1} parent=1 // pred_region
      %197 = dma.done [#allocation17], 4096
    $region105: #{critic_forward.1} parent=1 // pred_fallthru
      _
    // Predicated region
    $region106: #{critic_forward.1} parent=1 // pred_check
      _
    $region107: #{critic_forward.1} parent=1 // pred_check_branch
      %199 = sbr.rel (0) target = $region109
    $region108: #{critic_forward.1} parent=1 // pred_region
      %200 = dma.done [#allocation20], 16
    $region109: #{critic_forward.1} parent=1 // pred_fallthru
      _
    %v201 = vld [vmem:[%s0] sm:$0xff]
    %v202 = vld [vmem:[#allocation2] sm:$0xff]
    %v203 = vld [vmem:[#allocation2 + $0x8] sm:$0xff]
    %v204 = vld [vmem:[#allocation2 + $0x10] sm:$0xff]
    %v205 = vld [vmem:[#allocation2 + $0x18] sm:$0xff]
    %v206 = vld [vmem:[#allocation2 + $0x20] sm:$0xff]
    %v207 = vld [vmem:[#allocation2 + $0x28] sm:$0xff]
    %v208 = vld [vmem:[#allocation2 + $0x30] sm:$0xff]
    %v209 = vld [vmem:[#allocation2 + $0x38] sm:$0xff]
    %v210 = vld [vmem:[#allocation4] sm:$0x3]
    %v212 = vlaneseq
    %v213 = vshrl.u32 %v212, 7
    %v214 = vsub.s32 0, %v213
    %v215 = vrot.slane %v210, %v214
    %v216 = vlaneseq
    %v217 = vshrl.u32 %v216, 7
    %v218 = vsub.s32 1, %v217
    %v219 = vrot.slane %v210, %v218
    %vm222 = vcmask 261120
    %v224 = vsel %vm222, %v201, 0
    %226 = vmatprep.subr.mxu0 %v203
    %227 = vmatpush1.msra.mxu0 %v202
    %228 = vmatprep.subr.mxu0 %v205
    %229 = vmatpush1.msra.mxu0 %v204
    %230 = vmatprep.subr.mxu0 %v207
    %231 = vmatpush1.msra.mxu0 %v206
    %232 = vmatprep.subr.mxu0 %v209
    %233 = vmatpush1.msra.mxu0 %v208
    %234 = vmatprep.subr.mxu0 0.0
    %235 = vmatpush1.msra.mxu0 0.0
    %236 = vmatprep.subr.mxu0 0.0
    %237 = vmatpush1.msra.mxu0 0.0
    %238 = vmatprep.subr.mxu0 0.0
    %239 = vmatpush1.msra.mxu0 0.0
    %240 = vmatprep.subr.mxu0 0.0
    %241 = vmatpush1.msra.mxu0 0.0
    %242 = vmatprep.subr.mxu0 0.0
    %243 = vmatpush1.msra.mxu0 0.0
    %244 = vmatprep.subr.mxu0 0.0
    %245 = vmatpush1.msra.mxu0 0.0
    %246 = vmatprep.subr.mxu0 0.0
    %247 = vmatpush1.msra.mxu0 0.0
    %248 = vmatprep.subr.mxu0 0.0
    %249 = vmatpush1.msra.mxu0 0.0
    %250 = vmatprep.subr.mxu0 0.0
    %251 = vmatpush1.msra.mxu0 0.0
    %252 = vmatprep.subr.mxu0 0.0
    %253 = vmatpush1.msra.mxu0 0.0
    %254 = vmatprep.subr.mxu0 0.0
    %255 = vmatpush1.msra.mxu0 0.0
    %256 = vmatprep.subr.mxu0 0.0
    %257 = vmatpush1.msra.mxu0 0.0
    %258 = vmatprep.subr.mxu0 0.0
    %259 = vmatpush1.msra.mxu0 0.0
    %260 = vmatprep.subr.mxu0 0.0
    %261 = vmatpush1.msra.mxu0 0.0
    %262 = vmatprep.subr.mxu0 0.0
    %263 = vmatpush1.msra.mxu0 0.0
    %264 = vmatprep.subr.mxu0 0.0
    %265 = vmatpush1.msra.mxu0 0.0
    %266 = vmatprep.subr.mxu0 0.0
    %267 = vmatpush1.msra.mxu0 0.0
    %268 = vmatprep.subr.mxu0 0.0
    %269 = vmatpush1.msra.mxu0 0.0
    %270 = vmatprep.subr.mxu0 0.0
    %271 = vmatpush1.msra.mxu0 0.0
    %272 = vmatprep.subr.mxu0 0.0
    %273 = vmatpush1.msra.mxu0 0.0
    %274 = vmatprep.subr.mxu0 0.0
    %275 = vmatpush1.msra.mxu0 0.0
    %276 = vmatprep.subr.mxu0 0.0
    %277 = vmatpush1.msra.mxu0 0.0
    %278 = vmatprep.subr.mxu0 0.0
    %279 = vmatpush1.msra.mxu0 0.0
    %280 = vmatprep.subr.mxu0 0.0
    %281 = vmatpush1.msra.mxu0 0.0
    %282 = vmatprep.subr.mxu0 0.0
    %283 = vmatpush1.msra.mxu0 0.0
    %284 = vmatprep.subr.mxu0 0.0
    %285 = vmatpush1.msra.mxu0 0.0
    %286 = vmatprep.subr.mxu0 0.0
    %287 = vmatpush1.msra.mxu0 0.0
    %288 = vmatprep.subr.mxu0 0.0
    %289 = vmatpush1.msra.mxu0 0.0
    %290 = vmatprep.mubr.f32.mxu0 0.0
    %291 = vmatmul.mubr.f32.gmra.mrb[0].mxu0 %v224
    %v292 = vpop.f32.mrb[0].mxu0
    %v293 = vadd.f32 %v215, %v292
    %v294 = vpop.f32.mrb[0].mxu0
    %v295 = vadd.f32 %v219, %v294
    %296 = vdwg.mxu0
    %v297 = vmul.f32 %v293, 0.2
    %v298 = vmul.f32 %v295, 0.2
    %v299 = vmax.f32 %v293, %v297
    %v300 = vmax.f32 %v295, %v298
    %v301 = vld [vmem:[#allocation6] sm:$0xff]
    %v302 = vld [vmem:[#allocation6 + $0x8] sm:$0xff]
    %v303 = vld [vmem:[#allocation6 + $0x10] sm:$0xff]
    %v304 = vld [vmem:[#allocation6 + $0x18] sm:$0xff]
    %v305 = vld [vmem:[#allocation6 + $0x20] sm:$0xff]
    %v306 = vld [vmem:[#allocation6 + $0x28] sm:$0xff]
    %v307 = vld [vmem:[#allocation6 + $0x30] sm:$0xff]
    %v308 = vld [vmem:[#allocation6 + $0x38] sm:$0xff]
    %v309 = vld [vmem:[#allocation6 + $0x40] sm:$0xff]
    %v310 = vld [vmem:[#allocation6 + $0x48] sm:$0xff]
    %v311 = vld [vmem:[#allocation6 + $0x50] sm:$0xff]
    %v312 = vld [vmem:[#allocation6 + $0x58] sm:$0xff]
    %v313 = vld [vmem:[#allocation6 + $0x60] sm:$0xff]
    %v314 = vld [vmem:[#allocation6 + $0x68] sm:$0xff]
    %v315 = vld [vmem:[#allocation6 + $0x70] sm:$0xff]
    %v316 = vld [vmem:[#allocation6 + $0x78] sm:$0xff]
    %v317 = vld [vmem:[#allocation6 + $0x80] sm:$0xff]
    %v318 = vld [vmem:[#allocation6 + $0x88] sm:$0xff]
    %v319 = vld [vmem:[#allocation6 + $0x90] sm:$0xff]
    %v320 = vld [vmem:[#allocation6 + $0x98] sm:$0xff]
    %v321 = vld [vmem:[#allocation6 + $0xa0] sm:$0xff]
    %v322 = vld [vmem:[#allocation6 + $0xa8] sm:$0xff]
    %v323 = vld [vmem:[#allocation6 + $0xb0] sm:$0xff]
    %v324 = vld [vmem:[#allocation6 + $0xb8] sm:$0xff]
    %v325 = vld [vmem:[#allocation6 + $0xc0] sm:$0xff]
    %v326 = vld [vmem:[#allocation6 + $0xc8] sm:$0xff]
    %v327 = vld [vmem:[#allocation6 + $0xd0] sm:$0xff]
    %v328 = vld [vmem:[#allocation6 + $0xd8] sm:$0xff]
    %v329 = vld [vmem:[#allocation6 + $0xe0] sm:$0xff]
    %v330 = vld [vmem:[#allocation6 + $0xe8] sm:$0xff]
    %v331 = vld [vmem:[#allocation6 + $0xf0] sm:$0xff]
    %v332 = vld [vmem:[#allocation6 + $0xf8] sm:$0xff]
    %v333 = vld [vmem:[#allocation6 + $0x100] sm:$0xff]
    %v334 = vld [vmem:[#allocation6 + $0x108] sm:$0xff]
    %v335 = vld [vmem:[#allocation6 + $0x110] sm:$0xff]
    %v336 = vld [vmem:[#allocation6 + $0x118] sm:$0xff]
    %v337 = vld [vmem:[#allocation6 + $0x120] sm:$0xff]
    %v338 = vld [vmem:[#allocation6 + $0x128] sm:$0xff]
    %v339 = vld [vmem:[#allocation6 + $0x130] sm:$0xff]
    %v340 = vld [vmem:[#allocation6 + $0x138] sm:$0xff]
    %v341 = vld [vmem:[#allocation6 + $0x140] sm:$0xff]
    %v342 = vld [vmem:[#allocation6 + $0x148] sm:$0xff]
    %v343 = vld [vmem:[#allocation6 + $0x150] sm:$0xff]
    %v344 = vld [vmem:[#allocation6 + $0x158] sm:$0xff]
    %v345 = vld [vmem:[#allocation6 + $0x160] sm:$0xff]
    %v346 = vld [vmem:[#allocation6 + $0x168] sm:$0xff]
    %v347 = vld [vmem:[#allocation6 + $0x170] sm:$0xff]
    %v348 = vld [vmem:[#allocation6 + $0x178] sm:$0xff]
    %v349 = vld [vmem:[#allocation6 + $0x180] sm:$0xff]
    %v350 = vld [vmem:[#allocation6 + $0x188] sm:$0xff]
    %v351 = vld [vmem:[#allocation6 + $0x190] sm:$0xff]
    %v352 = vld [vmem:[#allocation6 + $0x198] sm:$0xff]
    %v353 = vld [vmem:[#allocation6 + $0x1a0] sm:$0xff]
    %v354 = vld [vmem:[#allocation6 + $0x1a8] sm:$0xff]
    %v355 = vld [vmem:[#allocation6 + $0x1b0] sm:$0xff]
    %v356 = vld [vmem:[#allocation6 + $0x1b8] sm:$0xff]
    %v357 = vld [vmem:[#allocation6 + $0x1c0] sm:$0xff]
    %v358 = vld [vmem:[#allocation6 + $0x1c8] sm:$0xff]
    %v359 = vld [vmem:[#allocation6 + $0x1d0] sm:$0xff]
    %v360 = vld [vmem:[#allocation6 + $0x1d8] sm:$0xff]
    %v361 = vld [vmem:[#allocation6 + $0x1e0] sm:$0xff]
    %v362 = vld [vmem:[#allocation6 + $0x1e8] sm:$0xff]
    %v363 = vld [vmem:[#allocation6 + $0x1f0] sm:$0xff]
    %v364 = vld [vmem:[#allocation6 + $0x1f8] sm:$0xff]
    %v365 = vld [vmem:[#allocation6 + $0x200] sm:$0xff]
    %v366 = vld [vmem:[#allocation6 + $0x208] sm:$0xff]
    %v367 = vld [vmem:[#allocation6 + $0x210] sm:$0xff]
    %v368 = vld [vmem:[#allocation6 + $0x218] sm:$0xff]
    %v369 = vld [vmem:[#allocation6 + $0x220] sm:$0xff]
    %v370 = vld [vmem:[#allocation6 + $0x228] sm:$0xff]
    %v371 = vld [vmem:[#allocation6 + $0x230] sm:$0xff]
    %v372 = vld [vmem:[#allocation6 + $0x238] sm:$0xff]
    %v373 = vld [vmem:[#allocation6 + $0x240] sm:$0xff]
    %v374 = vld [vmem:[#allocation6 + $0x248] sm:$0xff]
    %v375 = vld [vmem:[#allocation6 + $0x250] sm:$0xff]
    %v376 = vld [vmem:[#allocation6 + $0x258] sm:$0xff]
    %v377 = vld [vmem:[#allocation6 + $0x260] sm:$0xff]
    %v378 = vld [vmem:[#allocation6 + $0x268] sm:$0xff]
    %v379 = vld [vmem:[#allocation6 + $0x270] sm:$0xff]
    %v380 = vld [vmem:[#allocation6 + $0x278] sm:$0xff]
    %v381 = vld [vmem:[#allocation6 + $0x280] sm:$0xff]
    %v382 = vld [vmem:[#allocation6 + $0x288] sm:$0xff]
    %v383 = vld [vmem:[#allocation6 + $0x290] sm:$0xff]
    %v384 = vld [vmem:[#allocation6 + $0x298] sm:$0xff]
    %v385 = vld [vmem:[#allocation6 + $0x2a0] sm:$0xff]
    %v386 = vld [vmem:[#allocation6 + $0x2a8] sm:$0xff]
    %v387 = vld [vmem:[#allocation6 + $0x2b0] sm:$0xff]
    %v388 = vld [vmem:[#allocation6 + $0x2b8] sm:$0xff]
    %v389 = vld [vmem:[#allocation6 + $0x2c0] sm:$0xff]
    %v390 = vld [vmem:[#allocation6 + $0x2c8] sm:$0xff]
    %v391 = vld [vmem:[#allocation6 + $0x2d0] sm:$0xff]
    %v392 = vld [vmem:[#allocation6 + $0x2d8] sm:$0xff]
    %v393 = vld [vmem:[#allocation6 + $0x2e0] sm:$0xff]
    %v394 = vld [vmem:[#allocation6 + $0x2e8] sm:$0xff]
    %v395 = vld [vmem:[#allocation6 + $0x2f0] sm:$0xff]
    %v396 = vld [vmem:[#allocation6 + $0x2f8] sm:$0xff]
    %v397 = vld [vmem:[#allocation6 + $0x300] sm:$0xff]
    %v398 = vld [vmem:[#allocation6 + $0x308] sm:$0xff]
    %v399 = vld [vmem:[#allocation6 + $0x310] sm:$0xff]
    %v400 = vld [vmem:[#allocation6 + $0x318] sm:$0xff]
    %v401 = vld [vmem:[#allocation6 + $0x320] sm:$0xff]
    %v402 = vld [vmem:[#allocation6 + $0x328] sm:$0xff]
    %v403 = vld [vmem:[#allocation6 + $0x330] sm:$0xff]
    %v404 = vld [vmem:[#allocation6 + $0x338] sm:$0xff]
    %v405 = vld [vmem:[#allocation6 + $0x340] sm:$0xff]
    %v406 = vld [vmem:[#allocation6 + $0x348] sm:$0xff]
    %v407 = vld [vmem:[#allocation6 + $0x350] sm:$0xff]
    %v408 = vld [vmem:[#allocation6 + $0x358] sm:$0xff]
    %v409 = vld [vmem:[#allocation6 + $0x360] sm:$0xff]
    %v410 = vld [vmem:[#allocation6 + $0x368] sm:$0xff]
    %v411 = vld [vmem:[#allocation6 + $0x370] sm:$0xff]
    %v412 = vld [vmem:[#allocation6 + $0x378] sm:$0xff]
    %v413 = vld [vmem:[#allocation6 + $0x380] sm:$0xff]
    %v414 = vld [vmem:[#allocation6 + $0x388] sm:$0xff]
    %v415 = vld [vmem:[#allocation6 + $0x390] sm:$0xff]
    %v416 = vld [vmem:[#allocation6 + $0x398] sm:$0xff]
    %v417 = vld [vmem:[#allocation6 + $0x3a0] sm:$0xff]
    %v418 = vld [vmem:[#allocation6 + $0x3a8] sm:$0xff]
    %v419 = vld [vmem:[#allocation6 + $0x3b0] sm:$0xff]
    %v420 = vld [vmem:[#allocation6 + $0x3b8] sm:$0xff]
    %v421 = vld [vmem:[#allocation6 + $0x3c0] sm:$0xff]
    %v422 = vld [vmem:[#allocation6 + $0x3c8] sm:$0xff]
    %v423 = vld [vmem:[#allocation6 + $0x3d0] sm:$0xff]
    %v424 = vld [vmem:[#allocation6 + $0x3d8] sm:$0xff]
    %v425 = vld [vmem:[#allocation6 + $0x3e0] sm:$0xff]
    %v426 = vld [vmem:[#allocation6 + $0x3e8] sm:$0xff]
    %v427 = vld [vmem:[#allocation6 + $0x3f0] sm:$0xff]
    %v428 = vld [vmem:[#allocation6 + $0x3f8] sm:$0xff]
    %v429 = vld [vmem:[#allocation7] sm:$0xf]
    %v431 = vlaneseq
    %v432 = vshrl.u32 %v431, 7
    %v433 = vsub.s32 0, %v432
    %v434 = vrot.slane %v429, %v433
    %v435 = vlaneseq
    %v436 = vshrl.u32 %v435, 7
    %v437 = vsub.s32 1, %v436
    %v438 = vrot.slane %v429, %v437
    %v439 = vlaneseq
    %v440 = vshrl.u32 %v439, 7
    %v441 = vsub.s32 2, %v440
    %v442 = vrot.slane %v429, %v441
    %v443 = vlaneseq
    %v444 = vshrl.u32 %v443, 7
    %v445 = vsub.s32 3, %v444
    %v446 = vrot.slane %v429, %v445
    %451 = vmatprep.subr.mxu0 %v302
    %452 = vmatpush1.msra.mxu0 %v301
    %453 = vmatprep.subr.mxu0 %v306
    %454 = vmatpush1.msra.mxu0 %v305
    %455 = vmatprep.subr.mxu0 %v310
    %456 = vmatpush1.msra.mxu0 %v309
    %457 = vmatprep.subr.mxu0 %v314
    %458 = vmatpush1.msra.mxu0 %v313
    %459 = vmatprep.subr.mxu0 %v318
    %460 = vmatpush1.msra.mxu0 %v317
    %461 = vmatprep.subr.mxu0 %v322
    %462 = vmatpush1.msra.mxu0 %v321
    %463 = vmatprep.subr.mxu0 %v326
    %464 = vmatpush1.msra.mxu0 %v325
    %465 = vmatprep.subr.mxu0 %v330
    %466 = vmatpush1.msra.mxu0 %v329
    %467 = vmatprep.subr.mxu0 %v334
    %468 = vmatpush1.msra.mxu0 %v333
    %469 = vmatprep.subr.mxu0 %v338
    %470 = vmatpush1.msra.mxu0 %v337
    %471 = vmatprep.subr.mxu0 %v342
    %472 = vmatpush1.msra.mxu0 %v341
    %473 = vmatprep.subr.mxu0 %v346
    %474 = vmatpush1.msra.mxu0 %v345
    %475 = vmatprep.subr.mxu0 %v350
    %476 = vmatpush1.msra.mxu0 %v349
    %477 = vmatprep.subr.mxu0 %v354
    %478 = vmatpush1.msra.mxu0 %v353
    %479 = vmatprep.subr.mxu0 %v358
    %480 = vmatpush1.msra.mxu0 %v357
    %481 = vmatprep.subr.mxu0 %v362
    %482 = vmatpush1.msra.mxu0 %v361
    %483 = vmatprep.subr.mxu0 %v366
    %484 = vmatpush1.msra.mxu0 %v365
    %485 = vmatprep.subr.mxu0 %v370
    %486 = vmatpush1.msra.mxu0 %v369
    %487 = vmatprep.subr.mxu0 %v374
    %488 = vmatpush1.msra.mxu0 %v373
    %489 = vmatprep.subr.mxu0 %v378
    %490 = vmatpush1.msra.mxu0 %v377
    %491 = vmatprep.subr.mxu0 %v382
    %492 = vmatpush1.msra.mxu0 %v381
    %493 = vmatprep.subr.mxu0 %v386
    %494 = vmatpush1.msra.mxu0 %v385
    %495 = vmatprep.subr.mxu0 %v390
    %496 = vmatpush1.msra.mxu0 %v389
    %497 = vmatprep.subr.mxu0 %v394
    %498 = vmatpush1.msra.mxu0 %v393
    %499 = vmatprep.subr.mxu0 %v398
    %500 = vmatpush1.msra.mxu0 %v397
    %501 = vmatprep.subr.mxu0 %v402
    %502 = vmatpush1.msra.mxu0 %v401
    %503 = vmatprep.subr.mxu0 %v406
    %504 = vmatpush1.msra.mxu0 %v405
    %505 = vmatprep.subr.mxu0 %v410
    %506 = vmatpush1.msra.mxu0 %v409
    %507 = vmatprep.subr.mxu0 %v414
    %508 = vmatpush1.msra.mxu0 %v413
    %509 = vmatprep.subr.mxu0 %v418
    %510 = vmatpush1.msra.mxu0 %v417
    %511 = vmatprep.subr.mxu0 %v422
    %512 = vmatpush1.msra.mxu0 %v421
    %513 = vmatprep.subr.mxu0 %v426
    %514 = vmatpush1.msra.mxu0 %v425
    %515 = vmatprep.mubr.f32.mxu0 %v300
    %516 = vmatmul.mubr.f32.gmra.mrb[0].mxu0 %v299
    %v517 = vpop.f32.mrb[0].mxu0
    %v518 = vadd.f32 %v434, %v517
    %v519 = vpop.f32.mrb[0].mxu0
    %v520 = vadd.f32 %v438, %v519
    %521 = vdwg.mxu0
    %522 = vmatprep.subr.mxu0 %v304
    %523 = vmatpush1.msra.mxu0 %v303
    %524 = vmatprep.subr.mxu0 %v308
    %525 = vmatpush1.msra.mxu0 %v307
    %526 = vmatprep.subr.mxu0 %v312
    %527 = vmatpush1.msra.mxu0 %v311
    %528 = vmatprep.subr.mxu0 %v316
    %529 = vmatpush1.msra.mxu0 %v315
    %530 = vmatprep.subr.mxu0 %v320
    %531 = vmatpush1.msra.mxu0 %v319
    %532 = vmatprep.subr.mxu0 %v324
    %533 = vmatpush1.msra.mxu0 %v323
    %534 = vmatprep.subr.mxu0 %v328
    %535 = vmatpush1.msra.mxu0 %v327
    %536 = vmatprep.subr.mxu0 %v332
    %537 = vmatpush1.msra.mxu0 %v331
    %538 = vmatprep.subr.mxu0 %v336
    %539 = vmatpush1.msra.mxu0 %v335
    %540 = vmatprep.subr.mxu0 %v340
    %541 = vmatpush1.msra.mxu0 %v339
    %542 = vmatprep.subr.mxu0 %v344
    %543 = vmatpush1.msra.mxu0 %v343
    %544 = vmatprep.subr.mxu0 %v348
    %545 = vmatpush1.msra.mxu0 %v347
    %546 = vmatprep.subr.mxu0 %v352
    %547 = vmatpush1.msra.mxu0 %v351
    %548 = vmatprep.subr.mxu0 %v356
    %549 = vmatpush1.msra.mxu0 %v355
    %550 = vmatprep.subr.mxu0 %v360
    %551 = vmatpush1.msra.mxu0 %v359
    %552 = vmatprep.subr.mxu0 %v364
    %553 = vmatpush1.msra.mxu0 %v363
    %554 = vmatprep.subr.mxu0 %v368
    %555 = vmatpush1.msra.mxu0 %v367
    %556 = vmatprep.subr.mxu0 %v372
    %557 = vmatpush1.msra.mxu0 %v371
    %558 = vmatprep.subr.mxu0 %v376
    %559 = vmatpush1.msra.mxu0 %v375
    %560 = vmatprep.subr.mxu0 %v380
    %561 = vmatpush1.msra.mxu0 %v379
    %562 = vmatprep.subr.mxu0 %v384
    %563 = vmatpush1.msra.mxu0 %v383
    %564 = vmatprep.subr.mxu0 %v388
    %565 = vmatpush1.msra.mxu0 %v387
    %566 = vmatprep.subr.mxu0 %v392
    %567 = vmatpush1.msra.mxu0 %v391
    %568 = vmatprep.subr.mxu0 %v396
    %569 = vmatpush1.msra.mxu0 %v395
    %570 = vmatprep.subr.mxu0 %v400
    %571 = vmatpush1.msra.mxu0 %v399
    %572 = vmatprep.subr.mxu0 %v404
    %573 = vmatpush1.msra.mxu0 %v403
    %574 = vmatprep.subr.mxu0 %v408
    %575 = vmatpush1.msra.mxu0 %v407
    %576 = vmatprep.subr.mxu0 %v412
    %577 = vmatpush1.msra.mxu0 %v411
    %578 = vmatprep.subr.mxu0 %v416
    %579 = vmatpush1.msra.mxu0 %v415
    %580 = vmatprep.subr.mxu0 %v420
    %581 = vmatpush1.msra.mxu0 %v419
    %582 = vmatprep.subr.mxu0 %v424
    %583 = vmatpush1.msra.mxu0 %v423
    %584 = vmatprep.subr.mxu0 %v428
    %585 = vmatpush1.msra.mxu0 %v427
    %586 = vmatprep.mubr.f32.mxu0 %v300
    %587 = vmatmul.mubr.f32.gmra.mrb[0].mxu0 %v299
    %v588 = vpop.f32.mrb[0].mxu0
    %v589 = vadd.f32 %v442, %v588
    %v590 = vpop.f32.mrb[0].mxu0
    %v591 = vadd.f32 %v446, %v590
    %592 = vdwg.mxu0
    %v593 = vmul.f32 %v518, 0.2
    %v594 = vmul.f32 %v520, 0.2
    %v595 = vmul.f32 %v589, 0.2
    %v596 = vmul.f32 %v591, 0.2
    %v597 = vmax.f32 %v518, %v593
    %v598 = vmax.f32 %v520, %v594
    %v599 = vmax.f32 %v589, %v595
    %v600 = vmax.f32 %v591, %v596
    %v601 = vld [vmem:[#allocation9] sm:$0xff]
    %v602 = vld [vmem:[#allocation9 + $0x8] sm:$0xff]
    %v603 = vld [vmem:[#allocation9 + $0x10] sm:$0xff]
    %v604 = vld [vmem:[#allocation9 + $0x18] sm:$0xff]
    %v605 = vld [vmem:[#allocation9 + $0x20] sm:$0xff]
    %v606 = vld [vmem:[#allocation9 + $0x28] sm:$0xff]
    %v607 = vld [vmem:[#allocation9 + $0x30] sm:$0xff]
    %v608 = vld [vmem:[#allocation9 + $0x38] sm:$0xff]
    %v609 = vld [vmem:[#allocation9 + $0x40] sm:$0xff]
    %v610 = vld [vmem:[#allocation9 + $0x48] sm:$0xff]
    %v611 = vld [vmem:[#allocation9 + $0x50] sm:$0xff]
    %v612 = vld [vmem:[#allocation9 + $0x58] sm:$0xff]
    %v613 = vld [vmem:[#allocation9 + $0x60] sm:$0xff]
    %v614 = vld [vmem:[#allocation9 + $0x68] sm:$0xff]
    %v615 = vld [vmem:[#allocation9 + $0x70] sm:$0xff]
    %v616 = vld [vmem:[#allocation9 + $0x78] sm:$0xff]
    %v617 = vld [vmem:[#allocation9 + $0x80] sm:$0xff]
    %v618 = vld [vmem:[#allocation9 + $0x88] sm:$0xff]
    %v619 = vld [vmem:[#allocation9 + $0x90] sm:$0xff]
    %v620 = vld [vmem:[#allocation9 + $0x98] sm:$0xff]
    %v621 = vld [vmem:[#allocation9 + $0xa0] sm:$0xff]
    %v622 = vld [vmem:[#allocation9 + $0xa8] sm:$0xff]
    %v623 = vld [vmem:[#allocation9 + $0xb0] sm:$0xff]
    %v624 = vld [vmem:[#allocation9 + $0xb8] sm:$0xff]
    %v625 = vld [vmem:[#allocation9 + $0xc0] sm:$0xff]
    %v626 = vld [vmem:[#allocation9 + $0xc8] sm:$0xff]
    %v627 = vld [vmem:[#allocation9 + $0xd0] sm:$0xff]
    %v628 = vld [vmem:[#allocation9 + $0xd8] sm:$0xff]
    %v629 = vld [vmem:[#allocation9 + $0xe0] sm:$0xff]
    %v630 = vld [vmem:[#allocation9 + $0xe8] sm:$0xff]
    %v631 = vld [vmem:[#allocation9 + $0xf0] sm:$0xff]
    %v632 = vld [vmem:[#allocation9 + $0xf8] sm:$0xff]
    %v633 = vld [vmem:[#allocation9 + $0x100] sm:$0xff]
    %v634 = vld [vmem:[#allocation9 + $0x108] sm:$0xff]
    %v635 = vld [vmem:[#allocation9 + $0x110] sm:$0xff]
    %v636 = vld [vmem:[#allocation9 + $0x118] sm:$0xff]
    %v637 = vld [vmem:[#allocation9 + $0x120] sm:$0xff]
    %v638 = vld [vmem:[#allocation9 + $0x128] sm:$0xff]
    %v639 = vld [vmem:[#allocation9 + $0x130] sm:$0xff]
    %v640 = vld [vmem:[#allocation9 + $0x138] sm:$0xff]
    %v641 = vld [vmem:[#allocation9 + $0x140] sm:$0xff]
    %v642 = vld [vmem:[#allocation9 + $0x148] sm:$0xff]
    %v643 = vld [vmem:[#allocation9 + $0x150] sm:$0xff]
    %v644 = vld [vmem:[#allocation9 + $0x158] sm:$0xff]
    %v645 = vld [vmem:[#allocation9 + $0x160] sm:$0xff]
    %v646 = vld [vmem:[#allocation9 + $0x168] sm:$0xff]
    %v647 = vld [vmem:[#allocation9 + $0x170] sm:$0xff]
    %v648 = vld [vmem:[#allocation9 + $0x178] sm:$0xff]
    %v649 = vld [vmem:[#allocation9 + $0x180] sm:$0xff]
    %v650 = vld [vmem:[#allocation9 + $0x188] sm:$0xff]
    %v651 = vld [vmem:[#allocation9 + $0x190] sm:$0xff]
    %v652 = vld [vmem:[#allocation9 + $0x198] sm:$0xff]
    %v653 = vld [vmem:[#allocation9 + $0x1a0] sm:$0xff]
    %v654 = vld [vmem:[#allocation9 + $0x1a8] sm:$0xff]
    %v655 = vld [vmem:[#allocation9 + $0x1b0] sm:$0xff]
    %v656 = vld [vmem:[#allocation9 + $0x1b8] sm:$0xff]
    %v657 = vld [vmem:[#allocation9 + $0x1c0] sm:$0xff]
    %v658 = vld [vmem:[#allocation9 + $0x1c8] sm:$0xff]
    %v659 = vld [vmem:[#allocation9 + $0x1d0] sm:$0xff]
    %v660 = vld [vmem:[#allocation9 + $0x1d8] sm:$0xff]
    %v661 = vld [vmem:[#allocation9 + $0x1e0] sm:$0xff]
    %v662 = vld [vmem:[#allocation9 + $0x1e8] sm:$0xff]
    %v663 = vld [vmem:[#allocation9 + $0x1f0] sm:$0xff]
    %v664 = vld [vmem:[#allocation9 + $0x1f8] sm:$0xff]
    %v665 = vld [vmem:[#allocation9 + $0x200] sm:$0xff]
    %v666 = vld [vmem:[#allocation9 + $0x208] sm:$0xff]
    %v667 = vld [vmem:[#allocation9 + $0x210] sm:$0xff]
    %v668 = vld [vmem:[#allocation9 + $0x218] sm:$0xff]
    %v669 = vld [vmem:[#allocation9 + $0x220] sm:$0xff]
    %v670 = vld [vmem:[#allocation9 + $0x228] sm:$0xff]
    %v671 = vld [vmem:[#allocation9 + $0x230] sm:$0xff]
    %v672 = vld [vmem:[#allocation9 + $0x238] sm:$0xff]
    %v673 = vld [vmem:[#allocation9 + $0x240] sm:$0xff]
    %v674 = vld [vmem:[#allocation9 + $0x248] sm:$0xff]
    %v675 = vld [vmem:[#allocation9 + $0x250] sm:$0xff]
    %v676 = vld [vmem:[#allocation9 + $0x258] sm:$0xff]
    %v677 = vld [vmem:[#allocation9 + $0x260] sm:$0xff]
    %v678 = vld [vmem:[#allocation9 + $0x268] sm:$0xff]
    %v679 = vld [vmem:[#allocation9 + $0x270] sm:$0xff]
    %v680 = vld [vmem:[#allocation9 + $0x278] sm:$0xff]
    %v681 = vld [vmem:[#allocation9 + $0x280] sm:$0xff]
    %v682 = vld [vmem:[#allocation9 + $0x288] sm:$0xff]
    %v683 = vld [vmem:[#allocation9 + $0x290] sm:$0xff]
    %v684 = vld [vmem:[#allocation9 + $0x298] sm:$0xff]
    %v685 = vld [vmem:[#allocation9 + $0x2a0] sm:$0xff]
    %v686 = vld [vmem:[#allocation9 + $0x2a8] sm:$0xff]
    %v687 = vld [vmem:[#allocation9 + $0x2b0] sm:$0xff]
    %v688 = vld [vmem:[#allocation9 + $0x2b8] sm:$0xff]
    %v689 = vld [vmem:[#allocation9 + $0x2c0] sm:$0xff]
    %v690 = vld [vmem:[#allocation9 + $0x2c8] sm:$0xff]
    %v691 = vld [vmem:[#allocation9 + $0x2d0] sm:$0xff]
    %v692 = vld [vmem:[#allocation9 + $0x2d8] sm:$0xff]
    %v693 = vld [vmem:[#allocation9 + $0x2e0] sm:$0xff]
    %v694 = vld [vmem:[#allocation9 + $0x2e8] sm:$0xff]
    %v695 = vld [vmem:[#allocation9 + $0x2f0] sm:$0xff]
    %v696 = vld [vmem:[#allocation9 + $0x2f8] sm:$0xff]
    %v697 = vld [vmem:[#allocation9 + $0x300] sm:$0xff]
    %v698 = vld [vmem:[#allocation9 + $0x308] sm:$0xff]
    %v699 = vld [vmem:[#allocation9 + $0x310] sm:$0xff]
    %v700 = vld [vmem:[#allocation9 + $0x318] sm:$0xff]
    %v701 = vld [vmem:[#allocation9 + $0x320] sm:$0xff]
    %v702 = vld [vmem:[#allocation9 + $0x328] sm:$0xff]
    %v703 = vld [vmem:[#allocation9 + $0x330] sm:$0xff]
    %v704 = vld [vmem:[#allocation9 + $0x338] sm:$0xff]
    %v705 = vld [vmem:[#allocation9 + $0x340] sm:$0xff]
    %v706 = vld [vmem:[#allocation9 + $0x348] sm:$0xff]
    %v707 = vld [vmem:[#allocation9 + $0x350] sm:$0xff]
    %v708 = vld [vmem:[#allocation9 + $0x358] sm:$0xff]
    %v709 = vld [vmem:[#allocation9 + $0x360] sm:$0xff]
    %v710 = vld [vmem:[#allocation9 + $0x368] sm:$0xff]
    %v711 = vld [vmem:[#allocation9 + $0x370] sm:$0xff]
    %v712 = vld [vmem:[#allocation9 + $0x378] sm:$0xff]
    %v713 = vld [vmem:[#allocation9 + $0x380] sm:$0xff]
    %v714 = vld [vmem:[#allocation9 + $0x388] sm:$0xff]
    %v715 = vld [vmem:[#allocation9 + $0x390] sm:$0xff]
    %v716 = vld [vmem:[#allocation9 + $0x398] sm:$0xff]
    %v717 = vld [vmem:[#allocation9 + $0x3a0] sm:$0xff]
    %v718 = vld [vmem:[#allocation9 + $0x3a8] sm:$0xff]
    %v719 = vld [vmem:[#allocation9 + $0x3b0] sm:$0xff]
    %v720 = vld [vmem:[#allocation9 + $0x3b8] sm:$0xff]
    %v721 = vld [vmem:[#allocation9 + $0x3c0] sm:$0xff]
    %v722 = vld [vmem:[#allocation9 + $0x3c8] sm:$0xff]
    %v723 = vld [vmem:[#allocation9 + $0x3d0] sm:$0xff]
    %v724 = vld [vmem:[#allocation9 + $0x3d8] sm:$0xff]
    %v725 = vld [vmem:[#allocation9 + $0x3e0] sm:$0xff]
    %v726 = vld [vmem:[#allocation9 + $0x3e8] sm:$0xff]
    %v727 = vld [vmem:[#allocation9 + $0x3f0] sm:$0xff]
    %v728 = vld [vmem:[#allocation9 + $0x3f8] sm:$0xff]
    %v729 = vld [vmem:[#allocation9 + $0x400] sm:$0xff]
    %v730 = vld [vmem:[#allocation9 + $0x408] sm:$0xff]
    %v731 = vld [vmem:[#allocation9 + $0x410] sm:$0xff]
    %v732 = vld [vmem:[#allocation9 + $0x418] sm:$0xff]
    %v733 = vld [vmem:[#allocation9 + $0x420] sm:$0xff]
    %v734 = vld [vmem:[#allocation9 + $0x428] sm:$0xff]
    %v735 = vld [vmem:[#allocation9 + $0x430] sm:$0xff]
    %v736 = vld [vmem:[#allocation9 + $0x438] sm:$0xff]
    %v737 = vld [vmem:[#allocation9 + $0x440] sm:$0xff]
    %v738 = vld [vmem:[#allocation9 + $0x448] sm:$0xff]
    %v739 = vld [vmem:[#allocation9 + $0x450] sm:$0xff]
    %v740 = vld [vmem:[#allocation9 + $0x458] sm:$0xff]
    %v741 = vld [vmem:[#allocation9 + $0x460] sm:$0xff]
    %v742 = vld [vmem:[#allocation9 + $0x468] sm:$0xff]
    %v743 = vld [vmem:[#allocation9 + $0x470] sm:$0xff]
    %v744 = vld [vmem:[#allocation9 + $0x478] sm:$0xff]
    %v745 = vld [vmem:[#allocation9 + $0x480] sm:$0xff]
    %v746 = vld [vmem:[#allocation9 + $0x488] sm:$0xff]
    %v747 = vld [vmem:[#allocation9 + $0x490] sm:$0xff]
    %v748 = vld [vmem:[#allocation9 + $0x498] sm:$0xff]
    %v749 = vld [vmem:[#allocation9 + $0x4a0] sm:$0xff]
    %v750 = vld [vmem:[#allocation9 + $0x4a8] sm:$0xff]
    %v751 = vld [vmem:[#allocation9 + $0x4b0] sm:$0xff]
    %v752 = vld [vmem:[#allocation9 + $0x4b8] sm:$0xff]
    %v753 = vld [vmem:[#allocation9 + $0x4c0] sm:$0xff]
    %v754 = vld [vmem:[#allocation9 + $0x4c8] sm:$0xff]
    %v755 = vld [vmem:[#allocation9 + $0x4d0] sm:$0xff]
    %v756 = vld [vmem:[#allocation9 + $0x4d8] sm:$0xff]
    %v757 = vld [vmem:[#allocation9 + $0x4e0] sm:$0xff]
    %v758 = vld [vmem:[#allocation9 + $0x4e8] sm:$0xff]
    %v759 = vld [vmem:[#allocation9 + $0x4f0] sm:$0xff]
    %v760 = vld [vmem:[#allocation9 + $0x4f8] sm:$0xff]
    %v761 = vld [vmem:[#allocation9 + $0x500] sm:$0xff]
    %v762 = vld [vmem:[#allocation9 + $0x508] sm:$0xff]
    %v763 = vld [vmem:[#allocation9 + $0x510] sm:$0xff]
    %v764 = vld [vmem:[#allocation9 + $0x518] sm:$0xff]
    %v765 = vld [vmem:[#allocation9 + $0x520] sm:$0xff]
    %v766 = vld [vmem:[#allocation9 + $0x528] sm:$0xff]
    %v767 = vld [vmem:[#allocation9 + $0x530] sm:$0xff]
    %v768 = vld [vmem:[#allocation9 + $0x538] sm:$0xff]
    %v769 = vld [vmem:[#allocation9 + $0x540] sm:$0xff]
    %v770 = vld [vmem:[#allocation9 + $0x548] sm:$0xff]
    %v771 = vld [vmem:[#allocation9 + $0x550] sm:$0xff]
    %v772 = vld [vmem:[#allocation9 + $0x558] sm:$0xff]
    %v773 = vld [vmem:[#allocation9 + $0x560] sm:$0xff]
    %v774 = vld [vmem:[#allocation9 + $0x568] sm:$0xff]
    %v775 = vld [vmem:[#allocation9 + $0x570] sm:$0xff]
    %v776 = vld [vmem:[#allocation9 + $0x578] sm:$0xff]
    %v777 = vld [vmem:[#allocation9 + $0x580] sm:$0xff]
    %v778 = vld [vmem:[#allocation9 + $0x588] sm:$0xff]
    %v779 = vld [vmem:[#allocation9 + $0x590] sm:$0xff]
    %v780 = vld [vmem:[#allocation9 + $0x598] sm:$0xff]
    %v781 = vld [vmem:[#allocation9 + $0x5a0] sm:$0xff]
    %v782 = vld [vmem:[#allocation9 + $0x5a8] sm:$0xff]
    %v783 = vld [vmem:[#allocation9 + $0x5b0] sm:$0xff]
    %v784 = vld [vmem:[#allocation9 + $0x5b8] sm:$0xff]
    %v785 = vld [vmem:[#allocation9 + $0x5c0] sm:$0xff]
    %v786 = vld [vmem:[#allocation9 + $0x5c8] sm:$0xff]
    %v787 = vld [vmem:[#allocation9 + $0x5d0] sm:$0xff]
    %v788 = vld [vmem:[#allocation9 + $0x5d8] sm:$0xff]
    %v789 = vld [vmem:[#allocation9 + $0x5e0] sm:$0xff]
    %v790 = vld [vmem:[#allocation9 + $0x5e8] sm:$0xff]
    %v791 = vld [vmem:[#allocation9 + $0x5f0] sm:$0xff]
    %v792 = vld [vmem:[#allocation9 + $0x5f8] sm:$0xff]
    %v793 = vld [vmem:[#allocation9 + $0x600] sm:$0xff]
    %v794 = vld [vmem:[#allocation9 + $0x608] sm:$0xff]
    %v795 = vld [vmem:[#allocation9 + $0x610] sm:$0xff]
    %v796 = vld [vmem:[#allocation9 + $0x618] sm:$0xff]
    %v797 = vld [vmem:[#allocation9 + $0x620] sm:$0xff]
    %v798 = vld [vmem:[#allocation9 + $0x628] sm:$0xff]
    %v799 = vld [vmem:[#allocation9 + $0x630] sm:$0xff]
    %v800 = vld [vmem:[#allocation9 + $0x638] sm:$0xff]
    %v801 = vld [vmem:[#allocation9 + $0x640] sm:$0xff]
    %v802 = vld [vmem:[#allocation9 + $0x648] sm:$0xff]
    %v803 = vld [vmem:[#allocation9 + $0x650] sm:$0xff]
    %v804 = vld [vmem:[#allocation9 + $0x658] sm:$0xff]
    %v805 = vld [vmem:[#allocation9 + $0x660] sm:$0xff]
    %v806 = vld [vmem:[#allocation9 + $0x668] sm:$0xff]
    %v807 = vld [vmem:[#allocation9 + $0x670] sm:$0xff]
    %v808 = vld [vmem:[#allocation9 + $0x678] sm:$0xff]
    %v809 = vld [vmem:[#allocation9 + $0x680] sm:$0xff]
    %v810 = vld [vmem:[#allocation9 + $0x688] sm:$0xff]
    %v811 = vld [vmem:[#allocation9 + $0x690] sm:$0xff]
    %v812 = vld [vmem:[#allocation9 + $0x698] sm:$0xff]
    %v813 = vld [vmem:[#allocation9 + $0x6a0] sm:$0xff]
    %v814 = vld [vmem:[#allocation9 + $0x6a8] sm:$0xff]
    %v815 = vld [vmem:[#allocation9 + $0x6b0] sm:$0xff]
    %v816 = vld [vmem:[#allocation9 + $0x6b8] sm:$0xff]
    %v817 = vld [vmem:[#allocation9 + $0x6c0] sm:$0xff]
    %v818 = vld [vmem:[#allocation9 + $0x6c8] sm:$0xff]
    %v819 = vld [vmem:[#allocation9 + $0x6d0] sm:$0xff]
    %v820 = vld [vmem:[#allocation9 + $0x6d8] sm:$0xff]
    %v821 = vld [vmem:[#allocation9 + $0x6e0] sm:$0xff]
    %v822 = vld [vmem:[#allocation9 + $0x6e8] sm:$0xff]
    %v823 = vld [vmem:[#allocation9 + $0x6f0] sm:$0xff]
    %v824 = vld [vmem:[#allocation9 + $0x6f8] sm:$0xff]
    %v825 = vld [vmem:[#allocation9 + $0x700] sm:$0xff]
    %v826 = vld [vmem:[#allocation9 + $0x708] sm:$0xff]
    %v827 = vld [vmem:[#allocation9 + $0x710] sm:$0xff]
    %v828 = vld [vmem:[#allocation9 + $0x718] sm:$0xff]
    %v829 = vld [vmem:[#allocation9 + $0x720] sm:$0xff]
    %v830 = vld [vmem:[#allocation9 + $0x728] sm:$0xff]
    %v831 = vld [vmem:[#allocation9 + $0x730] sm:$0xff]
    %v832 = vld [vmem:[#allocation9 + $0x738] sm:$0xff]
    %v833 = vld [vmem:[#allocation9 + $0x740] sm:$0xff]
    %v834 = vld [vmem:[#allocation9 + $0x748] sm:$0xff]
    %v835 = vld [vmem:[#allocation9 + $0x750] sm:$0xff]
    %v836 = vld [vmem:[#allocation9 + $0x758] sm:$0xff]
    %v837 = vld [vmem:[#allocation9 + $0x760] sm:$0xff]
    %v838 = vld [vmem:[#allocation9 + $0x768] sm:$0xff]
    %v839 = vld [vmem:[#allocation9 + $0x770] sm:$0xff]
    %v840 = vld [vmem:[#allocation9 + $0x778] sm:$0xff]
    %v841 = vld [vmem:[#allocation9 + $0x780] sm:$0xff]
    %v842 = vld [vmem:[#allocation9 + $0x788] sm:$0xff]
    %v843 = vld [vmem:[#allocation9 + $0x790] sm:$0xff]
    %v844 = vld [vmem:[#allocation9 + $0x798] sm:$0xff]
    %v845 = vld [vmem:[#allocation9 + $0x7a0] sm:$0xff]
    %v846 = vld [vmem:[#allocation9 + $0x7a8] sm:$0xff]
    %v847 = vld [vmem:[#allocation9 + $0x7b0] sm:$0xff]
    %v848 = vld [vmem:[#allocation9 + $0x7b8] sm:$0xff]
    %v849 = vld [vmem:[#allocation9 + $0x7c0] sm:$0xff]
    %v850 = vld [vmem:[#allocation9 + $0x7c8] sm:$0xff]
    %v851 = vld [vmem:[#allocation9 + $0x7d0] sm:$0xff]
    %v852 = vld [vmem:[#allocation9 + $0x7d8] sm:$0xff]
    %v853 = vld [vmem:[#allocation9 + $0x7e0] sm:$0xff]
    %v854 = vld [vmem:[#allocation9 + $0x7e8] sm:$0xff]
    %v855 = vld [vmem:[#allocation9 + $0x7f0] sm:$0xff]
    %v856 = vld [vmem:[#allocation9 + $0x7f8] sm:$0xff]
    %v857 = vld [vmem:[#allocation9 + $0x800] sm:$0xff]
    %v858 = vld [vmem:[#allocation9 + $0x808] sm:$0xff]
    %v859 = vld [vmem:[#allocation9 + $0x810] sm:$0xff]
    %v860 = vld [vmem:[#allocation9 + $0x818] sm:$0xff]
    %v861 = vld [vmem:[#allocation9 + $0x820] sm:$0xff]
    %v862 = vld [vmem:[#allocation9 + $0x828] sm:$0xff]
    %v863 = vld [vmem:[#allocation9 + $0x830] sm:$0xff]
    %v864 = vld [vmem:[#allocation9 + $0x838] sm:$0xff]
    %v865 = vld [vmem:[#allocation9 + $0x840] sm:$0xff]
    %v866 = vld [vmem:[#allocation9 + $0x848] sm:$0xff]
    %v867 = vld [vmem:[#allocation9 + $0x850] sm:$0xff]
    %v868 = vld [vmem:[#allocation9 + $0x858] sm:$0xff]
    %v869 = vld [vmem:[#allocation9 + $0x860] sm:$0xff]
    %v870 = vld [vmem:[#allocation9 + $0x868] sm:$0xff]
    %v871 = vld [vmem:[#allocation9 + $0x870] sm:$0xff]
    %v872 = vld [vmem:[#allocation9 + $0x878] sm:$0xff]
    %v873 = vld [vmem:[#allocation9 + $0x880] sm:$0xff]
    %v874 = vld [vmem:[#allocation9 + $0x888] sm:$0xff]
    %v875 = vld [vmem:[#allocation9 + $0x890] sm:$0xff]
    %v876 = vld [vmem:[#allocation9 + $0x898] sm:$0xff]
    %v877 = vld [vmem:[#allocation9 + $0x8a0] sm:$0xff]
    %v878 = vld [vmem:[#allocation9 + $0x8a8] sm:$0xff]
    %v879 = vld [vmem:[#allocation9 + $0x8b0] sm:$0xff]
    %v880 = vld [vmem:[#allocation9 + $0x8b8] sm:$0xff]
    %v881 = vld [vmem:[#allocation9 + $0x8c0] sm:$0xff]
    %v882 = vld [vmem:[#allocation9 + $0x8c8] sm:$0xff]
    %v883 = vld [vmem:[#allocation9 + $0x8d0] sm:$0xff]
    %v884 = vld [vmem:[#allocation9 + $0x8d8] sm:$0xff]
    %v885 = vld [vmem:[#allocation9 + $0x8e0] sm:$0xff]
    %v886 = vld [vmem:[#allocation9 + $0x8e8] sm:$0xff]
    %v887 = vld [vmem:[#allocation9 + $0x8f0] sm:$0xff]
    %v888 = vld [vmem:[#allocation9 + $0x8f8] sm:$0xff]
    %v889 = vld [vmem:[#allocation9 + $0x900] sm:$0xff]
    %v890 = vld [vmem:[#allocation9 + $0x908] sm:$0xff]
    %v891 = vld [vmem:[#allocation9 + $0x910] sm:$0xff]
    %v892 = vld [vmem:[#allocation9 + $0x918] sm:$0xff]
    %v893 = vld [vmem:[#allocation9 + $0x920] sm:$0xff]
    %v894 = vld [vmem:[#allocation9 + $0x928] sm:$0xff]
    %v895 = vld [vmem:[#allocation9 + $0x930] sm:$0xff]
    %v896 = vld [vmem:[#allocation9 + $0x938] sm:$0xff]
    %v897 = vld [vmem:[#allocation9 + $0x940] sm:$0xff]
    %v898 = vld [vmem:[#allocation9 + $0x948] sm:$0xff]
    %v899 = vld [vmem:[#allocation9 + $0x950] sm:$0xff]
    %v900 = vld [vmem:[#allocation9 + $0x958] sm:$0xff]
    %v901 = vld [vmem:[#allocation9 + $0x960] sm:$0xff]
    %v902 = vld [vmem:[#allocation9 + $0x968] sm:$0xff]
    %v903 = vld [vmem:[#allocation9 + $0x970] sm:$0xff]
    %v904 = vld [vmem:[#allocation9 + $0x978] sm:$0xff]
    %v905 = vld [vmem:[#allocation9 + $0x980] sm:$0xff]
    %v906 = vld [vmem:[#allocation9 + $0x988] sm:$0xff]
    %v907 = vld [vmem:[#allocation9 + $0x990] sm:$0xff]
    %v908 = vld [vmem:[#allocation9 + $0x998] sm:$0xff]
    %v909 = vld [vmem:[#allocation9 + $0x9a0] sm:$0xff]
    %v910 = vld [vmem:[#allocation9 + $0x9a8] sm:$0xff]
    %v911 = vld [vmem:[#allocation9 + $0x9b0] sm:$0xff]
    %v912 = vld [vmem:[#allocation9 + $0x9b8] sm:$0xff]
    %v913 = vld [vmem:[#allocation9 + $0x9c0] sm:$0xff]
    %v914 = vld [vmem:[#allocation9 + $0x9c8] sm:$0xff]
    %v915 = vld [vmem:[#allocation9 + $0x9d0] sm:$0xff]
    %v916 = vld [vmem:[#allocation9 + $0x9d8] sm:$0xff]
    %v917 = vld [vmem:[#allocation9 + $0x9e0] sm:$0xff]
    %v918 = vld [vmem:[#allocation9 + $0x9e8] sm:$0xff]
    %v919 = vld [vmem:[#allocation9 + $0x9f0] sm:$0xff]
    %v920 = vld [vmem:[#allocation9 + $0x9f8] sm:$0xff]
    %v921 = vld [vmem:[#allocation9 + $0xa00] sm:$0xff]
    %v922 = vld [vmem:[#allocation9 + $0xa08] sm:$0xff]
    %v923 = vld [vmem:[#allocation9 + $0xa10] sm:$0xff]
    %v924 = vld [vmem:[#allocation9 + $0xa18] sm:$0xff]
    %v925 = vld [vmem:[#allocation9 + $0xa20] sm:$0xff]
    %v926 = vld [vmem:[#allocation9 + $0xa28] sm:$0xff]
    %v927 = vld [vmem:[#allocation9 + $0xa30] sm:$0xff]
    %v928 = vld [vmem:[#allocation9 + $0xa38] sm:$0xff]
    %v929 = vld [vmem:[#allocation9 + $0xa40] sm:$0xff]
    %v930 = vld [vmem:[#allocation9 + $0xa48] sm:$0xff]
    %v931 = vld [vmem:[#allocation9 + $0xa50] sm:$0xff]
    %v932 = vld [vmem:[#allocation9 + $0xa58] sm:$0xff]
    %v933 = vld [vmem:[#allocation9 + $0xa60] sm:$0xff]
    %v934 = vld [vmem:[#allocation9 + $0xa68] sm:$0xff]
    %v935 = vld [vmem:[#allocation9 + $0xa70] sm:$0xff]
    %v936 = vld [vmem:[#allocation9 + $0xa78] sm:$0xff]
    %v937 = vld [vmem:[#allocation9 + $0xa80] sm:$0xff]
    %v938 = vld [vmem:[#allocation9 + $0xa88] sm:$0xff]
    %v939 = vld [vmem:[#allocation9 + $0xa90] sm:$0xff]
    %v940 = vld [vmem:[#allocation9 + $0xa98] sm:$0xff]
    %v941 = vld [vmem:[#allocation9 + $0xaa0] sm:$0xff]
    %v942 = vld [vmem:[#allocation9 + $0xaa8] sm:$0xff]
    %v943 = vld [vmem:[#allocation9 + $0xab0] sm:$0xff]
    %v944 = vld [vmem:[#allocation9 + $0xab8] sm:$0xff]
    %v945 = vld [vmem:[#allocation9 + $0xac0] sm:$0xff]
    %v946 = vld [vmem:[#allocation9 + $0xac8] sm:$0xff]
    %v947 = vld [vmem:[#allocation9 + $0xad0] sm:$0xff]
    %v948 = vld [vmem:[#allocation9 + $0xad8] sm:$0xff]
    %v949 = vld [vmem:[#allocation9 + $0xae0] sm:$0xff]
    %v950 = vld [vmem:[#allocation9 + $0xae8] sm:$0xff]
    %v951 = vld [vmem:[#allocation9 + $0xaf0] sm:$0xff]
    %v952 = vld [vmem:[#allocation9 + $0xaf8] sm:$0xff]
    %v953 = vld [vmem:[#allocation9 + $0xb00] sm:$0xff]
    %v954 = vld [vmem:[#allocation9 + $0xb08] sm:$0xff]
    %v955 = vld [vmem:[#allocation9 + $0xb10] sm:$0xff]
    %v956 = vld [vmem:[#allocation9 + $0xb18] sm:$0xff]
    %v957 = vld [vmem:[#allocation9 + $0xb20] sm:$0xff]
    %v958 = vld [vmem:[#allocation9 + $0xb28] sm:$0xff]
    %v959 = vld [vmem:[#allocation9 + $0xb30] sm:$0xff]
    %v960 = vld [vmem:[#allocation9 + $0xb38] sm:$0xff]
    %v961 = vld [vmem:[#allocation9 + $0xb40] sm:$0xff]
    %v962 = vld [vmem:[#allocation9 + $0xb48] sm:$0xff]
    %v963 = vld [vmem:[#allocation9 + $0xb50] sm:$0xff]
    %v964 = vld [vmem:[#allocation9 + $0xb58] sm:$0xff]
    %v965 = vld [vmem:[#allocation9 + $0xb60] sm:$0xff]
    %v966 = vld [vmem:[#allocation9 + $0xb68] sm:$0xff]
    %v967 = vld [vmem:[#allocation9 + $0xb70] sm:$0xff]
    %v968 = vld [vmem:[#allocation9 + $0xb78] sm:$0xff]
    %v969 = vld [vmem:[#allocation9 + $0xb80] sm:$0xff]
    %v970 = vld [vmem:[#allocation9 + $0xb88] sm:$0xff]
    %v971 = vld [vmem:[#allocation9 + $0xb90] sm:$0xff]
    %v972 = vld [vmem:[#allocation9 + $0xb98] sm:$0xff]
    %v973 = vld [vmem:[#allocation9 + $0xba0] sm:$0xff]
    %v974 = vld [vmem:[#allocation9 + $0xba8] sm:$0xff]
    %v975 = vld [vmem:[#allocation9 + $0xbb0] sm:$0xff]
    %v976 = vld [vmem:[#allocation9 + $0xbb8] sm:$0xff]
    %v977 = vld [vmem:[#allocation9 + $0xbc0] sm:$0xff]
    %v978 = vld [vmem:[#allocation9 + $0xbc8] sm:$0xff]
    %v979 = vld [vmem:[#allocation9 + $0xbd0] sm:$0xff]
    %v980 = vld [vmem:[#allocation9 + $0xbd8] sm:$0xff]
    %v981 = vld [vmem:[#allocation9 + $0xbe0] sm:$0xff]
    %v982 = vld [vmem:[#allocation9 + $0xbe8] sm:$0xff]
    %v983 = vld [vmem:[#allocation9 + $0xbf0] sm:$0xff]
    %v984 = vld [vmem:[#allocation9 + $0xbf8] sm:$0xff]
    %v985 = vld [vmem:[#allocation9 + $0xc00] sm:$0xff]
    %v986 = vld [vmem:[#allocation9 + $0xc08] sm:$0xff]
    %v987 = vld [vmem:[#allocation9 + $0xc10] sm:$0xff]
    %v988 = vld [vmem:[#allocation9 + $0xc18] sm:$0xff]
    %v989 = vld [vmem:[#allocation9 + $0xc20] sm:$0xff]
    %v990 = vld [vmem:[#allocation9 + $0xc28] sm:$0xff]
    %v991 = vld [vmem:[#allocation9 + $0xc30] sm:$0xff]
    %v992 = vld [vmem:[#allocation9 + $0xc38] sm:$0xff]
    %v993 = vld [vmem:[#allocation9 + $0xc40] sm:$0xff]
    %v994 = vld [vmem:[#allocation9 + $0xc48] sm:$0xff]
    %v995 = vld [vmem:[#allocation9 + $0xc50] sm:$0xff]
    %v996 = vld [vmem:[#allocation9 + $0xc58] sm:$0xff]
    %v997 = vld [vmem:[#allocation9 + $0xc60] sm:$0xff]
    %v998 = vld [vmem:[#allocation9 + $0xc68] sm:$0xff]
    %v999 = vld [vmem:[#allocation9 + $0xc70] sm:$0xff]
    %v1000 = vld [vmem:[#allocation9 + $0xc78] sm:$0xff]
    %v1001 = vld [vmem:[#allocation9 + $0xc80] sm:$0xff]
    %v1002 = vld [vmem:[#allocation9 + $0xc88] sm:$0xff]
    %v1003 = vld [vmem:[#allocation9 + $0xc90] sm:$0xff]
    %v1004 = vld [vmem:[#allocation9 + $0xc98] sm:$0xff]
    %v1005 = vld [vmem:[#allocation9 + $0xca0] sm:$0xff]
    %v1006 = vld [vmem:[#allocation9 + $0xca8] sm:$0xff]
    %v1007 = vld [vmem:[#allocation9 + $0xcb0] sm:$0xff]
    %v1008 = vld [vmem:[#allocation9 + $0xcb8] sm:$0xff]
    %v1009 = vld [vmem:[#allocation9 + $0xcc0] sm:$0xff]
    %v1010 = vld [vmem:[#allocation9 + $0xcc8] sm:$0xff]
    %v1011 = vld [vmem:[#allocation9 + $0xcd0] sm:$0xff]
    %v1012 = vld [vmem:[#allocation9 + $0xcd8] sm:$0xff]
    %v1013 = vld [vmem:[#allocation9 + $0xce0] sm:$0xff]
    %v1014 = vld [vmem:[#allocation9 + $0xce8] sm:$0xff]
    %v1015 = vld [vmem:[#allocation9 + $0xcf0] sm:$0xff]
    %v1016 = vld [vmem:[#allocation9 + $0xcf8] sm:$0xff]
    %v1017 = vld [vmem:[#allocation9 + $0xd00] sm:$0xff]
    %v1018 = vld [vmem:[#allocation9 + $0xd08] sm:$0xff]
    %v1019 = vld [vmem:[#allocation9 + $0xd10] sm:$0xff]
    %v1020 = vld [vmem:[#allocation9 + $0xd18] sm:$0xff]
    %v1021 = vld [vmem:[#allocation9 + $0xd20] sm:$0xff]
    %v1022 = vld [vmem:[#allocation9 + $0xd28] sm:$0xff]
    %v1023 = vld [vmem:[#allocation9 + $0xd30] sm:$0xff]
    %v1024 = vld [vmem:[#allocation9 + $0xd38] sm:$0xff]
    %v1025 = vld [vmem:[#allocation9 + $0xd40] sm:$0xff]
    %v1026 = vld [vmem:[#allocation9 + $0xd48] sm:$0xff]
    %v1027 = vld [vmem:[#allocation9 + $0xd50] sm:$0xff]
    %v1028 = vld [vmem:[#allocation9 + $0xd58] sm:$0xff]
    %v1029 = vld [vmem:[#allocation9 + $0xd60] sm:$0xff]
    %v1030 = vld [vmem:[#allocation9 + $0xd68] sm:$0xff]
    %v1031 = vld [vmem:[#allocation9 + $0xd70] sm:$0xff]
    %v1032 = vld [vmem:[#allocation9 + $0xd78] sm:$0xff]
    %v1033 = vld [vmem:[#allocation9 + $0xd80] sm:$0xff]
    %v1034 = vld [vmem:[#allocation9 + $0xd88] sm:$0xff]
    %v1035 = vld [vmem:[#allocation9 + $0xd90] sm:$0xff]
    %v1036 = vld [vmem:[#allocation9 + $0xd98] sm:$0xff]
    %v1037 = vld [vmem:[#allocation9 + $0xda0] sm:$0xff]
    %v1038 = vld [vmem:[#allocation9 + $0xda8] sm:$0xff]
    %v1039 = vld [vmem:[#allocation9 + $0xdb0] sm:$0xff]
    %v1040 = vld [vmem:[#allocation9 + $0xdb8] sm:$0xff]
    %v1041 = vld [vmem:[#allocation9 + $0xdc0] sm:$0xff]
    %v1042 = vld [vmem:[#allocation9 + $0xdc8] sm:$0xff]
    %v1043 = vld [vmem:[#allocation9 + $0xdd0] sm:$0xff]
    %v1044 = vld [vmem:[#allocation9 + $0xdd8] sm:$0xff]
    %v1045 = vld [vmem:[#allocation9 + $0xde0] sm:$0xff]
    %v1046 = vld [vmem:[#allocation9 + $0xde8] sm:$0xff]
    %v1047 = vld [vmem:[#allocation9 + $0xdf0] sm:$0xff]
    %v1048 = vld [vmem:[#allocation9 + $0xdf8] sm:$0xff]
    %v1049 = vld [vmem:[#allocation9 + $0xe00] sm:$0xff]
    %v1050 = vld [vmem:[#allocation9 + $0xe08] sm:$0xff]
    %v1051 = vld [vmem:[#allocation9 + $0xe10] sm:$0xff]
    %v1052 = vld [vmem:[#allocation9 + $0xe18] sm:$0xff]
    %v1053 = vld [vmem:[#allocation9 + $0xe20] sm:$0xff]
    %v1054 = vld [vmem:[#allocation9 + $0xe28] sm:$0xff]
    %v1055 = vld [vmem:[#allocation9 + $0xe30] sm:$0xff]
    %v1056 = vld [vmem:[#allocation9 + $0xe38] sm:$0xff]
    %v1057 = vld [vmem:[#allocation9 + $0xe40] sm:$0xff]
    %v1058 = vld [vmem:[#allocation9 + $0xe48] sm:$0xff]
    %v1059 = vld [vmem:[#allocation9 + $0xe50] sm:$0xff]
    %v1060 = vld [vmem:[#allocation9 + $0xe58] sm:$0xff]
    %v1061 = vld [vmem:[#allocation9 + $0xe60] sm:$0xff]
    %v1062 = vld [vmem:[#allocation9 + $0xe68] sm:$0xff]
    %v1063 = vld [vmem:[#allocation9 + $0xe70] sm:$0xff]
    %v1064 = vld [vmem:[#allocation9 + $0xe78] sm:$0xff]
    %v1065 = vld [vmem:[#allocation9 + $0xe80] sm:$0xff]
    %v1066 = vld [vmem:[#allocation9 + $0xe88] sm:$0xff]
    %v1067 = vld [vmem:[#allocation9 + $0xe90] sm:$0xff]
    %v1068 = vld [vmem:[#allocation9 + $0xe98] sm:$0xff]
    %v1069 = vld [vmem:[#allocation9 + $0xea0] sm:$0xff]
    %v1070 = vld [vmem:[#allocation9 + $0xea8] sm:$0xff]
    %v1071 = vld [vmem:[#allocation9 + $0xeb0] sm:$0xff]
    %v1072 = vld [vmem:[#allocation9 + $0xeb8] sm:$0xff]
    %v1073 = vld [vmem:[#allocation9 + $0xec0] sm:$0xff]
    %v1074 = vld [vmem:[#allocation9 + $0xec8] sm:$0xff]
    %v1075 = vld [vmem:[#allocation9 + $0xed0] sm:$0xff]
    %v1076 = vld [vmem:[#allocation9 + $0xed8] sm:$0xff]
    %v1077 = vld [vmem:[#allocation9 + $0xee0] sm:$0xff]
    %v1078 = vld [vmem:[#allocation9 + $0xee8] sm:$0xff]
    %v1079 = vld [vmem:[#allocation9 + $0xef0] sm:$0xff]
    %v1080 = vld [vmem:[#allocation9 + $0xef8] sm:$0xff]
    %v1081 = vld [vmem:[#allocation9 + $0xf00] sm:$0xff]
    %v1082 = vld [vmem:[#allocation9 + $0xf08] sm:$0xff]
    %v1083 = vld [vmem:[#allocation9 + $0xf10] sm:$0xff]
    %v1084 = vld [vmem:[#allocation9 + $0xf18] sm:$0xff]
    %v1085 = vld [vmem:[#allocation9 + $0xf20] sm:$0xff]
    %v1086 = vld [vmem:[#allocation9 + $0xf28] sm:$0xff]
    %v1087 = vld [vmem:[#allocation9 + $0xf30] sm:$0xff]
    %v1088 = vld [vmem:[#allocation9 + $0xf38] sm:$0xff]
    %v1089 = vld [vmem:[#allocation9 + $0xf40] sm:$0xff]
    %v1090 = vld [vmem:[#allocation9 + $0xf48] sm:$0xff]
    %v1091 = vld [vmem:[#allocation9 + $0xf50] sm:$0xff]
    %v1092 = vld [vmem:[#allocation9 + $0xf58] sm:$0xff]
    %v1093 = vld [vmem:[#allocation9 + $0xf60] sm:$0xff]
    %v1094 = vld [vmem:[#allocation9 + $0xf68] sm:$0xff]
    %v1095 = vld [vmem:[#allocation9 + $0xf70] sm:$0xff]
    %v1096 = vld [vmem:[#allocation9 + $0xf78] sm:$0xff]
    %v1097 = vld [vmem:[#allocation9 + $0xf80] sm:$0xff]
    %v1098 = vld [vmem:[#allocation9 + $0xf88] sm:$0xff]
    %v1099 = vld [vmem:[#allocation9 + $0xf90] sm:$0xff]
    %v1100 = vld [vmem:[#allocation9 + $0xf98] sm:$0xff]
    %v1101 = vld [vmem:[#allocation9 + $0xfa0] sm:$0xff]
    %v1102 = vld [vmem:[#allocation9 + $0xfa8] sm:$0xff]
    %v1103 = vld [vmem:[#allocation9 + $0xfb0] sm:$0xff]
    %v1104 = vld [vmem:[#allocation9 + $0xfb8] sm:$0xff]
    %v1105 = vld [vmem:[#allocation9 + $0xfc0] sm:$0xff]
    %v1106 = vld [vmem:[#allocation9 + $0xfc8] sm:$0xff]
    %v1107 = vld [vmem:[#allocation9 + $0xfd0] sm:$0xff]
    %v1108 = vld [vmem:[#allocation9 + $0xfd8] sm:$0xff]
    %v1109 = vld [vmem:[#allocation9 + $0xfe0] sm:$0xff]
    %v1110 = vld [vmem:[#allocation9 + $0xfe8] sm:$0xff]
    %v1111 = vld [vmem:[#allocation9 + $0xff0] sm:$0xff]
    %v1112 = vld [vmem:[#allocation9 + $0xff8] sm:$0xff]
    %v1113 = vld [vmem:[#allocation10] sm:$0xff]
    %v1115 = vlaneseq
    %v1116 = vshrl.u32 %v1115, 7
    %v1117 = vsub.s32 0, %v1116
    %v1118 = vrot.slane %v1113, %v1117
    %v1119 = vlaneseq
    %v1120 = vshrl.u32 %v1119, 7
    %v1121 = vsub.s32 1, %v1120
    %v1122 = vrot.slane %v1113, %v1121
    %v1123 = vlaneseq
    %v1124 = vshrl.u32 %v1123, 7
    %v1125 = vsub.s32 2, %v1124
    %v1126 = vrot.slane %v1113, %v1125
    %v1127 = vlaneseq
    %v1128 = vshrl.u32 %v1127, 7
    %v1129 = vsub.s32 3, %v1128
    %v1130 = vrot.slane %v1113, %v1129
    %v1131 = vlaneseq
    %v1132 = vshrl.u32 %v1131, 7
    %v1133 = vsub.s32 4, %v1132
    %v1134 = vrot.slane %v1113, %v1133
    %v1135 = vlaneseq
    %v1136 = vshrl.u32 %v1135, 7
    %v1137 = vsub.s32 5, %v1136
    %v1138 = vrot.slane %v1113, %v1137
    %v1139 = vlaneseq
    %v1140 = vshrl.u32 %v1139, 7
    %v1141 = vsub.s32 6, %v1140
    %v1142 = vrot.slane %v1113, %v1141
    %v1143 = vlaneseq
    %v1144 = vshrl.u32 %v1143, 7
    %v1145 = vsub.s32 7, %v1144
    %v1146 = vrot.slane %v1113, %v1145
    %1155 = vmatprep.subr.mxu0 %v602
    %1156 = vmatpush1.msra.mxu0 %v601
    %1157 = vmatprep.subr.mxu0 %v610
    %1158 = vmatpush1.msra.mxu0 %v609
    %1159 = vmatprep.subr.mxu0 %v618
    %1160 = vmatpush1.msra.mxu0 %v617
    %1161 = vmatprep.subr.mxu0 %v626
    %1162 = vmatpush1.msra.mxu0 %v625
    %1163 = vmatprep.subr.mxu0 %v634
    %1164 = vmatpush1.msra.mxu0 %v633
    %1165 = vmatprep.subr.mxu0 %v642
    %1166 = vmatpush1.msra.mxu0 %v641
    %1167 = vmatprep.subr.mxu0 %v650
    %1168 = vmatpush1.msra.mxu0 %v649
    %1169 = vmatprep.subr.mxu0 %v658
    %1170 = vmatpush1.msra.mxu0 %v657
    %1171 = vmatprep.subr.mxu0 %v666
    %1172 = vmatpush1.msra.mxu0 %v665
    %1173 = vmatprep.subr.mxu0 %v674
    %1174 = vmatpush1.msra.mxu0 %v673
    %1175 = vmatprep.subr.mxu0 %v682
    %1176 = vmatpush1.msra.mxu0 %v681
    %1177 = vmatprep.subr.mxu0 %v690
    %1178 = vmatpush1.msra.mxu0 %v689
    %1179 = vmatprep.subr.mxu0 %v698
    %1180 = vmatpush1.msra.mxu0 %v697
    %1181 = vmatprep.subr.mxu0 %v706
    %1182 = vmatpush1.msra.mxu0 %v705
    %1183 = vmatprep.subr.mxu0 %v714
    %1184 = vmatpush1.msra.mxu0 %v713
    %1185 = vmatprep.subr.mxu0 %v722
    %1186 = vmatpush1.msra.mxu0 %v721
    %1187 = vmatprep.subr.mxu0 %v730
    %1188 = vmatpush1.msra.mxu0 %v729
    %1189 = vmatprep.subr.mxu0 %v738
    %1190 = vmatpush1.msra.mxu0 %v737
    %1191 = vmatprep.subr.mxu0 %v746
    %1192 = vmatpush1.msra.mxu0 %v745
    %1193 = vmatprep.subr.mxu0 %v754
    %1194 = vmatpush1.msra.mxu0 %v753
    %1195 = vmatprep.subr.mxu0 %v762
    %1196 = vmatpush1.msra.mxu0 %v761
    %1197 = vmatprep.subr.mxu0 %v770
    %1198 = vmatpush1.msra.mxu0 %v769
    %1199 = vmatprep.subr.mxu0 %v778
    %1200 = vmatpush1.msra.mxu0 %v777
    %1201 = vmatprep.subr.mxu0 %v786
    %1202 = vmatpush1.msra.mxu0 %v785
    %1203 = vmatprep.subr.mxu0 %v794
    %1204 = vmatpush1.msra.mxu0 %v793
    %1205 = vmatprep.subr.mxu0 %v802
    %1206 = vmatpush1.msra.mxu0 %v801
    %1207 = vmatprep.subr.mxu0 %v810
    %1208 = vmatpush1.msra.mxu0 %v809
    %1209 = vmatprep.subr.mxu0 %v818
    %1210 = vmatpush1.msra.mxu0 %v817
    %1211 = vmatprep.subr.mxu0 %v826
    %1212 = vmatpush1.msra.mxu0 %v825
    %1213 = vmatprep.subr.mxu0 %v834
    %1214 = vmatpush1.msra.mxu0 %v833
    %1215 = vmatprep.subr.mxu0 %v842
    %1216 = vmatpush1.msra.mxu0 %v841
    %1217 = vmatprep.subr.mxu0 %v850
    %1218 = vmatpush1.msra.mxu0 %v849
    %1219 = vmatprep.mubr.f32.mxu0 %v598
    %1220 = vmatmul.mubr.f32.gmra.mrb[0].mxu0 %v597
    %v1221 = vpop.f32.mrb[0].mxu0
    %v1222 = vadd.f32 %v1118, %v1221
    %v1223 = vpop.f32.mrb[0].mxu0
    %v1224 = vadd.f32 %v1122, %v1223
    %1225 = vdwg.mxu0
    %1226 = vmatprep.subr.mxu0 %v858
    %1227 = vmatpush1.msra.mxu0 %v857
    %1228 = vmatprep.subr.mxu0 %v866
    %1229 = vmatpush1.msra.mxu0 %v865
    %1230 = vmatprep.subr.mxu0 %v874
    %1231 = vmatpush1.msra.mxu0 %v873
    %1232 = vmatprep.subr.mxu0 %v882
    %1233 = vmatpush1.msra.mxu0 %v881
    %1234 = vmatprep.subr.mxu0 %v890
    %1235 = vmatpush1.msra.mxu0 %v889
    %1236 = vmatprep.subr.mxu0 %v898
    %1237 = vmatpush1.msra.mxu0 %v897
    %1238 = vmatprep.subr.mxu0 %v906
    %1239 = vmatpush1.msra.mxu0 %v905
    %1240 = vmatprep.subr.mxu0 %v914
    %1241 = vmatpush1.msra.mxu0 %v913
    %1242 = vmatprep.subr.mxu0 %v922
    %1243 = vmatpush1.msra.mxu0 %v921
    %1244 = vmatprep.subr.mxu0 %v930
    %1245 = vmatpush1.msra.mxu0 %v929
    %1246 = vmatprep.subr.mxu0 %v938
    %1247 = vmatpush1.msra.mxu0 %v937
    %1248 = vmatprep.subr.mxu0 %v946
    %1249 = vmatpush1.msra.mxu0 %v945
    %1250 = vmatprep.subr.mxu0 %v954
    %1251 = vmatpush1.msra.mxu0 %v953
    %1252 = vmatprep.subr.mxu0 %v962
    %1253 = vmatpush1.msra.mxu0 %v961
    %1254 = vmatprep.subr.mxu0 %v970
    %1255 = vmatpush1.msra.mxu0 %v969
    %1256 = vmatprep.subr.mxu0 %v978
    %1257 = vmatpush1.msra.mxu0 %v977
    %1258 = vmatprep.subr.mxu0 %v986
    %1259 = vmatpush1.msra.mxu0 %v985
    %1260 = vmatprep.subr.mxu0 %v994
    %1261 = vmatpush1.msra.mxu0 %v993
    %1262 = vmatprep.subr.mxu0 %v1002
    %1263 = vmatpush1.msra.mxu0 %v1001
    %1264 = vmatprep.subr.mxu0 %v1010
    %1265 = vmatpush1.msra.mxu0 %v1009
    %1266 = vmatprep.subr.mxu0 %v1018
    %1267 = vmatpush1.msra.mxu0 %v1017
    %1268 = vmatprep.subr.mxu0 %v1026
    %1269 = vmatpush1.msra.mxu0 %v1025
    %1270 = vmatprep.subr.mxu0 %v1034
    %1271 = vmatpush1.msra.mxu0 %v1033
    %1272 = vmatprep.subr.mxu0 %v1042
    %1273 = vmatpush1.msra.mxu0 %v1041
    %1274 = vmatprep.subr.mxu0 %v1050
    %1275 = vmatpush1.msra.mxu0 %v1049
    %1276 = vmatprep.subr.mxu0 %v1058
    %1277 = vmatpush1.msra.mxu0 %v1057
    %1278 = vmatprep.subr.mxu0 %v1066
    %1279 = vmatpush1.msra.mxu0 %v1065
    %1280 = vmatprep.subr.mxu0 %v1074
    %1281 = vmatpush1.msra.mxu0 %v1073
    %1282 = vmatprep.subr.mxu0 %v1082
    %1283 = vmatpush1.msra.mxu0 %v1081
    %1284 = vmatprep.subr.mxu0 %v1090
    %1285 = vmatpush1.msra.mxu0 %v1089
    %1286 = vmatprep.subr.mxu0 %v1098
    %1287 = vmatpush1.msra.mxu0 %v1097
    %1288 = vmatprep.subr.mxu0 %v1106
    %1289 = vmatpush1.msra.mxu0 %v1105
    %1290 = vmatprep.mubr.f32.mxu0 %v600
    %1291 = vmatmul.mubr.f32.gmra.mrb[0].mxu0 %v599
    %v1292 = vpop.f32.mrb[0].mxu0
    %v1293 = vadd.f32 %v1222, %v1292
    %v1294 = vpop.f32.mrb[0].mxu0
    %v1295 = vadd.f32 %v1224, %v1294
    %1296 = vdwg.mxu0
    %1297 = vmatprep.subr.mxu0 %v604
    %1298 = vmatpush1.msra.mxu0 %v603
    %1299 = vmatprep.subr.mxu0 %v612
    %1300 = vmatpush1.msra.mxu0 %v611
    %1301 = vmatprep.subr.mxu0 %v620
    %1302 = vmatpush1.msra.mxu0 %v619
    %1303 = vmatprep.subr.mxu0 %v628
    %1304 = vmatpush1.msra.mxu0 %v627
    %1305 = vmatprep.subr.mxu0 %v636
    %1306 = vmatpush1.msra.mxu0 %v635
    %1307 = vmatprep.subr.mxu0 %v644
    %1308 = vmatpush1.msra.mxu0 %v643
    %1309 = vmatprep.subr.mxu0 %v652
    %1310 = vmatpush1.msra.mxu0 %v651
    %1311 = vmatprep.subr.mxu0 %v660
    %1312 = vmatpush1.msra.mxu0 %v659
    %1313 = vmatprep.subr.mxu0 %v668
    %1314 = vmatpush1.msra.mxu0 %v667
    %1315 = vmatprep.subr.mxu0 %v676
    %1316 = vmatpush1.msra.mxu0 %v675
    %1317 = vmatprep.subr.mxu0 %v684
    %1318 = vmatpush1.msra.mxu0 %v683
    %1319 = vmatprep.subr.mxu0 %v692
    %1320 = vmatpush1.msra.mxu0 %v691
    %1321 = vmatprep.subr.mxu0 %v700
    %1322 = vmatpush1.msra.mxu0 %v699
    %1323 = vmatprep.subr.mxu0 %v708
    %1324 = vmatpush1.msra.mxu0 %v707
    %1325 = vmatprep.subr.mxu0 %v716
    %1326 = vmatpush1.msra.mxu0 %v715
    %1327 = vmatprep.subr.mxu0 %v724
    %1328 = vmatpush1.msra.mxu0 %v723
    %1329 = vmatprep.subr.mxu0 %v732
    %1330 = vmatpush1.msra.mxu0 %v731
    %1331 = vmatprep.subr.mxu0 %v740
    %1332 = vmatpush1.msra.mxu0 %v739
    %1333 = vmatprep.subr.mxu0 %v748
    %1334 = vmatpush1.msra.mxu0 %v747
    %1335 = vmatprep.subr.mxu0 %v756
    %1336 = vmatpush1.msra.mxu0 %v755
    %1337 = vmatprep.subr.mxu0 %v764
    %1338 = vmatpush1.msra.mxu0 %v763
    %1339 = vmatprep.subr.mxu0 %v772
    %1340 = vmatpush1.msra.mxu0 %v771
    %1341 = vmatprep.subr.mxu0 %v780
    %1342 = vmatpush1.msra.mxu0 %v779
    %1343 = vmatprep.subr.mxu0 %v788
    %1344 = vmatpush1.msra.mxu0 %v787
    %1345 = vmatprep.subr.mxu0 %v796
    %1346 = vmatpush1.msra.mxu0 %v795
    %1347 = vmatprep.subr.mxu0 %v804
    %1348 = vmatpush1.msra.mxu0 %v803
    %1349 = vmatprep.subr.mxu0 %v812
    %1350 = vmatpush1.msra.mxu0 %v811
    %1351 = vmatprep.subr.mxu0 %v820
    %1352 = vmatpush1.msra.mxu0 %v819
    %1353 = vmatprep.subr.mxu0 %v828
    %1354 = vmatpush1.msra.mxu0 %v827
    %1355 = vmatprep.subr.mxu0 %v836
    %1356 = vmatpush1.msra.mxu0 %v835
    %1357 = vmatprep.subr.mxu0 %v844
    %1358 = vmatpush1.msra.mxu0 %v843
    %1359 = vmatprep.subr.mxu0 %v852
    %1360 = vmatpush1.msra.mxu0 %v851
    %1361 = vmatprep.mubr.f32.mxu0 %v598
    %1362 = vmatmul.mubr.f32.gmra.mrb[0].mxu0 %v597
    %v1363 = vpop.f32.mrb[0].mxu0
    %v1364 = vadd.f32 %v1126, %v1363
    %v1365 = vpop.f32.mrb[0].mxu0
    %v1366 = vadd.f32 %v1130, %v1365
    %1367 = vdwg.mxu0
    %1368 = vmatprep.subr.mxu0 %v860
    %1369 = vmatpush1.msra.mxu0 %v859
    %1370 = vmatprep.subr.mxu0 %v868
    %1371 = vmatpush1.msra.mxu0 %v867
    %1372 = vmatprep.subr.mxu0 %v876
    %1373 = vmatpush1.msra.mxu0 %v875
    %1374 = vmatprep.subr.mxu0 %v884
    %1375 = vmatpush1.msra.mxu0 %v883
    %1376 = vmatprep.subr.mxu0 %v892
    %1377 = vmatpush1.msra.mxu0 %v891
    %1378 = vmatprep.subr.mxu0 %v900
    %1379 = vmatpush1.msra.mxu0 %v899
    %1380 = vmatprep.subr.mxu0 %v908
    %1381 = vmatpush1.msra.mxu0 %v907
    %1382 = vmatprep.subr.mxu0 %v916
    %1383 = vmatpush1.msra.mxu0 %v915
    %1384 = vmatprep.subr.mxu0 %v924
    %1385 = vmatpush1.msra.mxu0 %v923
    %1386 = vmatprep.subr.mxu0 %v932
    %1387 = vmatpush1.msra.mxu0 %v931
    %1388 = vmatprep.subr.mxu0 %v940
    %1389 = vmatpush1.msra.mxu0 %v939
    %1390 = vmatprep.subr.mxu0 %v948
    %1391 = vmatpush1.msra.mxu0 %v947
    %1392 = vmatprep.subr.mxu0 %v956
    %1393 = vmatpush1.msra.mxu0 %v955
    %1394 = vmatprep.subr.mxu0 %v964
    %1395 = vmatpush1.msra.mxu0 %v963
    %1396 = vmatprep.subr.mxu0 %v972
    %1397 = vmatpush1.msra.mxu0 %v971
    %1398 = vmatprep.subr.mxu0 %v980
    %1399 = vmatpush1.msra.mxu0 %v979
    %1400 = vmatprep.subr.mxu0 %v988
    %1401 = vmatpush1.msra.mxu0 %v987
    %1402 = vmatprep.subr.mxu0 %v996
    %1403 = vmatpush1.msra.mxu0 %v995
    %1404 = vmatprep.subr.mxu0 %v1004
    %1405 = vmatpush1.msra.mxu0 %v1003
    %1406 = vmatprep.subr.mxu0 %v1012
    %1407 = vmatpush1.msra.mxu0 %v1011
    %1408 = vmatprep.subr.mxu0 %v1020
    %1409 = vmatpush1.msra.mxu0 %v1019
    %1410 = vmatprep.subr.mxu0 %v1028
    %1411 = vmatpush1.msra.mxu0 %v1027
    %1412 = vmatprep.subr.mxu0 %v1036
    %1413 = vmatpush1.msra.mxu0 %v1035
    %1414 = vmatprep.subr.mxu0 %v1044
    %1415 = vmatpush1.msra.mxu0 %v1043
    %1416 = vmatprep.subr.mxu0 %v1052
    %1417 = vmatpush1.msra.mxu0 %v1051
    %1418 = vmatprep.subr.mxu0 %v1060
    %1419 = vmatpush1.msra.mxu0 %v1059
    %1420 = vmatprep.subr.mxu0 %v1068
    %1421 = vmatpush1.msra.mxu0 %v1067
    %1422 = vmatprep.subr.mxu0 %v1076
    %1423 = vmatpush1.msra.mxu0 %v1075
    %1424 = vmatprep.subr.mxu0 %v1084
    %1425 = vmatpush1.msra.mxu0 %v1083
    %1426 = vmatprep.subr.mxu0 %v1092
    %1427 = vmatpush1.msra.mxu0 %v1091
    %1428 = vmatprep.subr.mxu0 %v1100
    %1429 = vmatpush1.msra.mxu0 %v1099
    %1430 = vmatprep.subr.mxu0 %v1108
    %1431 = vmatpush1.msra.mxu0 %v1107
    %1432 = vmatprep.mubr.f32.mxu0 %v600
    %1433 = vmatmul.mubr.f32.gmra.mrb[0].mxu0 %v599
    %v1434 = vpop.f32.mrb[0].mxu0
    %v1435 = vadd.f32 %v1364, %v1434
    %v1436 = vpop.f32.mrb[0].mxu0
    %v1437 = vadd.f32 %v1366, %v1436
    %1438 = vdwg.mxu0
    %1439 = vmatprep.subr.mxu0 %v606
    %1440 = vmatpush1.msra.mxu0 %v605
    %1441 = vmatprep.subr.mxu0 %v614
    %1442 = vmatpush1.msra.mxu0 %v613
    %1443 = vmatprep.subr.mxu0 %v622
    %1444 = vmatpush1.msra.mxu0 %v621
    %1445 = vmatprep.subr.mxu0 %v630
    %1446 = vmatpush1.msra.mxu0 %v629
    %1447 = vmatprep.subr.mxu0 %v638
    %1448 = vmatpush1.msra.mxu0 %v637
    %1449 = vmatprep.subr.mxu0 %v646
    %1450 = vmatpush1.msra.mxu0 %v645
    %1451 = vmatprep.subr.mxu0 %v654
    %1452 = vmatpush1.msra.mxu0 %v653
    %1453 = vmatprep.subr.mxu0 %v662
    %1454 = vmatpush1.msra.mxu0 %v661
    %1455 = vmatprep.subr.mxu0 %v670
    %1456 = vmatpush1.msra.mxu0 %v669
    %1457 = vmatprep.subr.mxu0 %v678
    %1458 = vmatpush1.msra.mxu0 %v677
    %1459 = vmatprep.subr.mxu0 %v686
    %1460 = vmatpush1.msra.mxu0 %v685
    %1461 = vmatprep.subr.mxu0 %v694
    %1462 = vmatpush1.msra.mxu0 %v693
    %1463 = vmatprep.subr.mxu0 %v702
    %1464 = vmatpush1.msra.mxu0 %v701
    %1465 = vmatprep.subr.mxu0 %v710
    %1466 = vmatpush1.msra.mxu0 %v709
    %1467 = vmatprep.subr.mxu0 %v718
    %1468 = vmatpush1.msra.mxu0 %v717
    %1469 = vmatprep.subr.mxu0 %v726
    %1470 = vmatpush1.msra.mxu0 %v725
    %1471 = vmatprep.subr.mxu0 %v734
    %1472 = vmatpush1.msra.mxu0 %v733
    %1473 = vmatprep.subr.mxu0 %v742
    %1474 = vmatpush1.msra.mxu0 %v741
    %1475 = vmatprep.subr.mxu0 %v750
    %1476 = vmatpush1.msra.mxu0 %v749
    %1477 = vmatprep.subr.mxu0 %v758
    %1478 = vmatpush1.msra.mxu0 %v757
    %1479 = vmatprep.subr.mxu0 %v766
    %1480 = vmatpush1.msra.mxu0 %v765
    %1481 = vmatprep.subr.mxu0 %v774
    %1482 = vmatpush1.msra.mxu0 %v773
    %1483 = vmatprep.subr.mxu0 %v782
    %1484 = vmatpush1.msra.mxu0 %v781
    %1485 = vmatprep.subr.mxu0 %v790
    %1486 = vmatpush1.msra.mxu0 %v789
    %1487 = vmatprep.subr.mxu0 %v798
    %1488 = vmatpush1.msra.mxu0 %v797
    %1489 = vmatprep.subr.mxu0 %v806
    %1490 = vmatpush1.msra.mxu0 %v805
    %1491 = vmatprep.subr.mxu0 %v814
    %1492 = vmatpush1.msra.mxu0 %v813
    %1493 = vmatprep.subr.mxu0 %v822
    %1494 = vmatpush1.msra.mxu0 %v821
    %1495 = vmatprep.subr.mxu0 %v830
    %1496 = vmatpush1.msra.mxu0 %v829
    %1497 = vmatprep.subr.mxu0 %v838
    %1498 = vmatpush1.msra.mxu0 %v837
    %1499 = vmatprep.subr.mxu0 %v846
    %1500 = vmatpush1.msra.mxu0 %v845
    %1501 = vmatprep.subr.mxu0 %v854
    %1502 = vmatpush1.msra.mxu0 %v853
    %1503 = vmatprep.mubr.f32.mxu0 %v598
    %1504 = vmatmul.mubr.f32.gmra.mrb[0].mxu0 %v597
    %v1505 = vpop.f32.mrb[0].mxu0
    %v1506 = vadd.f32 %v1134, %v1505
    %v1507 = vpop.f32.mrb[0].mxu0
    %v1508 = vadd.f32 %v1138, %v1507
    %1509 = vdwg.mxu0
    %1510 = vmatprep.subr.mxu0 %v862
    %1511 = vmatpush1.msra.mxu0 %v861
    %1512 = vmatprep.subr.mxu0 %v870
    %1513 = vmatpush1.msra.mxu0 %v869
    %1514 = vmatprep.subr.mxu0 %v878
    %1515 = vmatpush1.msra.mxu0 %v877
    %1516 = vmatprep.subr.mxu0 %v886
    %1517 = vmatpush1.msra.mxu0 %v885
    %1518 = vmatprep.subr.mxu0 %v894
    %1519 = vmatpush1.msra.mxu0 %v893
    %1520 = vmatprep.subr.mxu0 %v902
    %1521 = vmatpush1.msra.mxu0 %v901
    %1522 = vmatprep.subr.mxu0 %v910
    %1523 = vmatpush1.msra.mxu0 %v909
    %1524 = vmatprep.subr.mxu0 %v918
    %1525 = vmatpush1.msra.mxu0 %v917
    %1526 = vmatprep.subr.mxu0 %v926
    %1527 = vmatpush1.msra.mxu0 %v925
    %1528 = vmatprep.subr.mxu0 %v934
    %1529 = vmatpush1.msra.mxu0 %v933
    %1530 = vmatprep.subr.mxu0 %v942
    %1531 = vmatpush1.msra.mxu0 %v941
    %1532 = vmatprep.subr.mxu0 %v950
    %1533 = vmatpush1.msra.mxu0 %v949
    %1534 = vmatprep.subr.mxu0 %v958
    %1535 = vmatpush1.msra.mxu0 %v957
    %1536 = vmatprep.subr.mxu0 %v966
    %1537 = vmatpush1.msra.mxu0 %v965
    %1538 = vmatprep.subr.mxu0 %v974
    %1539 = vmatpush1.msra.mxu0 %v973
    %1540 = vmatprep.subr.mxu0 %v982
    %1541 = vmatpush1.msra.mxu0 %v981
    %1542 = vmatprep.subr.mxu0 %v990
    %1543 = vmatpush1.msra.mxu0 %v989
    %1544 = vmatprep.subr.mxu0 %v998
    %1545 = vmatpush1.msra.mxu0 %v997
    %1546 = vmatprep.subr.mxu0 %v1006
    %1547 = vmatpush1.msra.mxu0 %v1005
    %1548 = vmatprep.subr.mxu0 %v1014
    %1549 = vmatpush1.msra.mxu0 %v1013
    %1550 = vmatprep.subr.mxu0 %v1022
    %1551 = vmatpush1.msra.mxu0 %v1021
    %1552 = vmatprep.subr.mxu0 %v1030
    %1553 = vmatpush1.msra.mxu0 %v1029
    %1554 = vmatprep.subr.mxu0 %v1038
    %1555 = vmatpush1.msra.mxu0 %v1037
    %1556 = vmatprep.subr.mxu0 %v1046
    %1557 = vmatpush1.msra.mxu0 %v1045
    %1558 = vmatprep.subr.mxu0 %v1054
    %1559 = vmatpush1.msra.mxu0 %v1053
    %1560 = vmatprep.subr.mxu0 %v1062
    %1561 = vmatpush1.msra.mxu0 %v1061
    %1562 = vmatprep.subr.mxu0 %v1070
    %1563 = vmatpush1.msra.mxu0 %v1069
    %1564 = vmatprep.subr.mxu0 %v1078
    %1565 = vmatpush1.msra.mxu0 %v1077
    %1566 = vmatprep.subr.mxu0 %v1086
    %1567 = vmatpush1.msra.mxu0 %v1085
    %1568 = vmatprep.subr.mxu0 %v1094
    %1569 = vmatpush1.msra.mxu0 %v1093
    %1570 = vmatprep.subr.mxu0 %v1102
    %1571 = vmatpush1.msra.mxu0 %v1101
    %1572 = vmatprep.subr.mxu0 %v1110
    %1573 = vmatpush1.msra.mxu0 %v1109
    %1574 = vmatprep.mubr.f32.mxu0 %v600
    %1575 = vmatmul.mubr.f32.gmra.mrb[0].mxu0 %v599
    %v1576 = vpop.f32.mrb[0].mxu0
    %v1577 = vadd.f32 %v1506, %v1576
    %v1578 = vpop.f32.mrb[0].mxu0
    %v1579 = vadd.f32 %v1508, %v1578
    %1580 = vdwg.mxu0
    %1581 = vmatprep.subr.mxu0 %v608
    %1582 = vmatpush1.msra.mxu0 %v607
    %1583 = vmatprep.subr.mxu0 %v616
    %1584 = vmatpush1.msra.mxu0 %v615
    %1585 = vmatprep.subr.mxu0 %v624
    %1586 = vmatpush1.msra.mxu0 %v623
    %1587 = vmatprep.subr.mxu0 %v632
    %1588 = vmatpush1.msra.mxu0 %v631
    %1589 = vmatprep.subr.mxu0 %v640
    %1590 = vmatpush1.msra.mxu0 %v639
    %1591 = vmatprep.subr.mxu0 %v648
    %1592 = vmatpush1.msra.mxu0 %v647
    %1593 = vmatprep.subr.mxu0 %v656
    %1594 = vmatpush1.msra.mxu0 %v655
    %1595 = vmatprep.subr.mxu0 %v664
    %1596 = vmatpush1.msra.mxu0 %v663
    %1597 = vmatprep.subr.mxu0 %v672
    %1598 = vmatpush1.msra.mxu0 %v671
    %1599 = vmatprep.subr.mxu0 %v680
    %1600 = vmatpush1.msra.mxu0 %v679
    %1601 = vmatprep.subr.mxu0 %v688
    %1602 = vmatpush1.msra.mxu0 %v687
    %1603 = vmatprep.subr.mxu0 %v696
    %1604 = vmatpush1.msra.mxu0 %v695
    %1605 = vmatprep.subr.mxu0 %v704
    %1606 = vmatpush1.msra.mxu0 %v703
    %1607 = vmatprep.subr.mxu0 %v712
    %1608 = vmatpush1.msra.mxu0 %v711
    %1609 = vmatprep.subr.mxu0 %v720
    %1610 = vmatpush1.msra.mxu0 %v719
    %1611 = vmatprep.subr.mxu0 %v728
    %1612 = vmatpush1.msra.mxu0 %v727
    %1613 = vmatprep.subr.mxu0 %v736
    %1614 = vmatpush1.msra.mxu0 %v735
    %1615 = vmatprep.subr.mxu0 %v744
    %1616 = vmatpush1.msra.mxu0 %v743
    %1617 = vmatprep.subr.mxu0 %v752
    %1618 = vmatpush1.msra.mxu0 %v751
    %1619 = vmatprep.subr.mxu0 %v760
    %1620 = vmatpush1.msra.mxu0 %v759
    %1621 = vmatprep.subr.mxu0 %v768
    %1622 = vmatpush1.msra.mxu0 %v767
    %1623 = vmatprep.subr.mxu0 %v776
    %1624 = vmatpush1.msra.mxu0 %v775
    %1625 = vmatprep.subr.mxu0 %v784
    %1626 = vmatpush1.msra.mxu0 %v783
    %1627 = vmatprep.subr.mxu0 %v792
    %1628 = vmatpush1.msra.mxu0 %v791
    %1629 = vmatprep.subr.mxu0 %v800
    %1630 = vmatpush1.msra.mxu0 %v799
    %1631 = vmatprep.subr.mxu0 %v808
    %1632 = vmatpush1.msra.mxu0 %v807
    %1633 = vmatprep.subr.mxu0 %v816
    %1634 = vmatpush1.msra.mxu0 %v815
    %1635 = vmatprep.subr.mxu0 %v824
    %1636 = vmatpush1.msra.mxu0 %v823
    %1637 = vmatprep.subr.mxu0 %v832
    %1638 = vmatpush1.msra.mxu0 %v831
    %1639 = vmatprep.subr.mxu0 %v840
    %1640 = vmatpush1.msra.mxu0 %v839
    %1641 = vmatprep.subr.mxu0 %v848
    %1642 = vmatpush1.msra.mxu0 %v847
    %1643 = vmatprep.subr.mxu0 %v856
    %1644 = vmatpush1.msra.mxu0 %v855
    %1645 = vmatprep.mubr.f32.mxu0 %v598
    %1646 = vmatmul.mubr.f32.gmra.mrb[0].mxu0 %v597
    %v1647 = vpop.f32.mrb[0].mxu0
    %v1648 = vadd.f32 %v1142, %v1647
    %v1649 = vpop.f32.mrb[0].mxu0
    %v1650 = vadd.f32 %v1146, %v1649
    %1651 = vdwg.mxu0
    %1652 = vmatprep.subr.mxu0 %v864
    %1653 = vmatpush1.msra.mxu0 %v863
    %1654 = vmatprep.subr.mxu0 %v872
    %1655 = vmatpush1.msra.mxu0 %v871
    %1656 = vmatprep.subr.mxu0 %v880
    %1657 = vmatpush1.msra.mxu0 %v879
    %1658 = vmatprep.subr.mxu0 %v888
    %1659 = vmatpush1.msra.mxu0 %v887
    %1660 = vmatprep.subr.mxu0 %v896
    %1661 = vmatpush1.msra.mxu0 %v895
    %1662 = vmatprep.subr.mxu0 %v904
    %1663 = vmatpush1.msra.mxu0 %v903
    %1664 = vmatprep.subr.mxu0 %v912
    %1665 = vmatpush1.msra.mxu0 %v911
    %1666 = vmatprep.subr.mxu0 %v920
    %1667 = vmatpush1.msra.mxu0 %v919
    %1668 = vmatprep.subr.mxu0 %v928
    %1669 = vmatpush1.msra.mxu0 %v927
    %1670 = vmatprep.subr.mxu0 %v936
    %1671 = vmatpush1.msra.mxu0 %v935
    %1672 = vmatprep.subr.mxu0 %v944
    %1673 = vmatpush1.msra.mxu0 %v943
    %1674 = vmatprep.subr.mxu0 %v952
    %1675 = vmatpush1.msra.mxu0 %v951
    %1676 = vmatprep.subr.mxu0 %v960
    %1677 = vmatpush1.msra.mxu0 %v959
    %1678 = vmatprep.subr.mxu0 %v968
    %1679 = vmatpush1.msra.mxu0 %v967
    %1680 = vmatprep.subr.mxu0 %v976
    %1681 = vmatpush1.msra.mxu0 %v975
    %1682 = vmatprep.subr.mxu0 %v984
    %1683 = vmatpush1.msra.mxu0 %v983
    %1684 = vmatprep.subr.mxu0 %v992
    %1685 = vmatpush1.msra.mxu0 %v991
    %1686 = vmatprep.subr.mxu0 %v1000
    %1687 = vmatpush1.msra.mxu0 %v999
    %1688 = vmatprep.subr.mxu0 %v1008
    %1689 = vmatpush1.msra.mxu0 %v1007
    %1690 = vmatprep.subr.mxu0 %v1016
    %1691 = vmatpush1.msra.mxu0 %v1015
    %1692 = vmatprep.subr.mxu0 %v1024
    %1693 = vmatpush1.msra.mxu0 %v1023
    %1694 = vmatprep.subr.mxu0 %v1032
    %1695 = vmatpush1.msra.mxu0 %v1031
    %1696 = vmatprep.subr.mxu0 %v1040
    %1697 = vmatpush1.msra.mxu0 %v1039
    %1698 = vmatprep.subr.mxu0 %v1048
    %1699 = vmatpush1.msra.mxu0 %v1047
    %1700 = vmatprep.subr.mxu0 %v1056
    %1701 = vmatpush1.msra.mxu0 %v1055
    %1702 = vmatprep.subr.mxu0 %v1064
    %1703 = vmatpush1.msra.mxu0 %v1063
    %1704 = vmatprep.subr.mxu0 %v1072
    %1705 = vmatpush1.msra.mxu0 %v1071
    %1706 = vmatprep.subr.mxu0 %v1080
    %1707 = vmatpush1.msra.mxu0 %v1079
    %1708 = vmatprep.subr.mxu0 %v1088
    %1709 = vmatpush1.msra.mxu0 %v1087
    %1710 = vmatprep.subr.mxu0 %v1096
    %1711 = vmatpush1.msra.mxu0 %v1095
    %1712 = vmatprep.subr.mxu0 %v1104
    %1713 = vmatpush1.msra.mxu0 %v1103
    %1714 = vmatprep.subr.mxu0 %v1112
    %1715 = vmatpush1.msra.mxu0 %v1111
    %1716 = vmatprep.mubr.f32.mxu0 %v600
    %1717 = vmatmul.mubr.f32.gmra.mrb[0].mxu0 %v599
    %v1718 = vpop.f32.mrb[0].mxu0
    %v1719 = vadd.f32 %v1648, %v1718
    %v1720 = vpop.f32.mrb[0].mxu0
    %v1721 = vadd.f32 %v1650, %v1720
    %1722 = vdwg.mxu0
    %v1723 = vmul.f32 %v1293, 0.2
    %v1724 = vmul.f32 %v1295, 0.2
    %v1725 = vmul.f32 %v1435, 0.2
    %v1726 = vmul.f32 %v1437, 0.2
    %v1727 = vmul.f32 %v1577, 0.2
    %v1728 = vmul.f32 %v1579, 0.2
    %v1729 = vmul.f32 %v1719, 0.2
    %v1730 = vmul.f32 %v1721, 0.2
    %v1731 = vmax.f32 %v1293, %v1723
    %v1732 = vmax.f32 %v1295, %v1724
    %v1733 = vmax.f32 %v1435, %v1725
    %v1734 = vmax.f32 %v1437, %v1726
    %v1735 = vmax.f32 %v1577, %v1727
    %v1736 = vmax.f32 %v1579, %v1728
    %v1737 = vmax.f32 %v1719, %v1729
    %v1738 = vmax.f32 %v1721, %v1730
    %v1739 = vld [vmem:[#allocation12] sm:$0xff]
    %v1740 = vld [vmem:[#allocation12 + $0x8] sm:$0xff]
    %v1741 = vld [vmem:[#allocation12 + $0x10] sm:$0xff]
    %v1742 = vld [vmem:[#allocation12 + $0x18] sm:$0xff]
    %v1743 = vld [vmem:[#allocation12 + $0x20] sm:$0xff]
    %v1744 = vld [vmem:[#allocation12 + $0x28] sm:$0xff]
    %v1745 = vld [vmem:[#allocation12 + $0x30] sm:$0xff]
    %v1746 = vld [vmem:[#allocation12 + $0x38] sm:$0xff]
    %v1747 = vld [vmem:[#allocation12 + $0x40] sm:$0xff]
    %v1748 = vld [vmem:[#allocation12 + $0x48] sm:$0xff]
    %v1749 = vld [vmem:[#allocation12 + $0x50] sm:$0xff]
    %v1750 = vld [vmem:[#allocation12 + $0x58] sm:$0xff]
    %v1751 = vld [vmem:[#allocation12 + $0x60] sm:$0xff]
    %v1752 = vld [vmem:[#allocation12 + $0x68] sm:$0xff]
    %v1753 = vld [vmem:[#allocation12 + $0x70] sm:$0xff]
    %v1754 = vld [vmem:[#allocation12 + $0x78] sm:$0xff]
    %v1755 = vld [vmem:[#allocation12 + $0x80] sm:$0xff]
    %v1756 = vld [vmem:[#allocation12 + $0x88] sm:$0xff]
    %v1757 = vld [vmem:[#allocation12 + $0x90] sm:$0xff]
    %v1758 = vld [vmem:[#allocation12 + $0x98] sm:$0xff]
    %v1759 = vld [vmem:[#allocation12 + $0xa0] sm:$0xff]
    %v1760 = vld [vmem:[#allocation12 + $0xa8] sm:$0xff]
    %v1761 = vld [vmem:[#allocation12 + $0xb0] sm:$0xff]
    %v1762 = vld [vmem:[#allocation12 + $0xb8] sm:$0xff]
    %v1763 = vld [vmem:[#allocation12 + $0xc0] sm:$0xff]
    %v1764 = vld [vmem:[#allocation12 + $0xc8] sm:$0xff]
    %v1765 = vld [vmem:[#allocation12 + $0xd0] sm:$0xff]
    %v1766 = vld [vmem:[#allocation12 + $0xd8] sm:$0xff]
    %v1767 = vld [vmem:[#allocation12 + $0xe0] sm:$0xff]
    %v1768 = vld [vmem:[#allocation12 + $0xe8] sm:$0xff]
    %v1769 = vld [vmem:[#allocation12 + $0xf0] sm:$0xff]
    %v1770 = vld [vmem:[#allocation12 + $0xf8] sm:$0xff]
    %v1771 = vld [vmem:[#allocation12 + $0x100] sm:$0xff]
    %v1772 = vld [vmem:[#allocation12 + $0x108] sm:$0xff]
    %v1773 = vld [vmem:[#allocation12 + $0x110] sm:$0xff]
    %v1774 = vld [vmem:[#allocation12 + $0x118] sm:$0xff]
    %v1775 = vld [vmem:[#allocation12 + $0x120] sm:$0xff]
    %v1776 = vld [vmem:[#allocation12 + $0x128] sm:$0xff]
    %v1777 = vld [vmem:[#allocation12 + $0x130] sm:$0xff]
    %v1778 = vld [vmem:[#allocation12 + $0x138] sm:$0xff]
    %v1779 = vld [vmem:[#allocation12 + $0x140] sm:$0xff]
    %v1780 = vld [vmem:[#allocation12 + $0x148] sm:$0xff]
    %v1781 = vld [vmem:[#allocation12 + $0x150] sm:$0xff]
    %v1782 = vld [vmem:[#allocation12 + $0x158] sm:$0xff]
    %v1783 = vld [vmem:[#allocation12 + $0x160] sm:$0xff]
    %v1784 = vld [vmem:[#allocation12 + $0x168] sm:$0xff]
    %v1785 = vld [vmem:[#allocation12 + $0x170] sm:$0xff]
    %v1786 = vld [vmem:[#allocation12 + $0x178] sm:$0xff]
    %v1787 = vld [vmem:[#allocation12 + $0x180] sm:$0xff]
    %v1788 = vld [vmem:[#allocation12 + $0x188] sm:$0xff]
    %v1789 = vld [vmem:[#allocation12 + $0x190] sm:$0xff]
    %v1790 = vld [vmem:[#allocation12 + $0x198] sm:$0xff]
    %v1791 = vld [vmem:[#allocation12 + $0x1a0] sm:$0xff]
    %v1792 = vld [vmem:[#allocation12 + $0x1a8] sm:$0xff]
    %v1793 = vld [vmem:[#allocation12 + $0x1b0] sm:$0xff]
    %v1794 = vld [vmem:[#allocation12 + $0x1b8] sm:$0xff]
    %v1795 = vld [vmem:[#allocation12 + $0x1c0] sm:$0xff]
    %v1796 = vld [vmem:[#allocation12 + $0x1c8] sm:$0xff]
    %v1797 = vld [vmem:[#allocation12 + $0x1d0] sm:$0xff]
    %v1798 = vld [vmem:[#allocation12 + $0x1d8] sm:$0xff]
    %v1799 = vld [vmem:[#allocation12 + $0x1e0] sm:$0xff]
    %v1800 = vld [vmem:[#allocation12 + $0x1e8] sm:$0xff]
    %v1801 = vld [vmem:[#allocation12 + $0x1f0] sm:$0xff]
    %v1802 = vld [vmem:[#allocation12 + $0x1f8] sm:$0xff]
    %v1803 = vld [vmem:[#allocation12 + $0x200] sm:$0xff]
    %v1804 = vld [vmem:[#allocation12 + $0x208] sm:$0xff]
    %v1805 = vld [vmem:[#allocation12 + $0x210] sm:$0xff]
    %v1806 = vld [vmem:[#allocation12 + $0x218] sm:$0xff]
    %v1807 = vld [vmem:[#allocation12 + $0x220] sm:$0xff]
    %v1808 = vld [vmem:[#allocation12 + $0x228] sm:$0xff]
    %v1809 = vld [vmem:[#allocation12 + $0x230] sm:$0xff]
    %v1810 = vld [vmem:[#allocation12 + $0x238] sm:$0xff]
    %v1811 = vld [vmem:[#allocation12 + $0x240] sm:$0xff]
    %v1812 = vld [vmem:[#allocation12 + $0x248] sm:$0xff]
    %v1813 = vld [vmem:[#allocation12 + $0x250] sm:$0xff]
    %v1814 = vld [vmem:[#allocation12 + $0x258] sm:$0xff]
    %v1815 = vld [vmem:[#allocation12 + $0x260] sm:$0xff]
    %v1816 = vld [vmem:[#allocation12 + $0x268] sm:$0xff]
    %v1817 = vld [vmem:[#allocation12 + $0x270] sm:$0xff]
    %v1818 = vld [vmem:[#allocation12 + $0x278] sm:$0xff]
    %v1819 = vld [vmem:[#allocation12 + $0x280] sm:$0xff]
    %v1820 = vld [vmem:[#allocation12 + $0x288] sm:$0xff]
    %v1821 = vld [vmem:[#allocation12 + $0x290] sm:$0xff]
    %v1822 = vld [vmem:[#allocation12 + $0x298] sm:$0xff]
    %v1823 = vld [vmem:[#allocation12 + $0x2a0] sm:$0xff]
    %v1824 = vld [vmem:[#allocation12 + $0x2a8] sm:$0xff]
    %v1825 = vld [vmem:[#allocation12 + $0x2b0] sm:$0xff]
    %v1826 = vld [vmem:[#allocation12 + $0x2b8] sm:$0xff]
    %v1827 = vld [vmem:[#allocation12 + $0x2c0] sm:$0xff]
    %v1828 = vld [vmem:[#allocation12 + $0x2c8] sm:$0xff]
    %v1829 = vld [vmem:[#allocation12 + $0x2d0] sm:$0xff]
    %v1830 = vld [vmem:[#allocation12 + $0x2d8] sm:$0xff]
    %v1831 = vld [vmem:[#allocation12 + $0x2e0] sm:$0xff]
    %v1832 = vld [vmem:[#allocation12 + $0x2e8] sm:$0xff]
    %v1833 = vld [vmem:[#allocation12 + $0x2f0] sm:$0xff]
    %v1834 = vld [vmem:[#allocation12 + $0x2f8] sm:$0xff]
    %v1835 = vld [vmem:[#allocation12 + $0x300] sm:$0xff]
    %v1836 = vld [vmem:[#allocation12 + $0x308] sm:$0xff]
    %v1837 = vld [vmem:[#allocation12 + $0x310] sm:$0xff]
    %v1838 = vld [vmem:[#allocation12 + $0x318] sm:$0xff]
    %v1839 = vld [vmem:[#allocation12 + $0x320] sm:$0xff]
    %v1840 = vld [vmem:[#allocation12 + $0x328] sm:$0xff]
    %v1841 = vld [vmem:[#allocation12 + $0x330] sm:$0xff]
    %v1842 = vld [vmem:[#allocation12 + $0x338] sm:$0xff]
    %v1843 = vld [vmem:[#allocation12 + $0x340] sm:$0xff]
    %v1844 = vld [vmem:[#allocation12 + $0x348] sm:$0xff]
    %v1845 = vld [vmem:[#allocation12 + $0x350] sm:$0xff]
    %v1846 = vld [vmem:[#allocation12 + $0x358] sm:$0xff]
    %v1847 = vld [vmem:[#allocation12 + $0x360] sm:$0xff]
    %v1848 = vld [vmem:[#allocation12 + $0x368] sm:$0xff]
    %v1849 = vld [vmem:[#allocation12 + $0x370] sm:$0xff]
    %v1850 = vld [vmem:[#allocation12 + $0x378] sm:$0xff]
    %v1851 = vld [vmem:[#allocation12 + $0x380] sm:$0xff]
    %v1852 = vld [vmem:[#allocation12 + $0x388] sm:$0xff]
    %v1853 = vld [vmem:[#allocation12 + $0x390] sm:$0xff]
    %v1854 = vld [vmem:[#allocation12 + $0x398] sm:$0xff]
    %v1855 = vld [vmem:[#allocation12 + $0x3a0] sm:$0xff]
    %v1856 = vld [vmem:[#allocation12 + $0x3a8] sm:$0xff]
    %v1857 = vld [vmem:[#allocation12 + $0x3b0] sm:$0xff]
    %v1858 = vld [vmem:[#allocation12 + $0x3b8] sm:$0xff]
    %v1859 = vld [vmem:[#allocation12 + $0x3c0] sm:$0xff]
    %v1860 = vld [vmem:[#allocation12 + $0x3c8] sm:$0xff]
    %v1861 = vld [vmem:[#allocation12 + $0x3d0] sm:$0xff]
    %v1862 = vld [vmem:[#allocation12 + $0x3d8] sm:$0xff]
    %v1863 = vld [vmem:[#allocation12 + $0x3e0] sm:$0xff]
    %v1864 = vld [vmem:[#allocation12 + $0x3e8] sm:$0xff]
    %v1865 = vld [vmem:[#allocation12 + $0x3f0] sm:$0xff]
    %v1866 = vld [vmem:[#allocation12 + $0x3f8] sm:$0xff]
    %v1867 = vld [vmem:[#allocation12 + $0x400] sm:$0xff]
    %v1868 = vld [vmem:[#allocation12 + $0x408] sm:$0xff]
    %v1869 = vld [vmem:[#allocation12 + $0x410] sm:$0xff]
    %v1870 = vld [vmem:[#allocation12 + $0x418] sm:$0xff]
    %v1871 = vld [vmem:[#allocation12 + $0x420] sm:$0xff]
    %v1872 = vld [vmem:[#allocation12 + $0x428] sm:$0xff]
    %v1873 = vld [vmem:[#allocation12 + $0x430] sm:$0xff]
    %v1874 = vld [vmem:[#allocation12 + $0x438] sm:$0xff]
    %v1875 = vld [vmem:[#allocation12 + $0x440] sm:$0xff]
    %v1876 = vld [vmem:[#allocation12 + $0x448] sm:$0xff]
    %v1877 = vld [vmem:[#allocation12 + $0x450] sm:$0xff]
    %v1878 = vld [vmem:[#allocation12 + $0x458] sm:$0xff]
    %v1879 = vld [vmem:[#allocation12 + $0x460] sm:$0xff]
    %v1880 = vld [vmem:[#allocation12 + $0x468] sm:$0xff]
    %v1881 = vld [vmem:[#allocation12 + $0x470] sm:$0xff]
    %v1882 = vld [vmem:[#allocation12 + $0x478] sm:$0xff]
    %v1883 = vld [vmem:[#allocation12 + $0x480] sm:$0xff]
    %v1884 = vld [vmem:[#allocation12 + $0x488] sm:$0xff]
    %v1885 = vld [vmem:[#allocation12 + $0x490] sm:$0xff]
    %v1886 = vld [vmem:[#allocation12 + $0x498] sm:$0xff]
    %v1887 = vld [vmem:[#allocation12 + $0x4a0] sm:$0xff]
    %v1888 = vld [vmem:[#allocation12 + $0x4a8] sm:$0xff]
    %v1889 = vld [vmem:[#allocation12 + $0x4b0] sm:$0xff]
    %v1890 = vld [vmem:[#allocation12 + $0x4b8] sm:$0xff]
    %v1891 = vld [vmem:[#allocation12 + $0x4c0] sm:$0xff]
    %v1892 = vld [vmem:[#allocation12 + $0x4c8] sm:$0xff]
    %v1893 = vld [vmem:[#allocation12 + $0x4d0] sm:$0xff]
    %v1894 = vld [vmem:[#allocation12 + $0x4d8] sm:$0xff]
    %v1895 = vld [vmem:[#allocation12 + $0x4e0] sm:$0xff]
    %v1896 = vld [vmem:[#allocation12 + $0x4e8] sm:$0xff]
    %v1897 = vld [vmem:[#allocation12 + $0x4f0] sm:$0xff]
    %v1898 = vld [vmem:[#allocation12 + $0x4f8] sm:$0xff]
    %v1899 = vld [vmem:[#allocation12 + $0x500] sm:$0xff]
    %v1900 = vld [vmem:[#allocation12 + $0x508] sm:$0xff]
    %v1901 = vld [vmem:[#allocation12 + $0x510] sm:$0xff]
    %v1902 = vld [vmem:[#allocation12 + $0x518] sm:$0xff]
    %v1903 = vld [vmem:[#allocation12 + $0x520] sm:$0xff]
    %v1904 = vld [vmem:[#allocation12 + $0x528] sm:$0xff]
    %v1905 = vld [vmem:[#allocation12 + $0x530] sm:$0xff]
    %v1906 = vld [vmem:[#allocation12 + $0x538] sm:$0xff]
    %v1907 = vld [vmem:[#allocation12 + $0x540] sm:$0xff]
    %v1908 = vld [vmem:[#allocation12 + $0x548] sm:$0xff]
    %v1909 = vld [vmem:[#allocation12 + $0x550] sm:$0xff]
    %v1910 = vld [vmem:[#allocation12 + $0x558] sm:$0xff]
    %v1911 = vld [vmem:[#allocation12 + $0x560] sm:$0xff]
    %v1912 = vld [vmem:[#allocation12 + $0x568] sm:$0xff]
    %v1913 = vld [vmem:[#allocation12 + $0x570] sm:$0xff]
    %v1914 = vld [vmem:[#allocation12 + $0x578] sm:$0xff]
    %v1915 = vld [vmem:[#allocation12 + $0x580] sm:$0xff]
    %v1916 = vld [vmem:[#allocation12 + $0x588] sm:$0xff]
    %v1917 = vld [vmem:[#allocation12 + $0x590] sm:$0xff]
    %v1918 = vld [vmem:[#allocation12 + $0x598] sm:$0xff]
    %v1919 = vld [vmem:[#allocation12 + $0x5a0] sm:$0xff]
    %v1920 = vld [vmem:[#allocation12 + $0x5a8] sm:$0xff]
    %v1921 = vld [vmem:[#allocation12 + $0x5b0] sm:$0xff]
    %v1922 = vld [vmem:[#allocation12 + $0x5b8] sm:$0xff]
    %v1923 = vld [vmem:[#allocation12 + $0x5c0] sm:$0xff]
    %v1924 = vld [vmem:[#allocation12 + $0x5c8] sm:$0xff]
    %v1925 = vld [vmem:[#allocation12 + $0x5d0] sm:$0xff]
    %v1926 = vld [vmem:[#allocation12 + $0x5d8] sm:$0xff]
    %v1927 = vld [vmem:[#allocation12 + $0x5e0] sm:$0xff]
    %v1928 = vld [vmem:[#allocation12 + $0x5e8] sm:$0xff]
    %v1929 = vld [vmem:[#allocation12 + $0x5f0] sm:$0xff]
    %v1930 = vld [vmem:[#allocation12 + $0x5f8] sm:$0xff]
    %v1931 = vld [vmem:[#allocation12 + $0x600] sm:$0xff]
    %v1932 = vld [vmem:[#allocation12 + $0x608] sm:$0xff]
    %v1933 = vld [vmem:[#allocation12 + $0x610] sm:$0xff]
    %v1934 = vld [vmem:[#allocation12 + $0x618] sm:$0xff]
    %v1935 = vld [vmem:[#allocation12 + $0x620] sm:$0xff]
    %v1936 = vld [vmem:[#allocation12 + $0x628] sm:$0xff]
    %v1937 = vld [vmem:[#allocation12 + $0x630] sm:$0xff]
    %v1938 = vld [vmem:[#allocation12 + $0x638] sm:$0xff]
    %v1939 = vld [vmem:[#allocation12 + $0x640] sm:$0xff]
    %v1940 = vld [vmem:[#allocation12 + $0x648] sm:$0xff]
    %v1941 = vld [vmem:[#allocation12 + $0x650] sm:$0xff]
    %v1942 = vld [vmem:[#allocation12 + $0x658] sm:$0xff]
    %v1943 = vld [vmem:[#allocation12 + $0x660] sm:$0xff]
    %v1944 = vld [vmem:[#allocation12 + $0x668] sm:$0xff]
    %v1945 = vld [vmem:[#allocation12 + $0x670] sm:$0xff]
    %v1946 = vld [vmem:[#allocation12 + $0x678] sm:$0xff]
    %v1947 = vld [vmem:[#allocation12 + $0x680] sm:$0xff]
    %v1948 = vld [vmem:[#allocation12 + $0x688] sm:$0xff]
    %v1949 = vld [vmem:[#allocation12 + $0x690] sm:$0xff]
    %v1950 = vld [vmem:[#allocation12 + $0x698] sm:$0xff]
    %v1951 = vld [vmem:[#allocation12 + $0x6a0] sm:$0xff]
    %v1952 = vld [vmem:[#allocation12 + $0x6a8] sm:$0xff]
    %v1953 = vld [vmem:[#allocation12 + $0x6b0] sm:$0xff]
    %v1954 = vld [vmem:[#allocation12 + $0x6b8] sm:$0xff]
    %v1955 = vld [vmem:[#allocation12 + $0x6c0] sm:$0xff]
    %v1956 = vld [vmem:[#allocation12 + $0x6c8] sm:$0xff]
    %v1957 = vld [vmem:[#allocation12 + $0x6d0] sm:$0xff]
    %v1958 = vld [vmem:[#allocation12 + $0x6d8] sm:$0xff]
    %v1959 = vld [vmem:[#allocation12 + $0x6e0] sm:$0xff]
    %v1960 = vld [vmem:[#allocation12 + $0x6e8] sm:$0xff]
    %v1961 = vld [vmem:[#allocation12 + $0x6f0] sm:$0xff]
    %v1962 = vld [vmem:[#allocation12 + $0x6f8] sm:$0xff]
    %v1963 = vld [vmem:[#allocation12 + $0x700] sm:$0xff]
    %v1964 = vld [vmem:[#allocation12 + $0x708] sm:$0xff]
    %v1965 = vld [vmem:[#allocation12 + $0x710] sm:$0xff]
    %v1966 = vld [vmem:[#allocation12 + $0x718] sm:$0xff]
    %v1967 = vld [vmem:[#allocation12 + $0x720] sm:$0xff]
    %v1968 = vld [vmem:[#allocation12 + $0x728] sm:$0xff]
    %v1969 = vld [vmem:[#allocation12 + $0x730] sm:$0xff]
    %v1970 = vld [vmem:[#allocation12 + $0x738] sm:$0xff]
    %v1971 = vld [vmem:[#allocation12 + $0x740] sm:$0xff]
    %v1972 = vld [vmem:[#allocation12 + $0x748] sm:$0xff]
    %v1973 = vld [vmem:[#allocation12 + $0x750] sm:$0xff]
    %v1974 = vld [vmem:[#allocation12 + $0x758] sm:$0xff]
    %v1975 = vld [vmem:[#allocation12 + $0x760] sm:$0xff]
    %v1976 = vld [vmem:[#allocation12 + $0x768] sm:$0xff]
    %v1977 = vld [vmem:[#allocation12 + $0x770] sm:$0xff]
    %v1978 = vld [vmem:[#allocation12 + $0x778] sm:$0xff]
    %v1979 = vld [vmem:[#allocation12 + $0x780] sm:$0xff]
    %v1980 = vld [vmem:[#allocation12 + $0x788] sm:$0xff]
    %v1981 = vld [vmem:[#allocation12 + $0x790] sm:$0xff]
    %v1982 = vld [vmem:[#allocation12 + $0x798] sm:$0xff]
    %v1983 = vld [vmem:[#allocation12 + $0x7a0] sm:$0xff]
    %v1984 = vld [vmem:[#allocation12 + $0x7a8] sm:$0xff]
    %v1985 = vld [vmem:[#allocation12 + $0x7b0] sm:$0xff]
    %v1986 = vld [vmem:[#allocation12 + $0x7b8] sm:$0xff]
    %v1987 = vld [vmem:[#allocation12 + $0x7c0] sm:$0xff]
    %v1988 = vld [vmem:[#allocation12 + $0x7c8] sm:$0xff]
    %v1989 = vld [vmem:[#allocation12 + $0x7d0] sm:$0xff]
    %v1990 = vld [vmem:[#allocation12 + $0x7d8] sm:$0xff]
    %v1991 = vld [vmem:[#allocation12 + $0x7e0] sm:$0xff]
    %v1992 = vld [vmem:[#allocation12 + $0x7e8] sm:$0xff]
    %v1993 = vld [vmem:[#allocation12 + $0x7f0] sm:$0xff]
    %v1994 = vld [vmem:[#allocation12 + $0x7f8] sm:$0xff]
    %v1995 = vld [vmem:[#allocation12 + $0x800] sm:$0xff]
    %v1996 = vld [vmem:[#allocation12 + $0x808] sm:$0xff]
    %v1997 = vld [vmem:[#allocation12 + $0x810] sm:$0xff]
    %v1998 = vld [vmem:[#allocation12 + $0x818] sm:$0xff]
    %v1999 = vld [vmem:[#allocation12 + $0x820] sm:$0xff]
    %v2000 = vld [vmem:[#allocation12 + $0x828] sm:$0xff]
    %v2001 = vld [vmem:[#allocation12 + $0x830] sm:$0xff]
    %v2002 = vld [vmem:[#allocation12 + $0x838] sm:$0xff]
    %v2003 = vld [vmem:[#allocation12 + $0x840] sm:$0xff]
    %v2004 = vld [vmem:[#allocation12 + $0x848] sm:$0xff]
    %v2005 = vld [vmem:[#allocation12 + $0x850] sm:$0xff]
    %v2006 = vld [vmem:[#allocation12 + $0x858] sm:$0xff]
    %v2007 = vld [vmem:[#allocation12 + $0x860] sm:$0xff]
    %v2008 = vld [vmem:[#allocation12 + $0x868] sm:$0xff]
    %v2009 = vld [vmem:[#allocation12 + $0x870] sm:$0xff]
    %v2010 = vld [vmem:[#allocation12 + $0x878] sm:$0xff]
    %v2011 = vld [vmem:[#allocation12 + $0x880] sm:$0xff]
    %v2012 = vld [vmem:[#allocation12 + $0x888] sm:$0xff]
    %v2013 = vld [vmem:[#allocation12 + $0x890] sm:$0xff]
    %v2014 = vld [vmem:[#allocation12 + $0x898] sm:$0xff]
    %v2015 = vld [vmem:[#allocation12 + $0x8a0] sm:$0xff]
    %v2016 = vld [vmem:[#allocation12 + $0x8a8] sm:$0xff]
    %v2017 = vld [vmem:[#allocation12 + $0x8b0] sm:$0xff]
    %v2018 = vld [vmem:[#allocation12 + $0x8b8] sm:$0xff]
    %v2019 = vld [vmem:[#allocation12 + $0x8c0] sm:$0xff]
    %v2020 = vld [vmem:[#allocation12 + $0x8c8] sm:$0xff]
    %v2021 = vld [vmem:[#allocation12 + $0x8d0] sm:$0xff]
    %v2022 = vld [vmem:[#allocation12 + $0x8d8] sm:$0xff]
    %v2023 = vld [vmem:[#allocation12 + $0x8e0] sm:$0xff]
    %v2024 = vld [vmem:[#allocation12 + $0x8e8] sm:$0xff]
    %v2025 = vld [vmem:[#allocation12 + $0x8f0] sm:$0xff]
    %v2026 = vld [vmem:[#allocation12 + $0x8f8] sm:$0xff]
    %v2027 = vld [vmem:[#allocation12 + $0x900] sm:$0xff]
    %v2028 = vld [vmem:[#allocation12 + $0x908] sm:$0xff]
    %v2029 = vld [vmem:[#allocation12 + $0x910] sm:$0xff]
    %v2030 = vld [vmem:[#allocation12 + $0x918] sm:$0xff]
    %v2031 = vld [vmem:[#allocation12 + $0x920] sm:$0xff]
    %v2032 = vld [vmem:[#allocation12 + $0x928] sm:$0xff]
    %v2033 = vld [vmem:[#allocation12 + $0x930] sm:$0xff]
    %v2034 = vld [vmem:[#allocation12 + $0x938] sm:$0xff]
    %v2035 = vld [vmem:[#allocation12 + $0x940] sm:$0xff]
    %v2036 = vld [vmem:[#allocation12 + $0x948] sm:$0xff]
    %v2037 = vld [vmem:[#allocation12 + $0x950] sm:$0xff]
    %v2038 = vld [vmem:[#allocation12 + $0x958] sm:$0xff]
    %v2039 = vld [vmem:[#allocation12 + $0x960] sm:$0xff]
    %v2040 = vld [vmem:[#allocation12 + $0x968] sm:$0xff]
    %v2041 = vld [vmem:[#allocation12 + $0x970] sm:$0xff]
    %v2042 = vld [vmem:[#allocation12 + $0x978] sm:$0xff]
    %v2043 = vld [vmem:[#allocation12 + $0x980] sm:$0xff]
    %v2044 = vld [vmem:[#allocation12 + $0x988] sm:$0xff]
    %v2045 = vld [vmem:[#allocation12 + $0x990] sm:$0xff]
    %v2046 = vld [vmem:[#allocation12 + $0x998] sm:$0xff]
    %v2047 = vld [vmem:[#allocation12 + $0x9a0] sm:$0xff]
    %v2048 = vld [vmem:[#allocation12 + $0x9a8] sm:$0xff]
    %v2049 = vld [vmem:[#allocation12 + $0x9b0] sm:$0xff]
    %v2050 = vld [vmem:[#allocation12 + $0x9b8] sm:$0xff]
    %v2051 = vld [vmem:[#allocation12 + $0x9c0] sm:$0xff]
    %v2052 = vld [vmem:[#allocation12 + $0x9c8] sm:$0xff]
    %v2053 = vld [vmem:[#allocation12 + $0x9d0] sm:$0xff]
    %v2054 = vld [vmem:[#allocation12 + $0x9d8] sm:$0xff]
    %v2055 = vld [vmem:[#allocation12 + $0x9e0] sm:$0xff]
    %v2056 = vld [vmem:[#allocation12 + $0x9e8] sm:$0xff]
    %v2057 = vld [vmem:[#allocation12 + $0x9f0] sm:$0xff]
    %v2058 = vld [vmem:[#allocation12 + $0x9f8] sm:$0xff]
    %v2059 = vld [vmem:[#allocation12 + $0xa00] sm:$0xff]
    %v2060 = vld [vmem:[#allocation12 + $0xa08] sm:$0xff]
    %v2061 = vld [vmem:[#allocation12 + $0xa10] sm:$0xff]
    %v2062 = vld [vmem:[#allocation12 + $0xa18] sm:$0xff]
    %v2063 = vld [vmem:[#allocation12 + $0xa20] sm:$0xff]
    %v2064 = vld [vmem:[#allocation12 + $0xa28] sm:$0xff]
    %v2065 = vld [vmem:[#allocation12 + $0xa30] sm:$0xff]
    %v2066 = vld [vmem:[#allocation12 + $0xa38] sm:$0xff]
    %v2067 = vld [vmem:[#allocation12 + $0xa40] sm:$0xff]
    %v2068 = vld [vmem:[#allocation12 + $0xa48] sm:$0xff]
    %v2069 = vld [vmem:[#allocation12 + $0xa50] sm:$0xff]
    %v2070 = vld [vmem:[#allocation12 + $0xa58] sm:$0xff]
    %v2071 = vld [vmem:[#allocation12 + $0xa60] sm:$0xff]
    %v2072 = vld [vmem:[#allocation12 + $0xa68] sm:$0xff]
    %v2073 = vld [vmem:[#allocation12 + $0xa70] sm:$0xff]
    %v2074 = vld [vmem:[#allocation12 + $0xa78] sm:$0xff]
    %v2075 = vld [vmem:[#allocation12 + $0xa80] sm:$0xff]
    %v2076 = vld [vmem:[#allocation12 + $0xa88] sm:$0xff]
    %v2077 = vld [vmem:[#allocation12 + $0xa90] sm:$0xff]
    %v2078 = vld [vmem:[#allocation12 + $0xa98] sm:$0xff]
    %v2079 = vld [vmem:[#allocation12 + $0xaa0] sm:$0xff]
    %v2080 = vld [vmem:[#allocation12 + $0xaa8] sm:$0xff]
    %v2081 = vld [vmem:[#allocation12 + $0xab0] sm:$0xff]
    %v2082 = vld [vmem:[#allocation12 + $0xab8] sm:$0xff]
    %v2083 = vld [vmem:[#allocation12 + $0xac0] sm:$0xff]
    %v2084 = vld [vmem:[#allocation12 + $0xac8] sm:$0xff]
    %v2085 = vld [vmem:[#allocation12 + $0xad0] sm:$0xff]
    %v2086 = vld [vmem:[#allocation12 + $0xad8] sm:$0xff]
    %v2087 = vld [vmem:[#allocation12 + $0xae0] sm:$0xff]
    %v2088 = vld [vmem:[#allocation12 + $0xae8] sm:$0xff]
    %v2089 = vld [vmem:[#allocation12 + $0xaf0] sm:$0xff]
    %v2090 = vld [vmem:[#allocation12 + $0xaf8] sm:$0xff]
    %v2091 = vld [vmem:[#allocation12 + $0xb00] sm:$0xff]
    %v2092 = vld [vmem:[#allocation12 + $0xb08] sm:$0xff]
    %v2093 = vld [vmem:[#allocation12 + $0xb10] sm:$0xff]
    %v2094 = vld [vmem:[#allocation12 + $0xb18] sm:$0xff]
    %v2095 = vld [vmem:[#allocation12 + $0xb20] sm:$0xff]
    %v2096 = vld [vmem:[#allocation12 + $0xb28] sm:$0xff]
    %v2097 = vld [vmem:[#allocation12 + $0xb30] sm:$0xff]
    %v2098 = vld [vmem:[#allocation12 + $0xb38] sm:$0xff]
    %v2099 = vld [vmem:[#allocation12 + $0xb40] sm:$0xff]
    %v2100 = vld [vmem:[#allocation12 + $0xb48] sm:$0xff]
    %v2101 = vld [vmem:[#allocation12 + $0xb50] sm:$0xff]
    %v2102 = vld [vmem:[#allocation12 + $0xb58] sm:$0xff]
    %v2103 = vld [vmem:[#allocation12 + $0xb60] sm:$0xff]
    %v2104 = vld [vmem:[#allocation12 + $0xb68] sm:$0xff]
    %v2105 = vld [vmem:[#allocation12 + $0xb70] sm:$0xff]
    %v2106 = vld [vmem:[#allocation12 + $0xb78] sm:$0xff]
    %v2107 = vld [vmem:[#allocation12 + $0xb80] sm:$0xff]
    %v2108 = vld [vmem:[#allocation12 + $0xb88] sm:$0xff]
    %v2109 = vld [vmem:[#allocation12 + $0xb90] sm:$0xff]
    %v2110 = vld [vmem:[#allocation12 + $0xb98] sm:$0xff]
    %v2111 = vld [vmem:[#allocation12 + $0xba0] sm:$0xff]
    %v2112 = vld [vmem:[#allocation12 + $0xba8] sm:$0xff]
    %v2113 = vld [vmem:[#allocation12 + $0xbb0] sm:$0xff]
    %v2114 = vld [vmem:[#allocation12 + $0xbb8] sm:$0xff]
    %v2115 = vld [vmem:[#allocation12 + $0xbc0] sm:$0xff]
    %v2116 = vld [vmem:[#allocation12 + $0xbc8] sm:$0xff]
    %v2117 = vld [vmem:[#allocation12 + $0xbd0] sm:$0xff]
    %v2118 = vld [vmem:[#allocation12 + $0xbd8] sm:$0xff]
    %v2119 = vld [vmem:[#allocation12 + $0xbe0] sm:$0xff]
    %v2120 = vld [vmem:[#allocation12 + $0xbe8] sm:$0xff]
    %v2121 = vld [vmem:[#allocation12 + $0xbf0] sm:$0xff]
    %v2122 = vld [vmem:[#allocation12 + $0xbf8] sm:$0xff]
    %v2123 = vld [vmem:[#allocation12 + $0xc00] sm:$0xff]
    %v2124 = vld [vmem:[#allocation12 + $0xc08] sm:$0xff]
    %v2125 = vld [vmem:[#allocation12 + $0xc10] sm:$0xff]
    %v2126 = vld [vmem:[#allocation12 + $0xc18] sm:$0xff]
    %v2127 = vld [vmem:[#allocation12 + $0xc20] sm:$0xff]
    %v2128 = vld [vmem:[#allocation12 + $0xc28] sm:$0xff]
    %v2129 = vld [vmem:[#allocation12 + $0xc30] sm:$0xff]
    %v2130 = vld [vmem:[#allocation12 + $0xc38] sm:$0xff]
    %v2131 = vld [vmem:[#allocation12 + $0xc40] sm:$0xff]
    %v2132 = vld [vmem:[#allocation12 + $0xc48] sm:$0xff]
    %v2133 = vld [vmem:[#allocation12 + $0xc50] sm:$0xff]
    %v2134 = vld [vmem:[#allocation12 + $0xc58] sm:$0xff]
    %v2135 = vld [vmem:[#allocation12 + $0xc60] sm:$0xff]
    %v2136 = vld [vmem:[#allocation12 + $0xc68] sm:$0xff]
    %v2137 = vld [vmem:[#allocation12 + $0xc70] sm:$0xff]
    %v2138 = vld [vmem:[#allocation12 + $0xc78] sm:$0xff]
    %v2139 = vld [vmem:[#allocation12 + $0xc80] sm:$0xff]
    %v2140 = vld [vmem:[#allocation12 + $0xc88] sm:$0xff]
    %v2141 = vld [vmem:[#allocation12 + $0xc90] sm:$0xff]
    %v2142 = vld [vmem:[#allocation12 + $0xc98] sm:$0xff]
    %v2143 = vld [vmem:[#allocation12 + $0xca0] sm:$0xff]
    %v2144 = vld [vmem:[#allocation12 + $0xca8] sm:$0xff]
    %v2145 = vld [vmem:[#allocation12 + $0xcb0] sm:$0xff]
    %v2146 = vld [vmem:[#allocation12 + $0xcb8] sm:$0xff]
    %v2147 = vld [vmem:[#allocation12 + $0xcc0] sm:$0xff]
    %v2148 = vld [vmem:[#allocation12 + $0xcc8] sm:$0xff]
    %v2149 = vld [vmem:[#allocation12 + $0xcd0] sm:$0xff]
    %v2150 = vld [vmem:[#allocation12 + $0xcd8] sm:$0xff]
    %v2151 = vld [vmem:[#allocation12 + $0xce0] sm:$0xff]
    %v2152 = vld [vmem:[#allocation12 + $0xce8] sm:$0xff]
    %v2153 = vld [vmem:[#allocation12 + $0xcf0] sm:$0xff]
    %v2154 = vld [vmem:[#allocation12 + $0xcf8] sm:$0xff]
    %v2155 = vld [vmem:[#allocation12 + $0xd00] sm:$0xff]
    %v2156 = vld [vmem:[#allocation12 + $0xd08] sm:$0xff]
    %v2157 = vld [vmem:[#allocation12 + $0xd10] sm:$0xff]
    %v2158 = vld [vmem:[#allocation12 + $0xd18] sm:$0xff]
    %v2159 = vld [vmem:[#allocation12 + $0xd20] sm:$0xff]
    %v2160 = vld [vmem:[#allocation12 + $0xd28] sm:$0xff]
    %v2161 = vld [vmem:[#allocation12 + $0xd30] sm:$0xff]
    %v2162 = vld [vmem:[#allocation12 + $0xd38] sm:$0xff]
    %v2163 = vld [vmem:[#allocation12 + $0xd40] sm:$0xff]
    %v2164 = vld [vmem:[#allocation12 + $0xd48] sm:$0xff]
    %v2165 = vld [vmem:[#allocation12 + $0xd50] sm:$0xff]
    %v2166 = vld [vmem:[#allocation12 + $0xd58] sm:$0xff]
    %v2167 = vld [vmem:[#allocation12 + $0xd60] sm:$0xff]
    %v2168 = vld [vmem:[#allocation12 + $0xd68] sm:$0xff]
    %v2169 = vld [vmem:[#allocation12 + $0xd70] sm:$0xff]
    %v2170 = vld [vmem:[#allocation12 + $0xd78] sm:$0xff]
    %v2171 = vld [vmem:[#allocation12 + $0xd80] sm:$0xff]
    %v2172 = vld [vmem:[#allocation12 + $0xd88] sm:$0xff]
    %v2173 = vld [vmem:[#allocation12 + $0xd90] sm:$0xff]
    %v2174 = vld [vmem:[#allocation12 + $0xd98] sm:$0xff]
    %v2175 = vld [vmem:[#allocation12 + $0xda0] sm:$0xff]
    %v2176 = vld [vmem:[#allocation12 + $0xda8] sm:$0xff]
    %v2177 = vld [vmem:[#allocation12 + $0xdb0] sm:$0xff]
    %v2178 = vld [vmem:[#allocation12 + $0xdb8] sm:$0xff]
    %v2179 = vld [vmem:[#allocation12 + $0xdc0] sm:$0xff]
    %v2180 = vld [vmem:[#allocation12 + $0xdc8] sm:$0xff]
    %v2181 = vld [vmem:[#allocation12 + $0xdd0] sm:$0xff]
    %v2182 = vld [vmem:[#allocation12 + $0xdd8] sm:$0xff]
    %v2183 = vld [vmem:[#allocation12 + $0xde0] sm:$0xff]
    %v2184 = vld [vmem:[#allocation12 + $0xde8] sm:$0xff]
    %v2185 = vld [vmem:[#allocation12 + $0xdf0] sm:$0xff]
    %v2186 = vld [vmem:[#allocation12 + $0xdf8] sm:$0xff]
    %v2187 = vld [vmem:[#allocation12 + $0xe00] sm:$0xff]
    %v2188 = vld [vmem:[#allocation12 + $0xe08] sm:$0xff]
    %v2189 = vld [vmem:[#allocation12 + $0xe10] sm:$0xff]
    %v2190 = vld [vmem:[#allocation12 + $0xe18] sm:$0xff]
    %v2191 = vld [vmem:[#allocation12 + $0xe20] sm:$0xff]
    %v2192 = vld [vmem:[#allocation12 + $0xe28] sm:$0xff]
    %v2193 = vld [vmem:[#allocation12 + $0xe30] sm:$0xff]
    %v2194 = vld [vmem:[#allocation12 + $0xe38] sm:$0xff]
    %v2195 = vld [vmem:[#allocation12 + $0xe40] sm:$0xff]
    %v2196 = vld [vmem:[#allocation12 + $0xe48] sm:$0xff]
    %v2197 = vld [vmem:[#allocation12 + $0xe50] sm:$0xff]
    %v2198 = vld [vmem:[#allocation12 + $0xe58] sm:$0xff]
    %v2199 = vld [vmem:[#allocation12 + $0xe60] sm:$0xff]
    %v2200 = vld [vmem:[#allocation12 + $0xe68] sm:$0xff]
    %v2201 = vld [vmem:[#allocation12 + $0xe70] sm:$0xff]
    %v2202 = vld [vmem:[#allocation12 + $0xe78] sm:$0xff]
    %v2203 = vld [vmem:[#allocation12 + $0xe80] sm:$0xff]
    %v2204 = vld [vmem:[#allocation12 + $0xe88] sm:$0xff]
    %v2205 = vld [vmem:[#allocation12 + $0xe90] sm:$0xff]
    %v2206 = vld [vmem:[#allocation12 + $0xe98] sm:$0xff]
    %v2207 = vld [vmem:[#allocation12 + $0xea0] sm:$0xff]
    %v2208 = vld [vmem:[#allocation12 + $0xea8] sm:$0xff]
    %v2209 = vld [vmem:[#allocation12 + $0xeb0] sm:$0xff]
    %v2210 = vld [vmem:[#allocation12 + $0xeb8] sm:$0xff]
    %v2211 = vld [vmem:[#allocation12 + $0xec0] sm:$0xff]
    %v2212 = vld [vmem:[#allocation12 + $0xec8] sm:$0xff]
    %v2213 = vld [vmem:[#allocation12 + $0xed0] sm:$0xff]
    %v2214 = vld [vmem:[#allocation12 + $0xed8] sm:$0xff]
    %v2215 = vld [vmem:[#allocation12 + $0xee0] sm:$0xff]
    %v2216 = vld [vmem:[#allocation12 + $0xee8] sm:$0xff]
    %v2217 = vld [vmem:[#allocation12 + $0xef0] sm:$0xff]
    %v2218 = vld [vmem:[#allocation12 + $0xef8] sm:$0xff]
    %v2219 = vld [vmem:[#allocation12 + $0xf00] sm:$0xff]
    %v2220 = vld [vmem:[#allocation12 + $0xf08] sm:$0xff]
    %v2221 = vld [vmem:[#allocation12 + $0xf10] sm:$0xff]
    %v2222 = vld [vmem:[#allocation12 + $0xf18] sm:$0xff]
    %v2223 = vld [vmem:[#allocation12 + $0xf20] sm:$0xff]
    %v2224 = vld [vmem:[#allocation12 + $0xf28] sm:$0xff]
    %v2225 = vld [vmem:[#allocation12 + $0xf30] sm:$0xff]
    %v2226 = vld [vmem:[#allocation12 + $0xf38] sm:$0xff]
    %v2227 = vld [vmem:[#allocation12 + $0xf40] sm:$0xff]
    %v2228 = vld [vmem:[#allocation12 + $0xf48] sm:$0xff]
    %v2229 = vld [vmem:[#allocation12 + $0xf50] sm:$0xff]
    %v2230 = vld [vmem:[#allocation12 + $0xf58] sm:$0xff]
    %v2231 = vld [vmem:[#allocation12 + $0xf60] sm:$0xff]
    %v2232 = vld [vmem:[#allocation12 + $0xf68] sm:$0xff]
    %v2233 = vld [vmem:[#allocation12 + $0xf70] sm:$0xff]
    %v2234 = vld [vmem:[#allocation12 + $0xf78] sm:$0xff]
    %v2235 = vld [vmem:[#allocation12 + $0xf80] sm:$0xff]
    %v2236 = vld [vmem:[#allocation12 + $0xf88] sm:$0xff]
    %v2237 = vld [vmem:[#allocation12 + $0xf90] sm:$0xff]
    %v2238 = vld [vmem:[#allocation12 + $0xf98] sm:$0xff]
    %v2239 = vld [vmem:[#allocation12 + $0xfa0] sm:$0xff]
    %v2240 = vld [vmem:[#allocation12 + $0xfa8] sm:$0xff]
    %v2241 = vld [vmem:[#allocation12 + $0xfb0] sm:$0xff]
    %v2242 = vld [vmem:[#allocation12 + $0xfb8] sm:$0xff]
    %v2243 = vld [vmem:[#allocation12 + $0xfc0] sm:$0xff]
    %v2244 = vld [vmem:[#allocation12 + $0xfc8] sm:$0xff]
    %v2245 = vld [vmem:[#allocation12 + $0xfd0] sm:$0xff]
    %v2246 = vld [vmem:[#allocation12 + $0xfd8] sm:$0xff]
    %v2247 = vld [vmem:[#allocation12 + $0xfe0] sm:$0xff]
    %v2248 = vld [vmem:[#allocation12 + $0xfe8] sm:$0xff]
    %v2249 = vld [vmem:[#allocation12 + $0xff0] sm:$0xff]
    %v2250 = vld [vmem:[#allocation12 + $0xff8] sm:$0xff]
    %v2251 = vld [vmem:[#allocation13] sm:$0xf]
    %v2253 = vlaneseq
    %v2254 = vshrl.u32 %v2253, 7
    %v2255 = vsub.s32 0, %v2254
    %v2256 = vrot.slane %v2251, %v2255
    %v2257 = vlaneseq
    %v2258 = vshrl.u32 %v2257, 7
    %v2259 = vsub.s32 1, %v2258
    %v2260 = vrot.slane %v2251, %v2259
    %v2261 = vlaneseq
    %v2262 = vshrl.u32 %v2261, 7
    %v2263 = vsub.s32 2, %v2262
    %v2264 = vrot.slane %v2251, %v2263
    %v2265 = vlaneseq
    %v2266 = vshrl.u32 %v2265, 7
    %v2267 = vsub.s32 3, %v2266
    %v2268 = vrot.slane %v2251, %v2267
    %2273 = vmatprep.subr.mxu0 %v1740
    %2274 = vmatpush1.msra.mxu0 %v1739
    %2275 = vmatprep.subr.mxu0 %v1744
    %2276 = vmatpush1.msra.mxu0 %v1743
    %2277 = vmatprep.subr.mxu0 %v1748
    %2278 = vmatpush1.msra.mxu0 %v1747
    %2279 = vmatprep.subr.mxu0 %v1752
    %2280 = vmatpush1.msra.mxu0 %v1751
    %2281 = vmatprep.subr.mxu0 %v1756
    %2282 = vmatpush1.msra.mxu0 %v1755
    %2283 = vmatprep.subr.mxu0 %v1760
    %2284 = vmatpush1.msra.mxu0 %v1759
    %2285 = vmatprep.subr.mxu0 %v1764
    %2286 = vmatpush1.msra.mxu0 %v1763
    %2287 = vmatprep.subr.mxu0 %v1768
    %2288 = vmatpush1.msra.mxu0 %v1767
    %2289 = vmatprep.subr.mxu0 %v1772
    %2290 = vmatpush1.msra.mxu0 %v1771
    %2291 = vmatprep.subr.mxu0 %v1776
    %2292 = vmatpush1.msra.mxu0 %v1775
    %2293 = vmatprep.subr.mxu0 %v1780
    %2294 = vmatpush1.msra.mxu0 %v1779
    %2295 = vmatprep.subr.mxu0 %v1784
    %2296 = vmatpush1.msra.mxu0 %v1783
    %2297 = vmatprep.subr.mxu0 %v1788
    %2298 = vmatpush1.msra.mxu0 %v1787
    %2299 = vmatprep.subr.mxu0 %v1792
    %2300 = vmatpush1.msra.mxu0 %v1791
    %2301 = vmatprep.subr.mxu0 %v1796
    %2302 = vmatpush1.msra.mxu0 %v1795
    %2303 = vmatprep.subr.mxu0 %v1800
    %2304 = vmatpush1.msra.mxu0 %v1799
    %2305 = vmatprep.subr.mxu0 %v1804
    %2306 = vmatpush1.msra.mxu0 %v1803
    %2307 = vmatprep.subr.mxu0 %v1808
    %2308 = vmatpush1.msra.mxu0 %v1807
    %2309 = vmatprep.subr.mxu0 %v1812
    %2310 = vmatpush1.msra.mxu0 %v1811
    %2311 = vmatprep.subr.mxu0 %v1816
    %2312 = vmatpush1.msra.mxu0 %v1815
    %2313 = vmatprep.subr.mxu0 %v1820
    %2314 = vmatpush1.msra.mxu0 %v1819
    %2315 = vmatprep.subr.mxu0 %v1824
    %2316 = vmatpush1.msra.mxu0 %v1823
    %2317 = vmatprep.subr.mxu0 %v1828
    %2318 = vmatpush1.msra.mxu0 %v1827
    %2319 = vmatprep.subr.mxu0 %v1832
    %2320 = vmatpush1.msra.mxu0 %v1831
    %2321 = vmatprep.subr.mxu0 %v1836
    %2322 = vmatpush1.msra.mxu0 %v1835
    %2323 = vmatprep.subr.mxu0 %v1840
    %2324 = vmatpush1.msra.mxu0 %v1839
    %2325 = vmatprep.subr.mxu0 %v1844
    %2326 = vmatpush1.msra.mxu0 %v1843
    %2327 = vmatprep.subr.mxu0 %v1848
    %2328 = vmatpush1.msra.mxu0 %v1847
    %2329 = vmatprep.subr.mxu0 %v1852
    %2330 = vmatpush1.msra.mxu0 %v1851
    %2331 = vmatprep.subr.mxu0 %v1856
    %2332 = vmatpush1.msra.mxu0 %v1855
    %2333 = vmatprep.subr.mxu0 %v1860
    %2334 = vmatpush1.msra.mxu0 %v1859
    %2335 = vmatprep.subr.mxu0 %v1864
    %2336 = vmatpush1.msra.mxu0 %v1863
    %2337 = vmatprep.mubr.f32.mxu0 %v1732
    %2338 = vmatmul.mubr.f32.gmra.mrb[0].mxu0 %v1731
    %v2339 = vpop.f32.mrb[0].mxu0
    %v2340 = vadd.f32 %v2256, %v2339
    %v2341 = vpop.f32.mrb[0].mxu0
    %v2342 = vadd.f32 %v2260, %v2341
    %2343 = vdwg.mxu0
    %2344 = vmatprep.subr.mxu0 %v1868
    %2345 = vmatpush1.msra.mxu0 %v1867
    %2346 = vmatprep.subr.mxu0 %v1872
    %2347 = vmatpush1.msra.mxu0 %v1871
    %2348 = vmatprep.subr.mxu0 %v1876
    %2349 = vmatpush1.msra.mxu0 %v1875
    %2350 = vmatprep.subr.mxu0 %v1880
    %2351 = vmatpush1.msra.mxu0 %v1879
    %2352 = vmatprep.subr.mxu0 %v1884
    %2353 = vmatpush1.msra.mxu0 %v1883
    %2354 = vmatprep.subr.mxu0 %v1888
    %2355 = vmatpush1.msra.mxu0 %v1887
    %2356 = vmatprep.subr.mxu0 %v1892
    %2357 = vmatpush1.msra.mxu0 %v1891
    %2358 = vmatprep.subr.mxu0 %v1896
    %2359 = vmatpush1.msra.mxu0 %v1895
    %2360 = vmatprep.subr.mxu0 %v1900
    %2361 = vmatpush1.msra.mxu0 %v1899
    %2362 = vmatprep.subr.mxu0 %v1904
    %2363 = vmatpush1.msra.mxu0 %v1903
    %2364 = vmatprep.subr.mxu0 %v1908
    %2365 = vmatpush1.msra.mxu0 %v1907
    %2366 = vmatprep.subr.mxu0 %v1912
    %2367 = vmatpush1.msra.mxu0 %v1911
    %2368 = vmatprep.subr.mxu0 %v1916
    %2369 = vmatpush1.msra.mxu0 %v1915
    %2370 = vmatprep.subr.mxu0 %v1920
    %2371 = vmatpush1.msra.mxu0 %v1919
    %2372 = vmatprep.subr.mxu0 %v1924
    %2373 = vmatpush1.msra.mxu0 %v1923
    %2374 = vmatprep.subr.mxu0 %v1928
    %2375 = vmatpush1.msra.mxu0 %v1927
    %2376 = vmatprep.subr.mxu0 %v1932
    %2377 = vmatpush1.msra.mxu0 %v1931
    %2378 = vmatprep.subr.mxu0 %v1936
    %2379 = vmatpush1.msra.mxu0 %v1935
    %2380 = vmatprep.subr.mxu0 %v1940
    %2381 = vmatpush1.msra.mxu0 %v1939
    %2382 = vmatprep.subr.mxu0 %v1944
    %2383 = vmatpush1.msra.mxu0 %v1943
    %2384 = vmatprep.subr.mxu0 %v1948
    %2385 = vmatpush1.msra.mxu0 %v1947
    %2386 = vmatprep.subr.mxu0 %v1952
    %2387 = vmatpush1.msra.mxu0 %v1951
    %2388 = vmatprep.subr.mxu0 %v1956
    %2389 = vmatpush1.msra.mxu0 %v1955
    %2390 = vmatprep.subr.mxu0 %v1960
    %2391 = vmatpush1.msra.mxu0 %v1959
    %2392 = vmatprep.subr.mxu0 %v1964
    %2393 = vmatpush1.msra.mxu0 %v1963
    %2394 = vmatprep.subr.mxu0 %v1968
    %2395 = vmatpush1.msra.mxu0 %v1967
    %2396 = vmatprep.subr.mxu0 %v1972
    %2397 = vmatpush1.msra.mxu0 %v1971
    %2398 = vmatprep.subr.mxu0 %v1976
    %2399 = vmatpush1.msra.mxu0 %v1975
    %2400 = vmatprep.subr.mxu0 %v1980
    %2401 = vmatpush1.msra.mxu0 %v1979
    %2402 = vmatprep.subr.mxu0 %v1984
    %2403 = vmatpush1.msra.mxu0 %v1983
    %2404 = vmatprep.subr.mxu0 %v1988
    %2405 = vmatpush1.msra.mxu0 %v1987
    %2406 = vmatprep.subr.mxu0 %v1992
    %2407 = vmatpush1.msra.mxu0 %v1991
    %2408 = vmatprep.mubr.f32.mxu0 %v1734
    %2409 = vmatmul.mubr.f32.gmra.mrb[0].mxu0 %v1733
    %v2410 = vpop.f32.mrb[0].mxu0
    %v2411 = vadd.f32 %v2340, %v2410
    %v2412 = vpop.f32.mrb[0].mxu0
    %v2413 = vadd.f32 %v2342, %v2412
    %2414 = vdwg.mxu0
    %2415 = vmatprep.subr.mxu0 %v1996
    %2416 = vmatpush1.msra.mxu0 %v1995
    %2417 = vmatprep.subr.mxu0 %v2000
    %2418 = vmatpush1.msra.mxu0 %v1999
    %2419 = vmatprep.subr.mxu0 %v2004
    %2420 = vmatpush1.msra.mxu0 %v2003
    %2421 = vmatprep.subr.mxu0 %v2008
    %2422 = vmatpush1.msra.mxu0 %v2007
    %2423 = vmatprep.subr.mxu0 %v2012
    %2424 = vmatpush1.msra.mxu0 %v2011
    %2425 = vmatprep.subr.mxu0 %v2016
    %2426 = vmatpush1.msra.mxu0 %v2015
    %2427 = vmatprep.subr.mxu0 %v2020
    %2428 = vmatpush1.msra.mxu0 %v2019
    %2429 = vmatprep.subr.mxu0 %v2024
    %2430 = vmatpush1.msra.mxu0 %v2023
    %2431 = vmatprep.subr.mxu0 %v2028
    %2432 = vmatpush1.msra.mxu0 %v2027
    %2433 = vmatprep.subr.mxu0 %v2032
    %2434 = vmatpush1.msra.mxu0 %v2031
    %2435 = vmatprep.subr.mxu0 %v2036
    %2436 = vmatpush1.msra.mxu0 %v2035
    %2437 = vmatprep.subr.mxu0 %v2040
    %2438 = vmatpush1.msra.mxu0 %v2039
    %2439 = vmatprep.subr.mxu0 %v2044
    %2440 = vmatpush1.msra.mxu0 %v2043
    %2441 = vmatprep.subr.mxu0 %v2048
    %2442 = vmatpush1.msra.mxu0 %v2047
    %2443 = vmatprep.subr.mxu0 %v2052
    %2444 = vmatpush1.msra.mxu0 %v2051
    %2445 = vmatprep.subr.mxu0 %v2056
    %2446 = vmatpush1.msra.mxu0 %v2055
    %2447 = vmatprep.subr.mxu0 %v2060
    %2448 = vmatpush1.msra.mxu0 %v2059
    %2449 = vmatprep.subr.mxu0 %v2064
    %2450 = vmatpush1.msra.mxu0 %v2063
    %2451 = vmatprep.subr.mxu0 %v2068
    %2452 = vmatpush1.msra.mxu0 %v2067
    %2453 = vmatprep.subr.mxu0 %v2072
    %2454 = vmatpush1.msra.mxu0 %v2071
    %2455 = vmatprep.subr.mxu0 %v2076
    %2456 = vmatpush1.msra.mxu0 %v2075
    %2457 = vmatprep.subr.mxu0 %v2080
    %2458 = vmatpush1.msra.mxu0 %v2079
    %2459 = vmatprep.subr.mxu0 %v2084
    %2460 = vmatpush1.msra.mxu0 %v2083
    %2461 = vmatprep.subr.mxu0 %v2088
    %2462 = vmatpush1.msra.mxu0 %v2087
    %2463 = vmatprep.subr.mxu0 %v2092
    %2464 = vmatpush1.msra.mxu0 %v2091
    %2465 = vmatprep.subr.mxu0 %v2096
    %2466 = vmatpush1.msra.mxu0 %v2095
    %2467 = vmatprep.subr.mxu0 %v2100
    %2468 = vmatpush1.msra.mxu0 %v2099
    %2469 = vmatprep.subr.mxu0 %v2104
    %2470 = vmatpush1.msra.mxu0 %v2103
    %2471 = vmatprep.subr.mxu0 %v2108
    %2472 = vmatpush1.msra.mxu0 %v2107
    %2473 = vmatprep.subr.mxu0 %v2112
    %2474 = vmatpush1.msra.mxu0 %v2111
    %2475 = vmatprep.subr.mxu0 %v2116
    %2476 = vmatpush1.msra.mxu0 %v2115
    %2477 = vmatprep.subr.mxu0 %v2120
    %2478 = vmatpush1.msra.mxu0 %v2119
    %2479 = vmatprep.mubr.f32.mxu0 %v1736
    %2480 = vmatmul.mubr.f32.gmra.mrb[0].mxu0 %v1735
    %v2481 = vpop.f32.mrb[0].mxu0
    %v2482 = vadd.f32 %v2411, %v2481
    %v2483 = vpop.f32.mrb[0].mxu0
    %v2484 = vadd.f32 %v2413, %v2483
    %2485 = vdwg.mxu0
    %2486 = vmatprep.subr.mxu0 %v2124
    %2487 = vmatpush1.msra.mxu0 %v2123
    %2488 = vmatprep.subr.mxu0 %v2128
    %2489 = vmatpush1.msra.mxu0 %v2127
    %2490 = vmatprep.subr.mxu0 %v2132
    %2491 = vmatpush1.msra.mxu0 %v2131
    %2492 = vmatprep.subr.mxu0 %v2136
    %2493 = vmatpush1.msra.mxu0 %v2135
    %2494 = vmatprep.subr.mxu0 %v2140
    %2495 = vmatpush1.msra.mxu0 %v2139
    %2496 = vmatprep.subr.mxu0 %v2144
    %2497 = vmatpush1.msra.mxu0 %v2143
    %2498 = vmatprep.subr.mxu0 %v2148
    %2499 = vmatpush1.msra.mxu0 %v2147
    %2500 = vmatprep.subr.mxu0 %v2152
    %2501 = vmatpush1.msra.mxu0 %v2151
    %2502 = vmatprep.subr.mxu0 %v2156
    %2503 = vmatpush1.msra.mxu0 %v2155
    %2504 = vmatprep.subr.mxu0 %v2160
    %2505 = vmatpush1.msra.mxu0 %v2159
    %2506 = vmatprep.subr.mxu0 %v2164
    %2507 = vmatpush1.msra.mxu0 %v2163
    %2508 = vmatprep.subr.mxu0 %v2168
    %2509 = vmatpush1.msra.mxu0 %v2167
    %2510 = vmatprep.subr.mxu0 %v2172
    %2511 = vmatpush1.msra.mxu0 %v2171
    %2512 = vmatprep.subr.mxu0 %v2176
    %2513 = vmatpush1.msra.mxu0 %v2175
    %2514 = vmatprep.subr.mxu0 %v2180
    %2515 = vmatpush1.msra.mxu0 %v2179
    %2516 = vmatprep.subr.mxu0 %v2184
    %2517 = vmatpush1.msra.mxu0 %v2183
    %2518 = vmatprep.subr.mxu0 %v2188
    %2519 = vmatpush1.msra.mxu0 %v2187
    %2520 = vmatprep.subr.mxu0 %v2192
    %2521 = vmatpush1.msra.mxu0 %v2191
    %2522 = vmatprep.subr.mxu0 %v2196
    %2523 = vmatpush1.msra.mxu0 %v2195
    %2524 = vmatprep.subr.mxu0 %v2200
    %2525 = vmatpush1.msra.mxu0 %v2199
    %2526 = vmatprep.subr.mxu0 %v2204
    %2527 = vmatpush1.msra.mxu0 %v2203
    %2528 = vmatprep.subr.mxu0 %v2208
    %2529 = vmatpush1.msra.mxu0 %v2207
    %2530 = vmatprep.subr.mxu0 %v2212
    %2531 = vmatpush1.msra.mxu0 %v2211
    %2532 = vmatprep.subr.mxu0 %v2216
    %2533 = vmatpush1.msra.mxu0 %v2215
    %2534 = vmatprep.subr.mxu0 %v2220
    %2535 = vmatpush1.msra.mxu0 %v2219
    %2536 = vmatprep.subr.mxu0 %v2224
    %2537 = vmatpush1.msra.mxu0 %v2223
    %2538 = vmatprep.subr.mxu0 %v2228
    %2539 = vmatpush1.msra.mxu0 %v2227
    %2540 = vmatprep.subr.mxu0 %v2232
    %2541 = vmatpush1.msra.mxu0 %v2231
    %2542 = vmatprep.subr.mxu0 %v2236
    %2543 = vmatpush1.msra.mxu0 %v2235
    %2544 = vmatprep.subr.mxu0 %v2240
    %2545 = vmatpush1.msra.mxu0 %v2239
    %2546 = vmatprep.subr.mxu0 %v2244
    %2547 = vmatpush1.msra.mxu0 %v2243
    %2548 = vmatprep.subr.mxu0 %v2248
    %2549 = vmatpush1.msra.mxu0 %v2247
    %2550 = vmatprep.mubr.f32.mxu0 %v1738
    %2551 = vmatmul.mubr.f32.gmra.mrb[0].mxu0 %v1737
    %v2552 = vpop.f32.mrb[0].mxu0
    %v2553 = vadd.f32 %v2482, %v2552
    %v2554 = vpop.f32.mrb[0].mxu0
    %v2555 = vadd.f32 %v2484, %v2554
    %2556 = vdwg.mxu0
    %2557 = vmatprep.subr.mxu0 %v1742
    %2558 = vmatpush1.msra.mxu0 %v1741
    %2559 = vmatprep.subr.mxu0 %v1746
    %2560 = vmatpush1.msra.mxu0 %v1745
    %2561 = vmatprep.subr.mxu0 %v1750
    %2562 = vmatpush1.msra.mxu0 %v1749
    %2563 = vmatprep.subr.mxu0 %v1754
    %2564 = vmatpush1.msra.mxu0 %v1753
    %2565 = vmatprep.subr.mxu0 %v1758
    %2566 = vmatpush1.msra.mxu0 %v1757
    %2567 = vmatprep.subr.mxu0 %v1762
    %2568 = vmatpush1.msra.mxu0 %v1761
    %2569 = vmatprep.subr.mxu0 %v1766
    %2570 = vmatpush1.msra.mxu0 %v1765
    %2571 = vmatprep.subr.mxu0 %v1770
    %2572 = vmatpush1.msra.mxu0 %v1769
    %2573 = vmatprep.subr.mxu0 %v1774
    %2574 = vmatpush1.msra.mxu0 %v1773
    %2575 = vmatprep.subr.mxu0 %v1778
    %2576 = vmatpush1.msra.mxu0 %v1777
    %2577 = vmatprep.subr.mxu0 %v1782
    %2578 = vmatpush1.msra.mxu0 %v1781
    %2579 = vmatprep.subr.mxu0 %v1786
    %2580 = vmatpush1.msra.mxu0 %v1785
    %2581 = vmatprep.subr.mxu0 %v1790
    %2582 = vmatpush1.msra.mxu0 %v1789
    %2583 = vmatprep.subr.mxu0 %v1794
    %2584 = vmatpush1.msra.mxu0 %v1793
    %2585 = vmatprep.subr.mxu0 %v1798
    %2586 = vmatpush1.msra.mxu0 %v1797
    %2587 = vmatprep.subr.mxu0 %v1802
    %2588 = vmatpush1.msra.mxu0 %v1801
    %2589 = vmatprep.subr.mxu0 %v1806
    %2590 = vmatpush1.msra.mxu0 %v1805
    %2591 = vmatprep.subr.mxu0 %v1810
    %2592 = vmatpush1.msra.mxu0 %v1809
    %2593 = vmatprep.subr.mxu0 %v1814
    %2594 = vmatpush1.msra.mxu0 %v1813
    %2595 = vmatprep.subr.mxu0 %v1818
    %2596 = vmatpush1.msra.mxu0 %v1817
    %2597 = vmatprep.subr.mxu0 %v1822
    %2598 = vmatpush1.msra.mxu0 %v1821
    %2599 = vmatprep.subr.mxu0 %v1826
    %2600 = vmatpush1.msra.mxu0 %v1825
    %2601 = vmatprep.subr.mxu0 %v1830
    %2602 = vmatpush1.msra.mxu0 %v1829
    %2603 = vmatprep.subr.mxu0 %v1834
    %2604 = vmatpush1.msra.mxu0 %v1833
    %2605 = vmatprep.subr.mxu0 %v1838
    %2606 = vmatpush1.msra.mxu0 %v1837
    %2607 = vmatprep.subr.mxu0 %v1842
    %2608 = vmatpush1.msra.mxu0 %v1841
    %2609 = vmatprep.subr.mxu0 %v1846
    %2610 = vmatpush1.msra.mxu0 %v1845
    %2611 = vmatprep.subr.mxu0 %v1850
    %2612 = vmatpush1.msra.mxu0 %v1849
    %2613 = vmatprep.subr.mxu0 %v1854
    %2614 = vmatpush1.msra.mxu0 %v1853
    %2615 = vmatprep.subr.mxu0 %v1858
    %2616 = vmatpush1.msra.mxu0 %v1857
    %2617 = vmatprep.subr.mxu0 %v1862
    %2618 = vmatpush1.msra.mxu0 %v1861
    %2619 = vmatprep.subr.mxu0 %v1866
    %2620 = vmatpush1.msra.mxu0 %v1865
    %2621 = vmatprep.mubr.f32.mxu0 %v1732
    %2622 = vmatmul.mubr.f32.gmra.mrb[0].mxu0 %v1731
    %v2623 = vpop.f32.mrb[0].mxu0
    %v2624 = vadd.f32 %v2264, %v2623
    %v2625 = vpop.f32.mrb[0].mxu0
    %v2626 = vadd.f32 %v2268, %v2625
    %2627 = vdwg.mxu0
    %2628 = vmatprep.subr.mxu0 %v1870
    %2629 = vmatpush1.msra.mxu0 %v1869
    %2630 = vmatprep.subr.mxu0 %v1874
    %2631 = vmatpush1.msra.mxu0 %v1873
    %2632 = vmatprep.subr.mxu0 %v1878
    %2633 = vmatpush1.msra.mxu0 %v1877
    %2634 = vmatprep.subr.mxu0 %v1882
    %2635 = vmatpush1.msra.mxu0 %v1881
    %2636 = vmatprep.subr.mxu0 %v1886
    %2637 = vmatpush1.msra.mxu0 %v1885
    %2638 = vmatprep.subr.mxu0 %v1890
    %2639 = vmatpush1.msra.mxu0 %v1889
    %2640 = vmatprep.subr.mxu0 %v1894
    %2641 = vmatpush1.msra.mxu0 %v1893
    %2642 = vmatprep.subr.mxu0 %v1898
    %2643 = vmatpush1.msra.mxu0 %v1897
    %2644 = vmatprep.subr.mxu0 %v1902
    %2645 = vmatpush1.msra.mxu0 %v1901
    %2646 = vmatprep.subr.mxu0 %v1906
    %2647 = vmatpush1.msra.mxu0 %v1905
    %2648 = vmatprep.subr.mxu0 %v1910
    %2649 = vmatpush1.msra.mxu0 %v1909
    %2650 = vmatprep.subr.mxu0 %v1914
    %2651 = vmatpush1.msra.mxu0 %v1913
    %2652 = vmatprep.subr.mxu0 %v1918
    %2653 = vmatpush1.msra.mxu0 %v1917
    %2654 = vmatprep.subr.mxu0 %v1922
    %2655 = vmatpush1.msra.mxu0 %v1921
    %2656 = vmatprep.subr.mxu0 %v1926
    %2657 = vmatpush1.msra.mxu0 %v1925
    %2658 = vmatprep.subr.mxu0 %v1930
    %2659 = vmatpush1.msra.mxu0 %v1929
    %2660 = vmatprep.subr.mxu0 %v1934
    %2661 = vmatpush1.msra.mxu0 %v1933
    %2662 = vmatprep.subr.mxu0 %v1938
    %2663 = vmatpush1.msra.mxu0 %v1937
    %2664 = vmatprep.subr.mxu0 %v1942
    %2665 = vmatpush1.msra.mxu0 %v1941
    %2666 = vmatprep.subr.mxu0 %v1946
    %2667 = vmatpush1.msra.mxu0 %v1945
    %2668 = vmatprep.subr.mxu0 %v1950
    %2669 = vmatpush1.msra.mxu0 %v1949
    %2670 = vmatprep.subr.mxu0 %v1954
    %2671 = vmatpush1.msra.mxu0 %v1953
    %2672 = vmatprep.subr.mxu0 %v1958
    %2673 = vmatpush1.msra.mxu0 %v1957
    %2674 = vmatprep.subr.mxu0 %v1962
    %2675 = vmatpush1.msra.mxu0 %v1961
    %2676 = vmatprep.subr.mxu0 %v1966
    %2677 = vmatpush1.msra.mxu0 %v1965
    %2678 = vmatprep.subr.mxu0 %v1970
    %2679 = vmatpush1.msra.mxu0 %v1969
    %2680 = vmatprep.subr.mxu0 %v1974
    %2681 = vmatpush1.msra.mxu0 %v1973
    %2682 = vmatprep.subr.mxu0 %v1978
    %2683 = vmatpush1.msra.mxu0 %v1977
    %2684 = vmatprep.subr.mxu0 %v1982
    %2685 = vmatpush1.msra.mxu0 %v1981
    %2686 = vmatprep.subr.mxu0 %v1986
    %2687 = vmatpush1.msra.mxu0 %v1985
    %2688 = vmatprep.subr.mxu0 %v1990
    %2689 = vmatpush1.msra.mxu0 %v1989
    %2690 = vmatprep.subr.mxu0 %v1994
    %2691 = vmatpush1.msra.mxu0 %v1993
    %2692 = vmatprep.mubr.f32.mxu0 %v1734
    %2693 = vmatmul.mubr.f32.gmra.mrb[0].mxu0 %v1733
    %v2694 = vpop.f32.mrb[0].mxu0
    %v2695 = vadd.f32 %v2624, %v2694
    %v2696 = vpop.f32.mrb[0].mxu0
    %v2697 = vadd.f32 %v2626, %v2696
    %2698 = vdwg.mxu0
    %2699 = vmatprep.subr.mxu0 %v1998
    %2700 = vmatpush1.msra.mxu0 %v1997
    %2701 = vmatprep.subr.mxu0 %v2002
    %2702 = vmatpush1.msra.mxu0 %v2001
    %2703 = vmatprep.subr.mxu0 %v2006
    %2704 = vmatpush1.msra.mxu0 %v2005
    %2705 = vmatprep.subr.mxu0 %v2010
    %2706 = vmatpush1.msra.mxu0 %v2009
    %2707 = vmatprep.subr.mxu0 %v2014
    %2708 = vmatpush1.msra.mxu0 %v2013
    %2709 = vmatprep.subr.mxu0 %v2018
    %2710 = vmatpush1.msra.mxu0 %v2017
    %2711 = vmatprep.subr.mxu0 %v2022
    %2712 = vmatpush1.msra.mxu0 %v2021
    %2713 = vmatprep.subr.mxu0 %v2026
    %2714 = vmatpush1.msra.mxu0 %v2025
    %2715 = vmatprep.subr.mxu0 %v2030
    %2716 = vmatpush1.msra.mxu0 %v2029
    %2717 = vmatprep.subr.mxu0 %v2034
    %2718 = vmatpush1.msra.mxu0 %v2033
    %2719 = vmatprep.subr.mxu0 %v2038
    %2720 = vmatpush1.msra.mxu0 %v2037
    %2721 = vmatprep.subr.mxu0 %v2042
    %2722 = vmatpush1.msra.mxu0 %v2041
    %2723 = vmatprep.subr.mxu0 %v2046
    %2724 = vmatpush1.msra.mxu0 %v2045
    %2725 = vmatprep.subr.mxu0 %v2050
    %2726 = vmatpush1.msra.mxu0 %v2049
    %2727 = vmatprep.subr.mxu0 %v2054
    %2728 = vmatpush1.msra.mxu0 %v2053
    %2729 = vmatprep.subr.mxu0 %v2058
    %2730 = vmatpush1.msra.mxu0 %v2057
    %2731 = vmatprep.subr.mxu0 %v2062
    %2732 = vmatpush1.msra.mxu0 %v2061
    %2733 = vmatprep.subr.mxu0 %v2066
    %2734 = vmatpush1.msra.mxu0 %v2065
    %2735 = vmatprep.subr.mxu0 %v2070
    %2736 = vmatpush1.msra.mxu0 %v2069
    %2737 = vmatprep.subr.mxu0 %v2074
    %2738 = vmatpush1.msra.mxu0 %v2073
    %2739 = vmatprep.subr.mxu0 %v2078
    %2740 = vmatpush1.msra.mxu0 %v2077
    %2741 = vmatprep.subr.mxu0 %v2082
    %2742 = vmatpush1.msra.mxu0 %v2081
    %2743 = vmatprep.subr.mxu0 %v2086
    %2744 = vmatpush1.msra.mxu0 %v2085
    %2745 = vmatprep.subr.mxu0 %v2090
    %2746 = vmatpush1.msra.mxu0 %v2089
    %2747 = vmatprep.subr.mxu0 %v2094
    %2748 = vmatpush1.msra.mxu0 %v2093
    %2749 = vmatprep.subr.mxu0 %v2098
    %2750 = vmatpush1.msra.mxu0 %v2097
    %2751 = vmatprep.subr.mxu0 %v2102
    %2752 = vmatpush1.msra.mxu0 %v2101
    %2753 = vmatprep.subr.mxu0 %v2106
    %2754 = vmatpush1.msra.mxu0 %v2105
    %2755 = vmatprep.subr.mxu0 %v2110
    %2756 = vmatpush1.msra.mxu0 %v2109
    %2757 = vmatprep.subr.mxu0 %v2114
    %2758 = vmatpush1.msra.mxu0 %v2113
    %2759 = vmatprep.subr.mxu0 %v2118
    %2760 = vmatpush1.msra.mxu0 %v2117
    %2761 = vmatprep.subr.mxu0 %v2122
    %2762 = vmatpush1.msra.mxu0 %v2121
    %2763 = vmatprep.mubr.f32.mxu0 %v1736
    %2764 = vmatmul.mubr.f32.gmra.mrb[0].mxu0 %v1735
    %v2765 = vpop.f32.mrb[0].mxu0
    %v2766 = vadd.f32 %v2695, %v2765
    %v2767 = vpop.f32.mrb[0].mxu0
    %v2768 = vadd.f32 %v2697, %v2767
    %2769 = vdwg.mxu0
    %2770 = vmatprep.subr.mxu0 %v2126
    %2771 = vmatpush1.msra.mxu0 %v2125
    %2772 = vmatprep.subr.mxu0 %v2130
    %2773 = vmatpush1.msra.mxu0 %v2129
    %2774 = vmatprep.subr.mxu0 %v2134
    %2775 = vmatpush1.msra.mxu0 %v2133
    %2776 = vmatprep.subr.mxu0 %v2138
    %2777 = vmatpush1.msra.mxu0 %v2137
    %2778 = vmatprep.subr.mxu0 %v2142
    %2779 = vmatpush1.msra.mxu0 %v2141
    %2780 = vmatprep.subr.mxu0 %v2146
    %2781 = vmatpush1.msra.mxu0 %v2145
    %2782 = vmatprep.subr.mxu0 %v2150
    %2783 = vmatpush1.msra.mxu0 %v2149
    %2784 = vmatprep.subr.mxu0 %v2154
    %2785 = vmatpush1.msra.mxu0 %v2153
    %2786 = vmatprep.subr.mxu0 %v2158
    %2787 = vmatpush1.msra.mxu0 %v2157
    %2788 = vmatprep.subr.mxu0 %v2162
    %2789 = vmatpush1.msra.mxu0 %v2161
    %2790 = vmatprep.subr.mxu0 %v2166
    %2791 = vmatpush1.msra.mxu0 %v2165
    %2792 = vmatprep.subr.mxu0 %v2170
    %2793 = vmatpush1.msra.mxu0 %v2169
    %2794 = vmatprep.subr.mxu0 %v2174
    %2795 = vmatpush1.msra.mxu0 %v2173
    %2796 = vmatprep.subr.mxu0 %v2178
    %2797 = vmatpush1.msra.mxu0 %v2177
    %2798 = vmatprep.subr.mxu0 %v2182
    %2799 = vmatpush1.msra.mxu0 %v2181
    %2800 = vmatprep.subr.mxu0 %v2186
    %2801 = vmatpush1.msra.mxu0 %v2185
    %2802 = vmatprep.subr.mxu0 %v2190
    %2803 = vmatpush1.msra.mxu0 %v2189
    %2804 = vmatprep.subr.mxu0 %v2194
    %2805 = vmatpush1.msra.mxu0 %v2193
    %2806 = vmatprep.subr.mxu0 %v2198
    %2807 = vmatpush1.msra.mxu0 %v2197
    %2808 = vmatprep.subr.mxu0 %v2202
    %2809 = vmatpush1.msra.mxu0 %v2201
    %2810 = vmatprep.subr.mxu0 %v2206
    %2811 = vmatpush1.msra.mxu0 %v2205
    %2812 = vmatprep.subr.mxu0 %v2210
    %2813 = vmatpush1.msra.mxu0 %v2209
    %2814 = vmatprep.subr.mxu0 %v2214
    %2815 = vmatpush1.msra.mxu0 %v2213
    %2816 = vmatprep.subr.mxu0 %v2218
    %2817 = vmatpush1.msra.mxu0 %v2217
    %2818 = vmatprep.subr.mxu0 %v2222
    %2819 = vmatpush1.msra.mxu0 %v2221
    %2820 = vmatprep.subr.mxu0 %v2226
    %2821 = vmatpush1.msra.mxu0 %v2225
    %2822 = vmatprep.subr.mxu0 %v2230
    %2823 = vmatpush1.msra.mxu0 %v2229
    %2824 = vmatprep.subr.mxu0 %v2234
    %2825 = vmatpush1.msra.mxu0 %v2233
    %2826 = vmatprep.subr.mxu0 %v2238
    %2827 = vmatpush1.msra.mxu0 %v2237
    %2828 = vmatprep.subr.mxu0 %v2242
    %2829 = vmatpush1.msra.mxu0 %v2241
    %2830 = vmatprep.subr.mxu0 %v2246
    %2831 = vmatpush1.msra.mxu0 %v2245
    %2832 = vmatprep.subr.mxu0 %v2250
    %2833 = vmatpush1.msra.mxu0 %v2249
    %2834 = vmatprep.mubr.f32.mxu0 %v1738
    %2835 = vmatmul.mubr.f32.gmra.mrb[0].mxu0 %v1737
    %v2836 = vpop.f32.mrb[0].mxu0
    %v2837 = vadd.f32 %v2766, %v2836
    %v2838 = vpop.f32.mrb[0].mxu0
    %v2839 = vadd.f32 %v2768, %v2838
    %2840 = vdwg.mxu0
    %v2841 = vmul.f32 %v2553, 0.2
    %v2842 = vmul.f32 %v2555, 0.2
    %v2843 = vmul.f32 %v2837, 0.2
    %v2844 = vmul.f32 %v2839, 0.2
    %v2845 = vmax.f32 %v2553, %v2841
    %v2846 = vmax.f32 %v2555, %v2842
    %v2847 = vmax.f32 %v2837, %v2843
    %v2848 = vmax.f32 %v2839, %v2844
    %v2849 = vld [vmem:[#allocation15] sm:$0xff]
    %v2850 = vld [vmem:[#allocation15 + $0x8] sm:$0xff]
    %v2851 = vld [vmem:[#allocation15 + $0x10] sm:$0xff]
    %v2852 = vld [vmem:[#allocation15 + $0x18] sm:$0xff]
    %v2853 = vld [vmem:[#allocation15 + $0x20] sm:$0xff]
    %v2854 = vld [vmem:[#allocation15 + $0x28] sm:$0xff]
    %v2855 = vld [vmem:[#allocation15 + $0x30] sm:$0xff]
    %v2856 = vld [vmem:[#allocation15 + $0x38] sm:$0xff]
    %v2857 = vld [vmem:[#allocation15 + $0x40] sm:$0xff]
    %v2858 = vld [vmem:[#allocation15 + $0x48] sm:$0xff]
    %v2859 = vld [vmem:[#allocation15 + $0x50] sm:$0xff]
    %v2860 = vld [vmem:[#allocation15 + $0x58] sm:$0xff]
    %v2861 = vld [vmem:[#allocation15 + $0x60] sm:$0xff]
    %v2862 = vld [vmem:[#allocation15 + $0x68] sm:$0xff]
    %v2863 = vld [vmem:[#allocation15 + $0x70] sm:$0xff]
    %v2864 = vld [vmem:[#allocation15 + $0x78] sm:$0xff]
    %v2865 = vld [vmem:[#allocation15 + $0x80] sm:$0xff]
    %v2866 = vld [vmem:[#allocation15 + $0x88] sm:$0xff]
    %v2867 = vld [vmem:[#allocation15 + $0x90] sm:$0xff]
    %v2868 = vld [vmem:[#allocation15 + $0x98] sm:$0xff]
    %v2869 = vld [vmem:[#allocation15 + $0xa0] sm:$0xff]
    %v2870 = vld [vmem:[#allocation15 + $0xa8] sm:$0xff]
    %v2871 = vld [vmem:[#allocation15 + $0xb0] sm:$0xff]
    %v2872 = vld [vmem:[#allocation15 + $0xb8] sm:$0xff]
    %v2873 = vld [vmem:[#allocation15 + $0xc0] sm:$0xff]
    %v2874 = vld [vmem:[#allocation15 + $0xc8] sm:$0xff]
    %v2875 = vld [vmem:[#allocation15 + $0xd0] sm:$0xff]
    %v2876 = vld [vmem:[#allocation15 + $0xd8] sm:$0xff]
    %v2877 = vld [vmem:[#allocation15 + $0xe0] sm:$0xff]
    %v2878 = vld [vmem:[#allocation15 + $0xe8] sm:$0xff]
    %v2879 = vld [vmem:[#allocation15 + $0xf0] sm:$0xff]
    %v2880 = vld [vmem:[#allocation15 + $0xf8] sm:$0xff]
    %v2881 = vld [vmem:[#allocation15 + $0x100] sm:$0xff]
    %v2882 = vld [vmem:[#allocation15 + $0x108] sm:$0xff]
    %v2883 = vld [vmem:[#allocation15 + $0x110] sm:$0xff]
    %v2884 = vld [vmem:[#allocation15 + $0x118] sm:$0xff]
    %v2885 = vld [vmem:[#allocation15 + $0x120] sm:$0xff]
    %v2886 = vld [vmem:[#allocation15 + $0x128] sm:$0xff]
    %v2887 = vld [vmem:[#allocation15 + $0x130] sm:$0xff]
    %v2888 = vld [vmem:[#allocation15 + $0x138] sm:$0xff]
    %v2889 = vld [vmem:[#allocation15 + $0x140] sm:$0xff]
    %v2890 = vld [vmem:[#allocation15 + $0x148] sm:$0xff]
    %v2891 = vld [vmem:[#allocation15 + $0x150] sm:$0xff]
    %v2892 = vld [vmem:[#allocation15 + $0x158] sm:$0xff]
    %v2893 = vld [vmem:[#allocation15 + $0x160] sm:$0xff]
    %v2894 = vld [vmem:[#allocation15 + $0x168] sm:$0xff]
    %v2895 = vld [vmem:[#allocation15 + $0x170] sm:$0xff]
    %v2896 = vld [vmem:[#allocation15 + $0x178] sm:$0xff]
    %v2897 = vld [vmem:[#allocation15 + $0x180] sm:$0xff]
    %v2898 = vld [vmem:[#allocation15 + $0x188] sm:$0xff]
    %v2899 = vld [vmem:[#allocation15 + $0x190] sm:$0xff]
    %v2900 = vld [vmem:[#allocation15 + $0x198] sm:$0xff]
    %v2901 = vld [vmem:[#allocation15 + $0x1a0] sm:$0xff]
    %v2902 = vld [vmem:[#allocation15 + $0x1a8] sm:$0xff]
    %v2903 = vld [vmem:[#allocation15 + $0x1b0] sm:$0xff]
    %v2904 = vld [vmem:[#allocation15 + $0x1b8] sm:$0xff]
    %v2905 = vld [vmem:[#allocation15 + $0x1c0] sm:$0xff]
    %v2906 = vld [vmem:[#allocation15 + $0x1c8] sm:$0xff]
    %v2907 = vld [vmem:[#allocation15 + $0x1d0] sm:$0xff]
    %v2908 = vld [vmem:[#allocation15 + $0x1d8] sm:$0xff]
    %v2909 = vld [vmem:[#allocation15 + $0x1e0] sm:$0xff]
    %v2910 = vld [vmem:[#allocation15 + $0x1e8] sm:$0xff]
    %v2911 = vld [vmem:[#allocation15 + $0x1f0] sm:$0xff]
    %v2912 = vld [vmem:[#allocation15 + $0x1f8] sm:$0xff]
    %v2913 = vld [vmem:[#allocation15 + $0x200] sm:$0xff]
    %v2914 = vld [vmem:[#allocation15 + $0x208] sm:$0xff]
    %v2915 = vld [vmem:[#allocation15 + $0x210] sm:$0xff]
    %v2916 = vld [vmem:[#allocation15 + $0x218] sm:$0xff]
    %v2917 = vld [vmem:[#allocation15 + $0x220] sm:$0xff]
    %v2918 = vld [vmem:[#allocation15 + $0x228] sm:$0xff]
    %v2919 = vld [vmem:[#allocation15 + $0x230] sm:$0xff]
    %v2920 = vld [vmem:[#allocation15 + $0x238] sm:$0xff]
    %v2921 = vld [vmem:[#allocation15 + $0x240] sm:$0xff]
    %v2922 = vld [vmem:[#allocation15 + $0x248] sm:$0xff]
    %v2923 = vld [vmem:[#allocation15 + $0x250] sm:$0xff]
    %v2924 = vld [vmem:[#allocation15 + $0x258] sm:$0xff]
    %v2925 = vld [vmem:[#allocation15 + $0x260] sm:$0xff]
    %v2926 = vld [vmem:[#allocation15 + $0x268] sm:$0xff]
    %v2927 = vld [vmem:[#allocation15 + $0x270] sm:$0xff]
    %v2928 = vld [vmem:[#allocation15 + $0x278] sm:$0xff]
    %v2929 = vld [vmem:[#allocation15 + $0x280] sm:$0xff]
    %v2930 = vld [vmem:[#allocation15 + $0x288] sm:$0xff]
    %v2931 = vld [vmem:[#allocation15 + $0x290] sm:$0xff]
    %v2932 = vld [vmem:[#allocation15 + $0x298] sm:$0xff]
    %v2933 = vld [vmem:[#allocation15 + $0x2a0] sm:$0xff]
    %v2934 = vld [vmem:[#allocation15 + $0x2a8] sm:$0xff]
    %v2935 = vld [vmem:[#allocation15 + $0x2b0] sm:$0xff]
    %v2936 = vld [vmem:[#allocation15 + $0x2b8] sm:$0xff]
    %v2937 = vld [vmem:[#allocation15 + $0x2c0] sm:$0xff]
    %v2938 = vld [vmem:[#allocation15 + $0x2c8] sm:$0xff]
    %v2939 = vld [vmem:[#allocation15 + $0x2d0] sm:$0xff]
    %v2940 = vld [vmem:[#allocation15 + $0x2d8] sm:$0xff]
    %v2941 = vld [vmem:[#allocation15 + $0x2e0] sm:$0xff]
    %v2942 = vld [vmem:[#allocation15 + $0x2e8] sm:$0xff]
    %v2943 = vld [vmem:[#allocation15 + $0x2f0] sm:$0xff]
    %v2944 = vld [vmem:[#allocation15 + $0x2f8] sm:$0xff]
    %v2945 = vld [vmem:[#allocation15 + $0x300] sm:$0xff]
    %v2946 = vld [vmem:[#allocation15 + $0x308] sm:$0xff]
    %v2947 = vld [vmem:[#allocation15 + $0x310] sm:$0xff]
    %v2948 = vld [vmem:[#allocation15 + $0x318] sm:$0xff]
    %v2949 = vld [vmem:[#allocation15 + $0x320] sm:$0xff]
    %v2950 = vld [vmem:[#allocation15 + $0x328] sm:$0xff]
    %v2951 = vld [vmem:[#allocation15 + $0x330] sm:$0xff]
    %v2952 = vld [vmem:[#allocation15 + $0x338] sm:$0xff]
    %v2953 = vld [vmem:[#allocation15 + $0x340] sm:$0xff]
    %v2954 = vld [vmem:[#allocation15 + $0x348] sm:$0xff]
    %v2955 = vld [vmem:[#allocation15 + $0x350] sm:$0xff]
    %v2956 = vld [vmem:[#allocation15 + $0x358] sm:$0xff]
    %v2957 = vld [vmem:[#allocation15 + $0x360] sm:$0xff]
    %v2958 = vld [vmem:[#allocation15 + $0x368] sm:$0xff]
    %v2959 = vld [vmem:[#allocation15 + $0x370] sm:$0xff]
    %v2960 = vld [vmem:[#allocation15 + $0x378] sm:$0xff]
    %v2961 = vld [vmem:[#allocation15 + $0x380] sm:$0xff]
    %v2962 = vld [vmem:[#allocation15 + $0x388] sm:$0xff]
    %v2963 = vld [vmem:[#allocation15 + $0x390] sm:$0xff]
    %v2964 = vld [vmem:[#allocation15 + $0x398] sm:$0xff]
    %v2965 = vld [vmem:[#allocation15 + $0x3a0] sm:$0xff]
    %v2966 = vld [vmem:[#allocation15 + $0x3a8] sm:$0xff]
    %v2967 = vld [vmem:[#allocation15 + $0x3b0] sm:$0xff]
    %v2968 = vld [vmem:[#allocation15 + $0x3b8] sm:$0xff]
    %v2969 = vld [vmem:[#allocation15 + $0x3c0] sm:$0xff]
    %v2970 = vld [vmem:[#allocation15 + $0x3c8] sm:$0xff]
    %v2971 = vld [vmem:[#allocation15 + $0x3d0] sm:$0xff]
    %v2972 = vld [vmem:[#allocation15 + $0x3d8] sm:$0xff]
    %v2973 = vld [vmem:[#allocation15 + $0x3e0] sm:$0xff]
    %v2974 = vld [vmem:[#allocation15 + $0x3e8] sm:$0xff]
    %v2975 = vld [vmem:[#allocation15 + $0x3f0] sm:$0xff]
    %v2976 = vld [vmem:[#allocation15 + $0x3f8] sm:$0xff]
    %v2977 = vld [vmem:[#allocation16] sm:$0x3]
    %v2979 = vlaneseq
    %v2980 = vshrl.u32 %v2979, 7
    %v2981 = vsub.s32 0, %v2980
    %v2982 = vrot.slane %v2977, %v2981
    %v2983 = vlaneseq
    %v2984 = vshrl.u32 %v2983, 7
    %v2985 = vsub.s32 1, %v2984
    %v2986 = vrot.slane %v2977, %v2985
    %2989 = vmatprep.subr.mxu0 %v2850
    %2990 = vmatpush1.msra.mxu0 %v2849
    %2991 = vmatprep.subr.mxu0 %v2852
    %2992 = vmatpush1.msra.mxu0 %v2851
    %2993 = vmatprep.subr.mxu0 %v2854
    %2994 = vmatpush1.msra.mxu0 %v2853
    %2995 = vmatprep.subr.mxu0 %v2856
    %2996 = vmatpush1.msra.mxu0 %v2855
    %2997 = vmatprep.subr.mxu0 %v2858
    %2998 = vmatpush1.msra.mxu0 %v2857
    %2999 = vmatprep.subr.mxu0 %v2860
    %3000 = vmatpush1.msra.mxu0 %v2859
    %3001 = vmatprep.subr.mxu0 %v2862
    %3002 = vmatpush1.msra.mxu0 %v2861
    %3003 = vmatprep.subr.mxu0 %v2864
    %3004 = vmatpush1.msra.mxu0 %v2863
    %3005 = vmatprep.subr.mxu0 %v2866
    %3006 = vmatpush1.msra.mxu0 %v2865
    %3007 = vmatprep.subr.mxu0 %v2868
    %3008 = vmatpush1.msra.mxu0 %v2867
    %3009 = vmatprep.subr.mxu0 %v2870
    %3010 = vmatpush1.msra.mxu0 %v2869
    %3011 = vmatprep.subr.mxu0 %v2872
    %3012 = vmatpush1.msra.mxu0 %v2871
    %3013 = vmatprep.subr.mxu0 %v2874
    %3014 = vmatpush1.msra.mxu0 %v2873
    %3015 = vmatprep.subr.mxu0 %v2876
    %3016 = vmatpush1.msra.mxu0 %v2875
    %3017 = vmatprep.subr.mxu0 %v2878
    %3018 = vmatpush1.msra.mxu0 %v2877
    %3019 = vmatprep.subr.mxu0 %v2880
    %3020 = vmatpush1.msra.mxu0 %v2879
    %3021 = vmatprep.subr.mxu0 %v2882
    %3022 = vmatpush1.msra.mxu0 %v2881
    %3023 = vmatprep.subr.mxu0 %v2884
    %3024 = vmatpush1.msra.mxu0 %v2883
    %3025 = vmatprep.subr.mxu0 %v2886
    %3026 = vmatpush1.msra.mxu0 %v2885
    %3027 = vmatprep.subr.mxu0 %v2888
    %3028 = vmatpush1.msra.mxu0 %v2887
    %3029 = vmatprep.subr.mxu0 %v2890
    %3030 = vmatpush1.msra.mxu0 %v2889
    %3031 = vmatprep.subr.mxu0 %v2892
    %3032 = vmatpush1.msra.mxu0 %v2891
    %3033 = vmatprep.subr.mxu0 %v2894
    %3034 = vmatpush1.msra.mxu0 %v2893
    %3035 = vmatprep.subr.mxu0 %v2896
    %3036 = vmatpush1.msra.mxu0 %v2895
    %3037 = vmatprep.subr.mxu0 %v2898
    %3038 = vmatpush1.msra.mxu0 %v2897
    %3039 = vmatprep.subr.mxu0 %v2900
    %3040 = vmatpush1.msra.mxu0 %v2899
    %3041 = vmatprep.subr.mxu0 %v2902
    %3042 = vmatpush1.msra.mxu0 %v2901
    %3043 = vmatprep.subr.mxu0 %v2904
    %3044 = vmatpush1.msra.mxu0 %v2903
    %3045 = vmatprep.subr.mxu0 %v2906
    %3046 = vmatpush1.msra.mxu0 %v2905
    %3047 = vmatprep.subr.mxu0 %v2908
    %3048 = vmatpush1.msra.mxu0 %v2907
    %3049 = vmatprep.subr.mxu0 %v2910
    %3050 = vmatpush1.msra.mxu0 %v2909
    %3051 = vmatprep.subr.mxu0 %v2912
    %3052 = vmatpush1.msra.mxu0 %v2911
    %3053 = vmatprep.mubr.f32.mxu0 %v2846
    %3054 = vmatmul.mubr.f32.gmra.mrb[0].mxu0 %v2845
    %v3055 = vpop.f32.mrb[0].mxu0
    %v3056 = vadd.f32 %v2982, %v3055
    %v3057 = vpop.f32.mrb[0].mxu0
    %v3058 = vadd.f32 %v2986, %v3057
    %3059 = vdwg.mxu0
    %3060 = vmatprep.subr.mxu0 %v2914
    %3061 = vmatpush1.msra.mxu0 %v2913
    %3062 = vmatprep.subr.mxu0 %v2916
    %3063 = vmatpush1.msra.mxu0 %v2915
    %3064 = vmatprep.subr.mxu0 %v2918
    %3065 = vmatpush1.msra.mxu0 %v2917
    %3066 = vmatprep.subr.mxu0 %v2920
    %3067 = vmatpush1.msra.mxu0 %v2919
    %3068 = vmatprep.subr.mxu0 %v2922
    %3069 = vmatpush1.msra.mxu0 %v2921
    %3070 = vmatprep.subr.mxu0 %v2924
    %3071 = vmatpush1.msra.mxu0 %v2923
    %3072 = vmatprep.subr.mxu0 %v2926
    %3073 = vmatpush1.msra.mxu0 %v2925
    %3074 = vmatprep.subr.mxu0 %v2928
    %3075 = vmatpush1.msra.mxu0 %v2927
    %3076 = vmatprep.subr.mxu0 %v2930
    %3077 = vmatpush1.msra.mxu0 %v2929
    %3078 = vmatprep.subr.mxu0 %v2932
    %3079 = vmatpush1.msra.mxu0 %v2931
    %3080 = vmatprep.subr.mxu0 %v2934
    %3081 = vmatpush1.msra.mxu0 %v2933
    %3082 = vmatprep.subr.mxu0 %v2936
    %3083 = vmatpush1.msra.mxu0 %v2935
    %3084 = vmatprep.subr.mxu0 %v2938
    %3085 = vmatpush1.msra.mxu0 %v2937
    %3086 = vmatprep.subr.mxu0 %v2940
    %3087 = vmatpush1.msra.mxu0 %v2939
    %3088 = vmatprep.subr.mxu0 %v2942
    %3089 = vmatpush1.msra.mxu0 %v2941
    %3090 = vmatprep.subr.mxu0 %v2944
    %3091 = vmatpush1.msra.mxu0 %v2943
    %3092 = vmatprep.subr.mxu0 %v2946
    %3093 = vmatpush1.msra.mxu0 %v2945
    %3094 = vmatprep.subr.mxu0 %v2948
    %3095 = vmatpush1.msra.mxu0 %v2947
    %3096 = vmatprep.subr.mxu0 %v2950
    %3097 = vmatpush1.msra.mxu0 %v2949
    %3098 = vmatprep.subr.mxu0 %v2952
    %3099 = vmatpush1.msra.mxu0 %v2951
    %3100 = vmatprep.subr.mxu0 %v2954
    %3101 = vmatpush1.msra.mxu0 %v2953
    %3102 = vmatprep.subr.mxu0 %v2956
    %3103 = vmatpush1.msra.mxu0 %v2955
    %3104 = vmatprep.subr.mxu0 %v2958
    %3105 = vmatpush1.msra.mxu0 %v2957
    %3106 = vmatprep.subr.mxu0 %v2960
    %3107 = vmatpush1.msra.mxu0 %v2959
    %3108 = vmatprep.subr.mxu0 %v2962
    %3109 = vmatpush1.msra.mxu0 %v2961
    %3110 = vmatprep.subr.mxu0 %v2964
    %3111 = vmatpush1.msra.mxu0 %v2963
    %3112 = vmatprep.subr.mxu0 %v2966
    %3113 = vmatpush1.msra.mxu0 %v2965
    %3114 = vmatprep.subr.mxu0 %v2968
    %3115 = vmatpush1.msra.mxu0 %v2967
    %3116 = vmatprep.subr.mxu0 %v2970
    %3117 = vmatpush1.msra.mxu0 %v2969
    %3118 = vmatprep.subr.mxu0 %v2972
    %3119 = vmatpush1.msra.mxu0 %v2971
    %3120 = vmatprep.subr.mxu0 %v2974
    %3121 = vmatpush1.msra.mxu0 %v2973
    %3122 = vmatprep.subr.mxu0 %v2976
    %3123 = vmatpush1.msra.mxu0 %v2975
    %3124 = vmatprep.mubr.f32.mxu0 %v2848
    %3125 = vmatmul.mubr.f32.gmra.mrb[0].mxu0 %v2847
    %v3126 = vpop.f32.mrb[0].mxu0
    %v3127 = vadd.f32 %v3056, %v3126
    %v3128 = vpop.f32.mrb[0].mxu0
    %v3129 = vadd.f32 %v3058, %v3128
    %3130 = vdwg.mxu0
    %v3131 = vmul.f32 %v3127, 0.2
    %v3132 = vmul.f32 %v3129, 0.2
    %v3133 = vmax.f32 %v3127, %v3131
    %v3134 = vmax.f32 %v3129, %v3132
    %v3135 = vld [vmem:[#allocation18] sm:$0xff]
    %v3136 = vld [vmem:[#allocation18 + $0x8] sm:$0xff]
    %v3137 = vld [vmem:[#allocation18 + $0x10] sm:$0xff]
    %v3138 = vld [vmem:[#allocation18 + $0x18] sm:$0xff]
    %v3139 = vld [vmem:[#allocation18 + $0x20] sm:$0xff]
    %v3140 = vld [vmem:[#allocation18 + $0x28] sm:$0xff]
    %v3141 = vld [vmem:[#allocation18 + $0x30] sm:$0xff]
    %v3142 = vld [vmem:[#allocation18 + $0x38] sm:$0xff]
    %v3143 = vld [vmem:[#allocation18 + $0x40] sm:$0xff]
    %v3144 = vld [vmem:[#allocation18 + $0x48] sm:$0xff]
    %v3145 = vld [vmem:[#allocation18 + $0x50] sm:$0xff]
    %v3146 = vld [vmem:[#allocation18 + $0x58] sm:$0xff]
    %v3147 = vld [vmem:[#allocation18 + $0x60] sm:$0xff]
    %v3148 = vld [vmem:[#allocation18 + $0x68] sm:$0xff]
    %v3149 = vld [vmem:[#allocation18 + $0x70] sm:$0xff]
    %v3150 = vld [vmem:[#allocation18 + $0x78] sm:$0xff]
    %v3151 = vld [vmem:[#allocation18 + $0x80] sm:$0xff]
    %v3152 = vld [vmem:[#allocation18 + $0x88] sm:$0xff]
    %v3153 = vld [vmem:[#allocation18 + $0x90] sm:$0xff]
    %v3154 = vld [vmem:[#allocation18 + $0x98] sm:$0xff]
    %v3155 = vld [vmem:[#allocation18 + $0xa0] sm:$0xff]
    %v3156 = vld [vmem:[#allocation18 + $0xa8] sm:$0xff]
    %v3157 = vld [vmem:[#allocation18 + $0xb0] sm:$0xff]
    %v3158 = vld [vmem:[#allocation18 + $0xb8] sm:$0xff]
    %v3159 = vld [vmem:[#allocation18 + $0xc0] sm:$0xff]
    %v3160 = vld [vmem:[#allocation18 + $0xc8] sm:$0xff]
    %v3161 = vld [vmem:[#allocation18 + $0xd0] sm:$0xff]
    %v3162 = vld [vmem:[#allocation18 + $0xd8] sm:$0xff]
    %v3163 = vld [vmem:[#allocation18 + $0xe0] sm:$0xff]
    %v3164 = vld [vmem:[#allocation18 + $0xe8] sm:$0xff]
    %v3165 = vld [vmem:[#allocation18 + $0xf0] sm:$0xff]
    %v3166 = vld [vmem:[#allocation18 + $0xf8] sm:$0xff]
    %v3167 = vld [vmem:[#allocation19] sm:$0x1]
    %v3169 = vlaneseq
    %v3170 = vshrl.u32 %v3169, 7
    %v3171 = vsub.s32 0, %v3170
    %v3172 = vrot.slane %v3167, %v3171
    %3174 = vmatprep.subr.mxu0 0.0
    %3175 = vmatpush1.msra.mxu0 %v3135
    %3176 = vmatprep.subr.mxu0 0.0
    %3177 = vmatpush1.msra.mxu0 %v3136
    %3178 = vmatprep.subr.mxu0 0.0
    %3179 = vmatpush1.msra.mxu0 %v3137
    %3180 = vmatprep.subr.mxu0 0.0
    %3181 = vmatpush1.msra.mxu0 %v3138
    %3182 = vmatprep.subr.mxu0 0.0
    %3183 = vmatpush1.msra.mxu0 %v3139
    %3184 = vmatprep.subr.mxu0 0.0
    %3185 = vmatpush1.msra.mxu0 %v3140
    %3186 = vmatprep.subr.mxu0 0.0
    %3187 = vmatpush1.msra.mxu0 %v3141
    %3188 = vmatprep.subr.mxu0 0.0
    %3189 = vmatpush1.msra.mxu0 %v3142
    %3190 = vmatprep.subr.mxu0 0.0
    %3191 = vmatpush1.msra.mxu0 %v3143
    %3192 = vmatprep.subr.mxu0 0.0
    %3193 = vmatpush1.msra.mxu0 %v3144
    %3194 = vmatprep.subr.mxu0 0.0
    %3195 = vmatpush1.msra.mxu0 %v3145
    %3196 = vmatprep.subr.mxu0 0.0
    %3197 = vmatpush1.msra.mxu0 %v3146
    %3198 = vmatprep.subr.mxu0 0.0
    %3199 = vmatpush1.msra.mxu0 %v3147
    %3200 = vmatprep.subr.mxu0 0.0
    %3201 = vmatpush1.msra.mxu0 %v3148
    %3202 = vmatprep.subr.mxu0 0.0
    %3203 = vmatpush1.msra.mxu0 %v3149
    %3204 = vmatprep.subr.mxu0 0.0
    %3205 = vmatpush1.msra.mxu0 %v3150
    %3206 = vmatprep.subr.mxu0 0.0
    %3207 = vmatpush1.msra.mxu0 %v3151
    %3208 = vmatprep.subr.mxu0 0.0
    %3209 = vmatpush1.msra.mxu0 %v3152
    %3210 = vmatprep.subr.mxu0 0.0
    %3211 = vmatpush1.msra.mxu0 %v3153
    %3212 = vmatprep.subr.mxu0 0.0
    %3213 = vmatpush1.msra.mxu0 %v3154
    %3214 = vmatprep.subr.mxu0 0.0
    %3215 = vmatpush1.msra.mxu0 %v3155
    %3216 = vmatprep.subr.mxu0 0.0
    %3217 = vmatpush1.msra.mxu0 %v3156
    %3218 = vmatprep.subr.mxu0 0.0
    %3219 = vmatpush1.msra.mxu0 %v3157
    %3220 = vmatprep.subr.mxu0 0.0
    %3221 = vmatpush1.msra.mxu0 %v3158
    %3222 = vmatprep.subr.mxu0 0.0
    %3223 = vmatpush1.msra.mxu0 %v3159
    %3224 = vmatprep.subr.mxu0 0.0
    %3225 = vmatpush1.msra.mxu0 %v3160
    %3226 = vmatprep.subr.mxu0 0.0
    %3227 = vmatpush1.msra.mxu0 %v3161
    %3228 = vmatprep.subr.mxu0 0.0
    %3229 = vmatpush1.msra.mxu0 %v3162
    %3230 = vmatprep.subr.mxu0 0.0
    %3231 = vmatpush1.msra.mxu0 %v3163
    %3232 = vmatprep.subr.mxu0 0.0
    %3233 = vmatpush1.msra.mxu0 %v3164
    %3234 = vmatprep.subr.mxu0 0.0
    %3235 = vmatpush1.msra.mxu0 %v3165
    %3236 = vmatprep.subr.mxu0 0.0
    %3237 = vmatpush1.msra.mxu0 %v3166
    %3238 = vmatprep.mubr.f32.mxu0 %v3134
    %3239 = vmatmul.mubr.f32.gmra.mrb[0].mxu0 %v3133
    %v3240 = vpop.f32.mrb[0].mxu0
    %v3241 = vadd.f32 %v3172, %v3240
    %v3242 = vpop.f32.mrb[0].mxu0
    %3243 = vdwg.mxu0
    %v3244 = vmul.f32 %v3241, 0.2
    %v3245 = vmax.f32 %v3241, %v3244
    %v3246 = vld [vmem:[%s13] sm:$0xff]
    %v3247 = vld [vmem:[%s13 + $0x8] sm:$0xff]
    %v3248 = vld [vmem:[%s13 + $0x10] sm:$0xff]
    %v3249 = vld [vmem:[%s13 + $0x18] sm:$0xff]
    %v3250 = vld [vmem:[%s13 + $0x20] sm:$0xff]
    %v3251 = vld [vmem:[%s13 + $0x28] sm:$0xff]
    %v3252 = vld [vmem:[%s13 + $0x30] sm:$0xff]
    %v3253 = vld [vmem:[%s13 + $0x38] sm:$0xff]
    %v3254 = vld [vmem:[%s13 + $0x40] sm:$0xff]
    %v3255 = vld [vmem:[%s13 + $0x48] sm:$0xff]
    %v3256 = vld [vmem:[%s13 + $0x50] sm:$0xff]
    %v3257 = vld [vmem:[%s13 + $0x58] sm:$0xff]
    %v3258 = vld [vmem:[%s13 + $0x60] sm:$0xff]
    %v3259 = vld [vmem:[%s13 + $0x68] sm:$0xff]
    %v3260 = vld [vmem:[%s13 + $0x70] sm:$0xff]
    %v3261 = vld [vmem:[%s13 + $0x78] sm:$0xff]
    %v3262 = vld [vmem:[%s14] sm:$0x1]
    %v3264 = vlaneseq
    %v3265 = vshrl.u32 %v3264, 7
    %v3266 = vsub.s32 0, %v3265
    %v3267 = vrot.slane %v3262, %v3266
    %3269 = vmatprep.subr.mxu0 0.0
    %3270 = vmatpush1.msra.mxu0 %v3246
    %3271 = vmatprep.subr.mxu0 0.0
    %3272 = vmatpush1.msra.mxu0 %v3247
    %3273 = vmatprep.subr.mxu0 0.0
    %3274 = vmatpush1.msra.mxu0 %v3248
    %3275 = vmatprep.subr.mxu0 0.0
    %3276 = vmatpush1.msra.mxu0 %v3249
    %3277 = vmatprep.subr.mxu0 0.0
    %3278 = vmatpush1.msra.mxu0 %v3250
    %3279 = vmatprep.subr.mxu0 0.0
    %3280 = vmatpush1.msra.mxu0 %v3251
    %3281 = vmatprep.subr.mxu0 0.0
    %3282 = vmatpush1.msra.mxu0 %v3252
    %3283 = vmatprep.subr.mxu0 0.0
    %3284 = vmatpush1.msra.mxu0 %v3253
    %3285 = vmatprep.subr.mxu0 0.0
    %3286 = vmatpush1.msra.mxu0 %v3254
    %3287 = vmatprep.subr.mxu0 0.0
    %3288 = vmatpush1.msra.mxu0 %v3255
    %3289 = vmatprep.subr.mxu0 0.0
    %3290 = vmatpush1.msra.mxu0 %v3256
    %3291 = vmatprep.subr.mxu0 0.0
    %3292 = vmatpush1.msra.mxu0 %v3257
    %3293 = vmatprep.subr.mxu0 0.0
    %3294 = vmatpush1.msra.mxu0 %v3258
    %3295 = vmatprep.subr.mxu0 0.0
    %3296 = vmatpush1.msra.mxu0 %v3259
    %3297 = vmatprep.subr.mxu0 0.0
    %3298 = vmatpush1.msra.mxu0 %v3260
    %3299 = vmatprep.subr.mxu0 0.0
    %3300 = vmatpush1.msra.mxu0 %v3261
    %3301 = vmatprep.subr.mxu0 0.0
    %3302 = vmatpush1.msra.mxu0 0.0
    %3303 = vmatprep.subr.mxu0 0.0
    %3304 = vmatpush1.msra.mxu0 0.0
    %3305 = vmatprep.subr.mxu0 0.0
    %3306 = vmatpush1.msra.mxu0 0.0
    %3307 = vmatprep.subr.mxu0 0.0
    %3308 = vmatpush1.msra.mxu0 0.0
    %3309 = vmatprep.subr.mxu0 0.0
    %3310 = vmatpush1.msra.mxu0 0.0
    %3311 = vmatprep.subr.mxu0 0.0
    %3312 = vmatpush1.msra.mxu0 0.0
    %3313 = vmatprep.subr.mxu0 0.0
    %3314 = vmatpush1.msra.mxu0 0.0
    %3315 = vmatprep.subr.mxu0 0.0
    %3316 = vmatpush1.msra.mxu0 0.0
    %3317 = vmatprep.subr.mxu0 0.0
    %3318 = vmatpush1.msra.mxu0 0.0
    %3319 = vmatprep.subr.mxu0 0.0
    %3320 = vmatpush1.msra.mxu0 0.0
    %3321 = vmatprep.subr.mxu0 0.0
    %3322 = vmatpush1.msra.mxu0 0.0
    %3323 = vmatprep.subr.mxu0 0.0
    %3324 = vmatpush1.msra.mxu0 0.0
    %3325 = vmatprep.subr.mxu0 0.0
    %3326 = vmatpush1.msra.mxu0 0.0
    %3327 = vmatprep.subr.mxu0 0.0
    %3328 = vmatpush1.msra.mxu0 0.0
    %3329 = vmatprep.subr.mxu0 0.0
    %3330 = vmatpush1.msra.mxu0 0.0
    %3331 = vmatprep.subr.mxu0 0.0
    %3332 = vmatpush1.msra.mxu0 0.0
    %3333 = vmatprep.mubr.f32.mxu0 0.0
    %3334 = vmatmul.mubr.f32.gmra.mrb[0].mxu0 %v3245
    %v3335 = vpop.f32.mrb[0].mxu0
    %v3336 = vadd.f32 %v3267, %v3335
    %v3337 = vpop.f32.mrb[0].mxu0
    %3338 = vdwg.mxu0
    %vm3339 = vcmask 7168
    %3340 = vst.msk [vmem:[%s15] sm:$0xff] %vm3339, %v3336
    // Predicated region
    $region110: #{critic_forward.1} parent=1 // pred_check
      _
    $region111: #{critic_forward.1} parent=1 // pred_check_branch
      %3342 = sbr.rel (0) target = $region113
    $region112: #{critic_forward.1} parent=1 // pred_region
      _
    $region113: #{critic_forward.1} parent=1 // pred_fallthru
      _
    // Predicated region
    $region114: #{critic_forward.1} parent=1 // pred_check
      _
    $region115: #{critic_forward.1} parent=1 // pred_check_branch
      %3344 = sbr.rel (0) target = $region117
    $region116: #{critic_forward.1} parent=1 // pred_region
      _
    $region117: #{critic_forward.1} parent=1 // pred_fallthru
      _
    %3345 = vsyncpa [#allocation3], 1
    %3346 = vsyncpa [#allocation5], 1
    %3347 = vsyncpa [#allocation8], 1
    %3348 = vsyncpa [#allocation11], 1
    %3349 = vsyncpa [#allocation14], 1
    %3350 = vsyncpa [#allocation17], 1
    %3351 = vsyncpa [#allocation20], 1

</llo_original>
